<compile_context>
chip_gen: v7x
topology: tpu7x:2x2x1
jax: 0.10.0
libtpu: 0.0.40
codegen_flags: <defaults>
</compile_context>

<pallas_src>
import jax
import jax.numpy as jnp
from jax.experimental import pallas as pl
from jax.experimental.pallas import tpu as pltpu

HIDDEN = 32        # cmd_args.hidden_dim
EMB = 32           # raw encoder symbol-embedding width (embedding_layer input dim)
N_CLAUSES = 8      # len(get_all_clauses(encoder.config))   -- synthetic
MAX_STEPS = 3      # 'behind'/'right' clauses use 3 GRU steps, others 2 (front-padded)
BATCH_BLOCK = 128  # decoder calls per grid step  (lanes per tile = N_CLAUSES * BATCH_BLOCK)


def global_decoder_kernel(gi_ref, w_ref, vec_ref, state_ref, out_ref):
    H, N, BLK = HIDDEN, N_CLAUSES, BATCH_BLOCK

    # ---- resident transposed weights (bf16 -> native MXU pass, f32 accumulate) ----
    wh_t = w_ref[0:3 * H, :]              # [3H, H]  rows = gate outputs (r,z,n), cols = in
    w1_t = w_ref[3 * H:4 * H, :]          # [H, H]   prob_layer Linear 1 (transposed)
    w2_t = w_ref[4 * H:5 * H, :]          # [H, H]   prob_layer Linear 2 (transposed)
    w3_t = w_ref[5 * H:5 * H + 8, :]      # row 0 = w3^T, rest zero

    bhn = vec_ref[:, 0:1]                 # [H, 1] GRUCell b_hn (lives inside the r* product)
    b1 = vec_ref[:, 1:2]                  # [H, 1]
    b2 = vec_ref[:, 2:3]                  # [H, 1]
    b3 = vec_ref[0:1, 3:4]                # [1, 1]
    eps = vec_ref[0:1, 4:5]               # [1, 1]

    # Every clause rollout of a call starts from that call's global graph embedding.
    # Lane layout: m = clause*BLK + call  ->  tile the [H, BLK] state block N times.
    s = state_ref[...]                                        # [H, BLK] f32
    h = jnp.concatenate([s] * N, axis=1)                      # [H, N*BLK] f32

    # ---- GRU rollout, statically unrolled over the (<= MAX_STEPS) clause symbols ----
    for step in range(MAX_STEPS):
        gi = gi_ref[step]                                     # [3H, N*BLK] folded consts
        gh = jnp.dot(wh_t, h.astype(jnp.bfloat16),
                     preferred_element_type=jnp.float32)      # [3H, N*BLK]
        r = jax.nn.sigmoid(gi[0:H, :] + gh[0:H, :])
        z = jax.nn.sigmoid(gi[H:2 * H, :] + gh[H:2 * H, :])
        n = jnp.tanh(gi[2 * H:3 * H, :] + r * (gh[2 * H:3 * H, :] + bhn))
        # Front-padded steps carry gi_z = +1e30  ->  z == 1  ->  h_new == h exactly,
        # so 2-token clauses behave as if only 2 GRU steps were run (mask folded away).
        h = (1.0 - z) * n + z * h

    # ---- prob_layer: Linear -> ReLU -> Linear -> ReLU -> Linear(H, 1) ----
    y = jnp.maximum(jnp.dot(w1_t, h.astype(jnp.bfloat16),
                            preferred_element_type=jnp.float32) + b1, 0.0)
    y = jnp.maximum(jnp.dot(w2_t, y.astype(jnp.bfloat16),
                            preferred_element_type=jnp.float32) + b2, 0.0)
    logit = jnp.dot(w3_t, y.astype(jnp.bfloat16),
                    preferred_element_type=jnp.float32)[0:1, :] + b3     # [1, N*BLK]

    # ---- per-call softmax over the N clauses + greedy argmax ('max' eval path) ----
    # Clause c of every call lives in lane chunk [c*BLK, (c+1)*BLK): pure lane-dense
    # VPU/EUP work, no cross-lane shuffles.
    chunks = [logit[:, c * BLK:(c + 1) * BLK] for c in range(N)]         # N x [1, BLK]
    best = chunks[0]
    sel = jnp.zeros_like(best)
    for c in range(1, N):
        gt = chunks[c] > best                 # strict '>' -> ties resolve to lowest index
        sel = jnp.where(gt, float(c), sel)
        best = jnp.where(gt, chunks[c], best)
    denom = jnp.zeros_like(best)
    for c in range(N):
        denom = denom + jnp.exp(chunks[c] - best)
    p_sel = 1.0 / denom                                   # softmax prob of the argmax clause
    p_sel = p_sel * (1.0 - eps) + eps * (1.0 / N)         # eps exploration mix

    out_ref[...] = jnp.concatenate([p_sel, sel], axis=0)[None]   # [1, 2, BLK] lane-dense


def pack_decoder(params, tokens, mask, eps, blk=BATCH_BLOCK):
    """One-time host-side fold / transpose / pack of everything that does NOT depend
    on the per-call graph embedding (encoder symbol embeddings are call-independent)."""
    (wemb, bemb, wih, bih, whh, bhh, w1, b1, w2, b2, w3, b3) = params
    H = wih.shape[0]
    S, N, E = tokens.shape

    # embedding_layer + GRU input projection + the *additive* hidden biases (r, z gates)
    emb = tokens.reshape(S * N, E) @ wemb + bemb                     # [S*N, H]
    gi = emb @ wih + bih                                             # [S*N, 3H]
    gi = gi + jnp.concatenate([bhh[:, 0:2 * H], jnp.zeros((1, H), jnp.float32)], axis=1)
    gi = gi.reshape(S, N, 3 * H)

    # Fold the step mask: front-padded slots force the update gate z to 1 exactly,
    # which leaves h untouched for that step (identical to skipping the step).
    z_cols = (jnp.arange(3 * H) >= H) & (jnp.arange(3 * H) < 2 * H)
    padded = (mask.reshape(S, N, 1) <= 0.0)
    gi = jnp.where(padded & z_cols[None, None, :], 1e30, gi)

    # Transposed + lane-expanded constant block (f32: resident-once DMA, exact adds):
    #   gi_k[s, g*H + o, c*blk + b] = gi[s, c, g*H + o]
    gi_k = jnp.repeat(jnp.transpose(gi, (0, 2, 1)), blk, axis=2).astype(jnp.float32)

    w3_blk = jnp.zeros((8, H), jnp.float32).at[0, :].set(w3[:, 0])
    w_slab = jnp.concatenate([whh.T, w1.T, w2.T, w3_blk], axis=0).astype(jnp.bfloat16)

    vec = jnp.zeros((H, 8), jnp.float32)
    vec = vec.at[:, 0].set(bhh[0, 2 * H:3 * H])      # b_hn (gated by r inside the GRU)
    vec = vec.at[:, 1].set(b1[0, :])
    vec = vec.at[:, 2].set(b2[0, :])
    vec = vec.at[0, 3].set(b3[0, 0])
    vec = vec.at[0, 4].set(0.0 if eps is None else float(eps))
    return gi_k, w_slab, vec


def run_global_decoder(states, gi_k, w_slab, vec):
    """Batched decoder: `states` is [B, H] (one global graph embedding per call).
    Returns (selected-action prob [B] f32, selected clause index [B] int32)."""
    B, H = states.shape
    pad = (-B) % BATCH_BLOCK
    if pad:
        states = jnp.concatenate([states, jnp.zeros((pad, H), states.dtype)], axis=0)
    nblk = (B + pad) // BATCH_BLOCK
    state_t = states.T.astype(jnp.float32)                 # [H, Bp]  (calls on lanes)

    out = pl.pallas_call(
        global_decoder_kernel,
        out_shape=jax.ShapeDtypeStruct((nblk, 2, BATCH_BLOCK), jnp.float32),
        grid_spec=pltpu.PrefetchScalarGridSpec(
            num_scalar_prefetch=0,
            grid=(nblk,),
            in_specs=[
                pl.BlockSpec(gi_k.shape, lambda i: (0, 0, 0)),      # resident folded consts
                pl.BlockSpec(w_slab.shape, lambda i: (0, 0)),       # resident weights (bf16)
                pl.BlockSpec(vec.shape, lambda i: (0, 0)),          # resident biases/eps
                pl.BlockSpec((H, BATCH_BLOCK), lambda i: (0, i)),   # per-call graph embeddings
            ],
            out_specs=pl.BlockSpec((1, 2, BATCH_BLOCK), lambda i: (i, 0, 0)),
        ),
        compiler_params=pltpu.CompilerParams(
            dimension_semantics=("parallel",)),                     # v7x: shard across 2 TCs
    )(gi_k, w_slab, vec, state_t)

    probs = out[:, 0, :].reshape(-1)[:B]
    sels = out[:, 1, :].reshape(-1)[:B].astype(jnp.int32)
    # TODO(synk): training-time Categorical.sample() branch is done host-side on the
    # full prob vector if needed; only the greedy 'max' eval path is in-kernel.
    return probs, sels


def reference_probs(params, tokens, mask, states, eps):
    """Pure-JAX f32 reference of GlobalDecoder.forward (GNNGlobal branch, softmax over
    the N clauses).  Returns eps-mixed probs [B, N]."""
    (wemb, bemb, wih, bih, whh, bhh, w1, b1, w2, b2, w3, b3) = params
    H = wih.shape[0]
    S, N, E = tokens.shape
    B = states.shape[0]
    emb = (tokens.reshape(S * N, E) @ wemb + bemb).reshape(S, N, H)

    def gru(x, h):
        gi = x @ wih + bih
        gh = h @ whh + bhh
        r = jax.nn.sigmoid(gi[:, 0:H] + gh[:, 0:H])
        z = jax.nn.sigmoid(gi[:, H:2 * H] + gh[:, H:2 * H])
        n = jnp.tanh(gi[:, 2 * H:] + r * gh[:, 2 * H:])
        return (1.0 - z) * n + z * h

    h = jnp.broadcast_to(states[:, None, :], (B, N, H)).reshape(B * N, H)
    for s in range(S):
        x = jnp.broadcast_to(emb[s][None], (B, N, H)).reshape(B * N, H)
        h_new = gru(x, h)
        m = jnp.broadcast_to(mask[s][None, :, None], (B, N, 1)).reshape(B * N, 1)
        h = jnp.where(m > 0.0, h_new, h)
    y = jnp.maximum(h @ w1 + b1, 0.0)
    y = jnp.maximum(y @ w2 + b2, 0.0)
    logit = (y @ w3 + b3).reshape(B, N)
    probs = jax.nn.softmax(logit, axis=-1)
    e = 0.0 if eps is None else eps
    return probs * (1.0 - e) + e / N


def init_params(key, hidden=HIDDEN, emb=EMB):
    scale = 1.0 / jnp.sqrt(hidden)
    ks = jax.random.split(key, 12)
    u = lambda k, shp: jax.random.uniform(k, shp, jnp.float32, -scale, scale)
    return [
        u(ks[0], (emb, hidden)),         # embedding_layer weight (stored as [in, out])
        u(ks[1], (1, hidden)),           # embedding_layer bias
        u(ks[2], (hidden, 3 * hidden)),  # GRUCell weight_ih^T   (gate order r, z, n)
        u(ks[3], (1, 3 * hidden)),       # GRUCell bias_ih
        u(ks[4], (hidden, 3 * hidden)),  # GRUCell weight_hh^T
        u(ks[5], (1, 3 * hidden)),       # GRUCell bias_hh
        u(ks[6], (hidden, hidden)),      # prob_layer Linear 1
        u(ks[7], (1, hidden)),
        u(ks[8], (hidden, hidden)),      # prob_layer Linear 2
        u(ks[9], (1, hidden)),
        u(ks[10], (hidden, 1)),          # prob_layer Linear 3 (H -> 1)
        u(ks[11], (1, 1)),
    ]


if __name__ == "__main__":
    key = jax.random.PRNGKey(0)
    k_state, k_tok, k_par = jax.random.split(key, 3)

    B = 256                                                  # decoder calls batched per launch
    states = jax.random.normal(k_state, (B, HIDDEN), jnp.float32)   # GNNGlobal graph embeddings

    # Synthetic clause symbol embeddings: even clauses are ('behind'|'right', v1, v2)
    # with 3 tokens; odd clauses are (attr, var) with 2 tokens, FRONT-padded (step 0
    # masked) so they run exactly 2 GRU steps from the initial state, as in the reference.
    tokens = jax.random.normal(k_tok, (MAX_STEPS, N_CLAUSES, EMB), jnp.float32)
    mask = jnp.ones((MAX_STEPS, N_CLAUSES), jnp.float32)
    two_token = (jnp.arange(N_CLAUSES) % 2 == 1)
    mask = mask.at[0, :].set(jnp.where(two_token, 0.0, 1.0))
    tokens = tokens * mask[:, :, None]

    params = init_params(k_par)
    eps = 0.1
    gi_k, w_slab, vec = pack_decoder(params, tokens, mask, eps)     # one-time host fold/pack

    probs, sels = run_global_decoder(states, gi_k, w_slab, vec)
    probs = jax.block_until_ready(probs)
    sels = jax.block_until_ready(sels)

    assert probs.shape == (B,) and sels.shape == (B,)
    assert bool(jnp.isfinite(probs).all())
    assert bool(jnp.all((sels >= 0) & (sels < N_CLAUSES)))

    # Pure-JAX f32 reference; loose tolerance because the kernel feeds the MXU bf16.
    ref = reference_probs(params, tokens, mask, states, eps)        # [B, N]
    ref_at_sel = ref[jnp.arange(B), sels]
    err = float(jnp.max(jnp.abs(probs - ref_at_sel)))
    assert err < 8e-2, f"kernel vs reference mismatch: max abs err = {err}"

    print("KERNEL_OK")
</pallas_src>

<mosaic_0001>
module attributes {stable_mosaic.version = 11 : i64} {
  func.func @global_decoder_kernel(%arg0: i32, %arg1: memref<3x96x1024xf32, #tpu.memory_space<vmem>>, %arg2: memref<168x32xbf16, #tpu.memory_space<vmem>>, %arg3: memref<32x8xf32, #tpu.memory_space<vmem>>, %arg4: memref<32x128xf32, #tpu.memory_space<vmem>>, %arg5: memref<1x2x128xf32, #tpu.memory_space<vmem>>) attributes {dimension_semantics = [#tpu.dimension_semantics<parallel>], iteration_bounds = array<i64: 2>, scalar_prefetch = 0 : i64, scratch_operands = 0 : i64, tpu.core_type = #tpu.core_type<tc>, window_params = [{pipeline_mode = #tpu.pipeline_mode<synchronous>, transform_indices = @transform_0, window_bounds = array<i64: 3, 96, 1024>}, {pipeline_mode = #tpu.pipeline_mode<synchronous>, transform_indices = @transform_1, window_bounds = array<i64: 168, 32>}, {pipeline_mode = #tpu.pipeline_mode<synchronous>, transform_indices = @transform_2, window_bounds = array<i64: 32, 8>}, {transform_indices = @transform_3, window_bounds = array<i64: 32, 128>}, {transform_indices = @transform_4, window_bounds = array<i64: 1, 2, 128>}]} {
    %c0 = arith.constant 0 : index
    %c0_0 = arith.constant 0 : index
    %0 = vector.load %arg2[%c0, %c0_0] : memref<168x32xbf16, #tpu.memory_space<vmem>>, vector<96x32xbf16>
    %c96 = arith.constant 96 : index
    %c0_1 = arith.constant 0 : index
    %1 = vector.load %arg2[%c96, %c0_1] : memref<168x32xbf16, #tpu.memory_space<vmem>>, vector<32x32xbf16>
    %c128 = arith.constant 128 : index
    %c0_2 = arith.constant 0 : index
    %2 = vector.load %arg2[%c128, %c0_2] : memref<168x32xbf16, #tpu.memory_space<vmem>>, vector<32x32xbf16>
    %c160 = arith.constant 160 : index
    %c0_3 = arith.constant 0 : index
    %3 = vector.load %arg2[%c160, %c0_3] : memref<168x32xbf16, #tpu.memory_space<vmem>>, vector<8x32xbf16>
    %c0_4 = arith.constant 0 : index
    %c0_5 = arith.constant 0 : index
    %4 = vector.load %arg3[%c0_4, %c0_5] : memref<32x8xf32, #tpu.memory_space<vmem>>, vector<32x1xf32>
    %c0_6 = arith.constant 0 : index
    %c1 = arith.constant 1 : index
    %5 = vector.load %arg3[%c0_6, %c1] : memref<32x8xf32, #tpu.memory_space<vmem>>, vector<32x1xf32>
    %c0_7 = arith.constant 0 : index
    %c2 = arith.constant 2 : index
    %6 = vector.load %arg3[%c0_7, %c2] : memref<32x8xf32, #tpu.memory_space<vmem>>, vector<32x1xf32>
    %c0_8 = arith.constant 0 : index
    %c3 = arith.constant 3 : index
    %7 = vector.load %arg3[%c0_8, %c3] : memref<32x8xf32, #tpu.memory_space<vmem>>, vector<1x1xf32>
    %c0_9 = arith.constant 0 : index
    %c4 = arith.constant 4 : index
    %8 = vector.load %arg3[%c0_9, %c4] : memref<32x8xf32, #tpu.memory_space<vmem>>, vector<1x1xf32>
    %c0_10 = arith.constant 0 : index
    %c0_11 = arith.constant 0 : index
    %9 = vector.load %arg4[%c0_10, %c0_11] : memref<32x128xf32, #tpu.memory_space<vmem>>, vector<32x128xf32>
    %10 = tpu.concatenate %9, %9, %9, %9, %9, %9, %9, %9 in 1 : vector<32x128xf32>, vector<32x128xf32>, vector<32x128xf32>, vector<32x128xf32>, vector<32x128xf32>, vector<32x128xf32>, vector<32x128xf32>, vector<32x128xf32> -> vector<32x1024xf32>
    %c0_12 = arith.constant 0 : index
    %c0_13 = arith.constant 0 : index
    %c0_14 = arith.constant 0 : index
    %11 = vector.load %arg1[%c0_12, %c0_13, %c0_14] : memref<3x96x1024xf32, #tpu.memory_space<vmem>>, vector<1x96x1024xf32>
    %12 = vector.shape_cast %11 : vector<1x96x1024xf32> to vector<96x1024xf32>
    %13 = arith.truncf %10 : vector<32x1024xf32> to vector<32x1024xbf16>
    %cst = arith.constant dense<0.000000e+00> : vector<96x1024xf32>
    %14 = tpu.matmul %0, %13, %cst {dimension_numbers = #tpu.dot_dimension_numbers<[1], [0], [0], [1], [0, 0, 1, 1], [], []>} : vector<96x32xbf16>, vector<32x1024xbf16>, vector<96x1024xf32> -> vector<96x1024xf32>
    %15 = vector.extract_strided_slice %12 {offsets = [0, 0], sizes = [32, 1024], strides = [1, 1]} : vector<96x1024xf32> to vector<32x1024xf32>
    %16 = vector.extract_strided_slice %14 {offsets = [0, 0], sizes = [32, 1024], strides = [1, 1]} : vector<96x1024xf32> to vector<32x1024xf32>
    %17 = arith.addf %15, %16 : vector<32x1024xf32>
    %18 = arith.negf %17 : vector<32x1024xf32>
    %19 = math.exp %18 : vector<32x1024xf32>
    %cst_15 = arith.constant 1.000000e+00 : f32
    %20 = vector.broadcast %cst_15 : f32 to vector<32x1024xf32>
    %21 = arith.addf %20, %19 : vector<32x1024xf32>
    %22 = arith.divf %20, %21 : vector<32x1024xf32>
    %23 = vector.extract_strided_slice %12 {offsets = [32, 0], sizes = [32, 1024], strides = [1, 1]} : vector<96x1024xf32> to vector<32x1024xf32>
    %24 = vector.extract_strided_slice %14 {offsets = [32, 0], sizes = [32, 1024], strides = [1, 1]} : vector<96x1024xf32> to vector<32x1024xf32>
    %25 = arith.addf %23, %24 : vector<32x1024xf32>
    %26 = arith.negf %25 : vector<32x1024xf32>
    %27 = math.exp %26 : vector<32x1024xf32>
    %cst_16 = arith.constant 1.000000e+00 : f32
    %28 = vector.broadcast %cst_16 : f32 to vector<32x1024xf32>
    %29 = arith.addf %28, %27 : vector<32x1024xf32>
    %30 = arith.divf %28, %29 : vector<32x1024xf32>
    %31 = vector.extract_strided_slice %12 {offsets = [64, 0], sizes = [32, 1024], strides = [1, 1]} : vector<96x1024xf32> to vector<32x1024xf32>
    %32 = vector.extract_strided_slice %14 {offsets = [64, 0], sizes = [32, 1024], strides = [1, 1]} : vector<96x1024xf32> to vector<32x1024xf32>
    %33 = vector.broadcast %4 : vector<32x1xf32> to vector<32x1024xf32>
    %34 = arith.addf %32, %33 : vector<32x1024xf32>
    %35 = arith.mulf %22, %34 : vector<32x1024xf32>
    %36 = arith.addf %31, %35 : vector<32x1024xf32>
    %37 = math.tanh %36 : vector<32x1024xf32>
    %cst_17 = arith.constant 1.000000e+00 : f32
    %38 = vector.broadcast %cst_17 : f32 to vector<32x1024xf32>
    %39 = arith.subf %38, %30 : vector<32x1024xf32>
    %40 = arith.mulf %39, %37 : vector<32x1024xf32>
    %41 = arith.mulf %30, %10 : vector<32x1024xf32>
    %42 = arith.addf %40, %41 : vector<32x1024xf32>
    %c1_18 = arith.constant 1 : index
    %c0_19 = arith.constant 0 : index
    %c0_20 = arith.constant 0 : index
    %43 = vector.load %arg1[%c1_18, %c0_19, %c0_20] : memref<3x96x1024xf32, #tpu.memory_space<vmem>>, vector<1x96x1024xf32>
    %44 = vector.shape_cast %43 : vector<1x96x1024xf32> to vector<96x1024xf32>
    %45 = arith.truncf %42 : vector<32x1024xf32> to vector<32x1024xbf16>
    %cst_21 = arith.constant dense<0.000000e+00> : vector<96x1024xf32>
    %46 = tpu.matmul %0, %45, %cst_21 {dimension_numbers = #tpu.dot_dimension_numbers<[1], [0], [0], [1], [0, 0, 1, 1], [], []>} : vector<96x32xbf16>, vector<32x1024xbf16>, vector<96x1024xf32> -> vector<96x1024xf32>
    %47 = vector.extract_strided_slice %44 {offsets = [0, 0], sizes = [32, 1024], strides = [1, 1]} : vector<96x1024xf32> to vector<32x1024xf32>
    %48 = vector.extract_strided_slice %46 {offsets = [0, 0], sizes = [32, 1024], strides = [1, 1]} : vector<96x1024xf32> to vector<32x1024xf32>
    %49 = arith.addf %47, %48 : vector<32x1024xf32>
    %50 = arith.negf %49 : vector<32x1024xf32>
    %51 = math.exp %50 : vector<32x1024xf32>
    %cst_22 = arith.constant 1.000000e+00 : f32
    %52 = vector.broadcast %cst_22 : f32 to vector<32x1024xf32>
    %53 = arith.addf %52, %51 : vector<32x1024xf32>
    %54 = arith.divf %52, %53 : vector<32x1024xf32>
    %55 = vector.extract_strided_slice %44 {offsets = [32, 0], sizes = [32, 1024], strides = [1, 1]} : vector<96x1024xf32> to vector<32x1024xf32>
    %56 = vector.extract_strided_slice %46 {offsets = [32, 0], sizes = [32, 1024], strides = [1, 1]} : vector<96x1024xf32> to vector<32x1024xf32>
    %57 = arith.addf %55, %56 : vector<32x1024xf32>
    %58 = arith.negf %57 : vector<32x1024xf32>
    %59 = math.exp %58 : vector<32x1024xf32>
    %cst_23 = arith.constant 1.000000e+00 : f32
    %60 = vector.broadcast %cst_23 : f32 to vector<32x1024xf32>
    %61 = arith.addf %60, %59 : vector<32x1024xf32>
    %62 = arith.divf %60, %61 : vector<32x1024xf32>
    %63 = vector.extract_strided_slice %44 {offsets = [64, 0], sizes = [32, 1024], strides = [1, 1]} : vector<96x1024xf32> to vector<32x1024xf32>
    %64 = vector.extract_strided_slice %46 {offsets = [64, 0], sizes = [32, 1024], strides = [1, 1]} : vector<96x1024xf32> to vector<32x1024xf32>
    %65 = vector.broadcast %4 : vector<32x1xf32> to vector<32x1024xf32>
    %66 = arith.addf %64, %65 : vector<32x1024xf32>
    %67 = arith.mulf %54, %66 : vector<32x1024xf32>
    %68 = arith.addf %63, %67 : vector<32x1024xf32>
    %69 = math.tanh %68 : vector<32x1024xf32>
    %cst_24 = arith.constant 1.000000e+00 : f32
    %70 = vector.broadcast %cst_24 : f32 to vector<32x1024xf32>
    %71 = arith.subf %70, %62 : vector<32x1024xf32>
    %72 = arith.mulf %71, %69 : vector<32x1024xf32>
    %73 = arith.mulf %62, %42 : vector<32x1024xf32>
    %74 = arith.addf %72, %73 : vector<32x1024xf32>
    %c2_25 = arith.constant 2 : index
    %c0_26 = arith.constant 0 : index
    %c0_27 = arith.constant 0 : index
    %75 = vector.load %arg1[%c2_25, %c0_26, %c0_27] : memref<3x96x1024xf32, #tpu.memory_space<vmem>>, vector<1x96x1024xf32>
    %76 = vector.shape_cast %75 : vector<1x96x1024xf32> to vector<96x1024xf32>
    %77 = arith.truncf %74 : vector<32x1024xf32> to vector<32x1024xbf16>
    %cst_28 = arith.constant dense<0.000000e+00> : vector<96x1024xf32>
    %78 = tpu.matmul %0, %77, %cst_28 {dimension_numbers = #tpu.dot_dimension_numbers<[1], [0], [0], [1], [0, 0, 1, 1], [], []>} : vector<96x32xbf16>, vector<32x1024xbf16>, vector<96x1024xf32> -> vector<96x1024xf32>
    %79 = vector.extract_strided_slice %76 {offsets = [0, 0], sizes = [32, 1024], strides = [1, 1]} : vector<96x1024xf32> to vector<32x1024xf32>
    %80 = vector.extract_strided_slice %78 {offsets = [0, 0], sizes = [32, 1024], strides = [1, 1]} : vector<96x1024xf32> to vector<32x1024xf32>
    %81 = arith.addf %79, %80 : vector<32x1024xf32>
    %82 = arith.negf %81 : vector<32x1024xf32>
    %83 = math.exp %82 : vector<32x1024xf32>
    %cst_29 = arith.constant 1.000000e+00 : f32
    %84 = vector.broadcast %cst_29 : f32 to vector<32x1024xf32>
    %85 = arith.addf %84, %83 : vector<32x1024xf32>
    %86 = arith.divf %84, %85 : vector<32x1024xf32>
    %87 = vector.extract_strided_slice %76 {offsets = [32, 0], sizes = [32, 1024], strides = [1, 1]} : vector<96x1024xf32> to vector<32x1024xf32>
    %88 = vector.extract_strided_slice %78 {offsets = [32, 0], sizes = [32, 1024], strides = [1, 1]} : vector<96x1024xf32> to vector<32x1024xf32>
    %89 = arith.addf %87, %88 : vector<32x1024xf32>
    %90 = arith.negf %89 : vector<32x1024xf32>
    %91 = math.exp %90 : vector<32x1024xf32>
    %cst_30 = arith.constant 1.000000e+00 : f32
    %92 = vector.broadcast %cst_30 : f32 to vector<32x1024xf32>
    %93 = arith.addf %92, %91 : vector<32x1024xf32>
    %94 = arith.divf %92, %93 : vector<32x1024xf32>
    %95 = vector.extract_strided_slice %76 {offsets = [64, 0], sizes = [32, 1024], strides = [1, 1]} : vector<96x1024xf32> to vector<32x1024xf32>
    %96 = vector.extract_strided_slice %78 {offsets = [64, 0], sizes = [32, 1024], strides = [1, 1]} : vector<96x1024xf32> to vector<32x1024xf32>
    %97 = vector.broadcast %4 : vector<32x1xf32> to vector<32x1024xf32>
    %98 = arith.addf %96, %97 : vector<32x1024xf32>
    %99 = arith.mulf %86, %98 : vector<32x1024xf32>
    %100 = arith.addf %95, %99 : vector<32x1024xf32>
    %101 = math.tanh %100 : vector<32x1024xf32>
    %cst_31 = arith.constant 1.000000e+00 : f32
    %102 = vector.broadcast %cst_31 : f32 to vector<32x1024xf32>
    %103 = arith.subf %102, %94 : vector<32x1024xf32>
    %104 = arith.mulf %103, %101 : vector<32x1024xf32>
    %105 = arith.mulf %94, %74 : vector<32x1024xf32>
    %106 = arith.addf %104, %105 : vector<32x1024xf32>
    %107 = arith.truncf %106 : vector<32x1024xf32> to vector<32x1024xbf16>
    %cst_32 = arith.constant dense<0.000000e+00> : vector<32x1024xf32>
    %108 = tpu.matmul %1, %107, %cst_32 {dimension_numbers = #tpu.dot_dimension_numbers<[1], [0], [0], [1], [0, 0, 1, 1], [], []>} : vector<32x32xbf16>, vector<32x1024xbf16>, vector<32x1024xf32> -> vector<32x1024xf32>
    %109 = vector.broadcast %5 : vector<32x1xf32> to vector<32x1024xf32>
    %110 = arith.addf %108, %109 : vector<32x1024xf32>
    %cst_33 = arith.constant 0.000000e+00 : f32
    %111 = vector.broadcast %cst_33 : f32 to vector<32x1024xf32>
    %112 = arith.maximumf %110, %111 : vector<32x1024xf32>
    %113 = arith.truncf %112 : vector<32x1024xf32> to vector<32x1024xbf16>
    %cst_34 = arith.constant dense<0.000000e+00> : vector<32x1024xf32>
    %114 = tpu.matmul %2, %113, %cst_34 {dimension_numbers = #tpu.dot_dimension_numbers<[1], [0], [0], [1], [0, 0, 1, 1], [], []>} : vector<32x32xbf16>, vector<32x1024xbf16>, vector<32x1024xf32> -> vector<32x1024xf32>
    %115 = vector.broadcast %6 : vector<32x1xf32> to vector<32x1024xf32>
    %116 = arith.addf %114, %115 : vector<32x1024xf32>
    %cst_35 = arith.constant 0.000000e+00 : f32
    %117 = vector.broadcast %cst_35 : f32 to vector<32x1024xf32>
    %118 = arith.maximumf %116, %117 : vector<32x1024xf32>
    %119 = arith.truncf %118 : vector<32x1024xf32> to vector<32x1024xbf16>
    %cst_36 = arith.constant dense<0.000000e+00> : vector<8x1024xf32>
    %120 = tpu.matmul %3, %119, %cst_36 {dimension_numbers = #tpu.dot_dimension_numbers<[1], [0], [0], [1], [0, 0, 1, 1], [], []>} : vector<8x32xbf16>, vector<32x1024xbf16>, vector<8x1024xf32> -> vector<8x1024xf32>
    %121 = vector.extract_strided_slice %120 {offsets = [0, 0], sizes = [1, 1024], strides = [1, 1]} : vector<8x1024xf32> to vector<1x1024xf32>
    %122 = vector.broadcast %7 : vector<1x1xf32> to vector<1x1024xf32>
    %123 = arith.addf %121, %122 : vector<1x1024xf32>
    %124 = vector.extract_strided_slice %123 {offsets = [0, 0], sizes = [1, 128], strides = [1, 1]} : vector<1x1024xf32> to vector<1x128xf32>
    %125 = vector.extract_strided_slice %123 {offsets = [0, 128], sizes = [1, 128], strides = [1, 1]} : vector<1x1024xf32> to vector<1x128xf32>
    %126 = vector.extract_strided_slice %123 {offsets = [0, 256], sizes = [1, 128], strides = [1, 1]} : vector<1x1024xf32> to vector<1x128xf32>
    %127 = vector.extract_strided_slice %123 {offsets = [0, 384], sizes = [1, 128], strides = [1, 1]} : vector<1x1024xf32> to vector<1x128xf32>
    %128 = vector.extract_strided_slice %123 {offsets = [0, 512], sizes = [1, 128], strides = [1, 1]} : vector<1x1024xf32> to vector<1x128xf32>
    %129 = vector.extract_strided_slice %123 {offsets = [0, 640], sizes = [1, 128], strides = [1, 1]} : vector<1x1024xf32> to vector<1x128xf32>
    %130 = vector.extract_strided_slice %123 {offsets = [0, 768], sizes = [1, 128], strides = [1, 1]} : vector<1x1024xf32> to vector<1x128xf32>
    %131 = vector.extract_strided_slice %123 {offsets = [0, 896], sizes = [1, 128], strides = [1, 1]} : vector<1x1024xf32> to vector<1x128xf32>
    %cst_37 = arith.constant 0.000000e+00 : f32
    %132 = vector.broadcast %cst_37 : f32 to vector<1x128xf32>
    %133 = arith.cmpf ogt, %125, %124 : vector<1x128xf32>
    %cst_38 = arith.constant 1.000000e+00 : f32
    %134 = vector.broadcast %cst_38 : f32 to vector<1x128xf32>
    %135 = arith.select %133, %134, %132 : vector<1x128xi1>, vector<1x128xf32>
    %136 = arith.select %133, %125, %124 : vector<1x128xi1>, vector<1x128xf32>
    %137 = arith.cmpf ogt, %126, %136 : vector<1x128xf32>
    %cst_39 = arith.constant 2.000000e+00 : f32
    %138 = vector.broadcast %cst_39 : f32 to vector<1x128xf32>
    %139 = arith.select %137, %138, %135 : vector<1x128xi1>, vector<1x128xf32>
    %140 = arith.select %137, %126, %136 : vector<1x128xi1>, vector<1x128xf32>
    %141 = arith.cmpf ogt, %127, %140 : vector<1x128xf32>
    %cst_40 = arith.constant 3.000000e+00 : f32
    %142 = vector.broadcast %cst_40 : f32 to vector<1x128xf32>
    %143 = arith.select %141, %142, %139 : vector<1x128xi1>, vector<1x128xf32>
    %144 = arith.select %141, %127, %140 : vector<1x128xi1>, vector<1x128xf32>
    %145 = arith.cmpf ogt, %128, %144 : vector<1x128xf32>
    %cst_41 = arith.constant 4.000000e+00 : f32
    %146 = vector.broadcast %cst_41 : f32 to vector<1x128xf32>
    %147 = arith.select %145, %146, %143 : vector<1x128xi1>, vector<1x128xf32>
    %148 = arith.select %145, %128, %144 : vector<1x128xi1>, vector<1x128xf32>
    %149 = arith.cmpf ogt, %129, %148 : vector<1x128xf32>
    %cst_42 = arith.constant 5.000000e+00 : f32
    %150 = vector.broadcast %cst_42 : f32 to vector<1x128xf32>
    %151 = arith.select %149, %150, %147 : vector<1x128xi1>, vector<1x128xf32>
    %152 = arith.select %149, %129, %148 : vector<1x128xi1>, vector<1x128xf32>
    %153 = arith.cmpf ogt, %130, %152 : vector<1x128xf32>
    %cst_43 = arith.constant 6.000000e+00 : f32
    %154 = vector.broadcast %cst_43 : f32 to vector<1x128xf32>
    %155 = arith.select %153, %154, %151 : vector<1x128xi1>, vector<1x128xf32>
    %156 = arith.select %153, %130, %152 : vector<1x128xi1>, vector<1x128xf32>
    %157 = arith.cmpf ogt, %131, %156 : vector<1x128xf32>
    %cst_44 = arith.constant 7.000000e+00 : f32
    %158 = vector.broadcast %cst_44 : f32 to vector<1x128xf32>
    %159 = arith.select %157, %158, %155 : vector<1x128xi1>, vector<1x128xf32>
    %160 = arith.select %157, %131, %156 : vector<1x128xi1>, vector<1x128xf32>
    %cst_45 = arith.constant 0.000000e+00 : f32
    %161 = vector.broadcast %cst_45 : f32 to vector<1x128xf32>
    %162 = arith.subf %124, %160 : vector<1x128xf32>
    %163 = math.exp %162 : vector<1x128xf32>
    %164 = arith.addf %161, %163 : vector<1x128xf32>
    %165 = arith.subf %125, %160 : vector<1x128xf32>
    %166 = math.exp %165 : vector<1x128xf32>
    %167 = arith.addf %164, %166 : vector<1x128xf32>
    %168 = arith.subf %126, %160 : vector<1x128xf32>
    %169 = math.exp %168 : vector<1x128xf32>
    %170 = arith.addf %167, %169 : vector<1x128xf32>
    %171 = arith.subf %127, %160 : vector<1x128xf32>
    %172 = math.exp %171 : vector<1x128xf32>
    %173 = arith.addf %170, %172 : vector<1x128xf32>
    %174 = arith.subf %128, %160 : vector<1x128xf32>
    %175 = math.exp %174 : vector<1x128xf32>
    %176 = arith.addf %173, %175 : vector<1x128xf32>
    %177 = arith.subf %129, %160 : vector<1x128xf32>
    %178 = math.exp %177 : vector<1x128xf32>
    %179 = arith.addf %176, %178 : vector<1x128xf32>
    %180 = arith.subf %130, %160 : vector<1x128xf32>
    %181 = math.exp %180 : vector<1x128xf32>
    %182 = arith.addf %179, %181 : vector<1x128xf32>
    %183 = arith.subf %131, %160 : vector<1x128xf32>
    %184 = math.exp %183 : vector<1x128xf32>
    %185 = arith.addf %182, %184 : vector<1x128xf32>
    %cst_46 = arith.constant 1.000000e+00 : f32
    %186 = vector.broadcast %cst_46 : f32 to vector<1x128xf32>
    %187 = arith.divf %186, %185 : vector<1x128xf32>
    %cst_47 = arith.constant 1.000000e+00 : f32
    %188 = vector.broadcast %cst_47 : f32 to vector<1x1xf32>
    %189 = arith.subf %188, %8 : vector<1x1xf32>
    %190 = vector.broadcast %189 : vector<1x1xf32> to vector<1x128xf32>
    %191 = arith.mulf %187, %190 : vector<1x128xf32>
    %cst_48 = arith.constant 1.250000e-01 : f32
    %192 = vector.broadcast %cst_48 : f32 to vector<1x1xf32>
    %193 = arith.mulf %8, %192 : vector<1x1xf32>
    %194 = vector.broadcast %193 : vector<1x1xf32> to vector<1x128xf32>
    %195 = arith.addf %191, %194 : vector<1x128xf32>
    %196 = tpu.concatenate %195, %159 in 0 : vector<1x128xf32>, vector<1x128xf32> -> vector<2x128xf32>
    %197 = vector.shape_cast %196 : vector<2x128xf32> to vector<1x2x128xf32>
    %c0_49 = arith.constant 0 : index
    %c0_50 = arith.constant 0 : index
    %c0_51 = arith.constant 0 : index
    %198 = vector.load %arg5[%c0_49, %c0_50, %c0_51] : memref<1x2x128xf32, #tpu.memory_space<vmem>>, vector<1x2x128xf32>
    tpu.vector_store %arg5[%c0_49, %c0_50, %c0_51], %197 {strides = array<i32>} : memref<1x2x128xf32, #tpu.memory_space<vmem>>, vector<1x2x128xf32>,
    return
  }
  func.func @transform_0(%arg0: i32) -> (i32, i32, i32) {
    %c0_i32 = arith.constant 0 : i32
    %c0_i32_0 = arith.constant 0 : i32
    %c0_i32_1 = arith.constant 0 : i32
    %c0_i32_2 = arith.constant 0 : i32
    return %c0_i32, %c0_i32_0, %c0_i32_1 : i32, i32, i32
  }
  func.func @transform_1(%arg0: i32) -> (i32, i32) {
    %c0_i32 = arith.constant 0 : i32
    %c0_i32_0 = arith.constant 0 : i32
    %c0_i32_1 = arith.constant 0 : i32
    return %c0_i32, %c0_i32_0 : i32, i32
  }
  func.func @transform_2(%arg0: i32) -> (i32, i32) {
    %c0_i32 = arith.constant 0 : i32
    %c0_i32_0 = arith.constant 0 : i32
    %c0_i32_1 = arith.constant 0 : i32
    return %c0_i32, %c0_i32_0 : i32, i32
  }
  func.func @transform_3(%arg0: i32) -> (i32, i32) {
    %c0_i32 = arith.constant 0 : i32
    %c0_i32_0 = arith.constant 0 : i32
    return %c0_i32, %arg0 : i32, i32
  }
  func.func @transform_4(%arg0: i32) -> (i32, i32, i32) {
    %c0_i32 = arith.constant 0 : i32
    %c0_i32_0 = arith.constant 0 : i32
    %c0_i32_1 = arith.constant 0 : i32
    return %arg0, %c0_i32, %c0_i32_0 : i32, i32, i32
  }
}

</mosaic_0001>

<llo_original>
// kernel: tpu_custom_call.1
$region0: #{tpu_custom_call.1}
  #allocation0 [shape = 'u32[]', space=smem, size = 0x4, offset = 0x4, fixed_abs, tag = 'smem constant byte address 0x4 - core index']
  #allocation1 [shape = 'u32[144,128]{1,0:T(1,128)}', space=vmem, size = 0x12000, scoped, tag = 'internal scratch']
  %s0 = inlined_call_operand.hbm [shape: f32[3,96,1024], index: 0, kind: input, shape index: {}]
  %s1 = inlined_call_operand.vmem [shape: bf16[168,32], index: 1, kind: input, shape index: {}]
  %s2 = inlined_call_operand.vmem [shape: f32[32,8], index: 2, kind: input, shape index: {}]
  %s3 = inlined_call_operand.hbm [shape: f32[32,256], index: 3, kind: input, shape index: {}]
  %s4 = inlined_call_operand.hbm [shape: f32[2,2,128], index: 4, kind: output, shape index: {}]
  %s5 = sld [smem:[#allocation0]]
  $region57: #{tpu_custom_call.1} parent=0
    _
  %s7 = ssub.s32 1, %s5
  %s8 = scalar_select 0, %s7, %s5
  $region1: #{tpu_custom_call.1} parent=0
    #allocation2 [shape = 'u8[1179648]{0}', space=vmem, size = 0x120000, scoped, tag = 'input window, operand 0, single buffered']
    #allocation3 [shape = 's32[2]{0}', space=sflag, size = 0x8, scoped, tag = 'scoped memory for tpu_custom_call.1']
    #allocation4 [shape = 's32[2]{0}', space=sflag, size = 0x8, scoped, tag = 'scoped memory for tpu_custom_call.1']
    #allocation5 [shape = 'u8[32768]{0}', space=vmem, size = 0x8000, scoped, tag = 'input window, operand 3']
    #allocation6 [shape = 's32[2]{0}', space=sflag, size = 0x8, scoped, tag = 'scoped memory for tpu_custom_call.1']
    #allocation7 [shape = 'u8[2048]{0}', space=vmem, size = 0x800, scoped, tag = 'output window, operand 0']
    %9 = vsyncpa [#allocation3], 0
    %10 = vsyncpa [#allocation6], 0
    %s11 = scalar_lea.sflag [#allocation6], 1
    %12 = vsyncpa %s11, 0
    %13 = vsyncpa [#allocation4], 0
    %s14 = scalar_lea.sflag [#allocation4], 1
    %15 = vsyncpa %s14, 0
    loop: start=0, step=1, limit=4
    $region2: #{tpu_custom_call.1} parent=1 // loop_pre_header
      _
    $region3: #{tpu_custom_call.1} parent=1 // loop_header
      %s17 = sphi 0, %s21
      %p18 = scmp.ge.s32.totalorder %s17, 4
      %s25 = sphi 0, %s25
      %s27 = sphi 0, %s25
      %s28 = sphi 0, %s27
      %s42 = sphi 0, %s28
      %s46 = sphi 0, %s46
      %s48 = sphi 0, %s46
      %s49 = sphi 0, %s48
      %s63 = sphi 0, %s49
      %s67 = sphi 0, %s67
      %s69 = sphi 0, %s67
      %s70 = sphi 0, %s69
      %s84 = sphi 0, %s70
      %s90 = sphi 0, %s92
      %s93 = sphi 0, %s90
      %s94 = sphi 0, %s93
      %s110 = sphi 0, %s94
      %s116 = sphi 0, %s118
      %s119 = sphi 0, %s116
      %s120 = sphi 0, %s119
      %s136 = sphi 0, %s120
    $region4: #{tpu_custom_call.1} parent=1 // loop_header_branch
      %20 = sbr.rel (%p18) target = $region8
    $region5: #{tpu_custom_call.1} parent=1 // loop_body
      %s22 = ssub.s32 %s17, 1
      %s23 = ssub.s32 %s17, 2
      %s24 = sadd.s32 %s17, 1
      %s26 = sadd.s32 %s25, 1
      %p29 = scmp.eq.s32.totalorder %s17, 1
      %p30 = scmp.ne.s32.totalorder %s25, %s27
      %p31 = scmp.eq.s32.totalorder %s17, 0
      %p32 = por %p30, %p31
      %p33 = scmp.ne.s32.totalorder %s25, %s27
      %p34 = scmp.eq.s32.totalorder %s22, 1
      %p35 = por %p33, %p34
      %p36 = scmp.ne.s32.totalorder %s27, %s28
      %p37 = scmp.eq.s32.totalorder %s22, 0
      %p38 = por %p36, %p37
      %p39 = scmp.ne.s32.totalorder %s27, %s28
      %p40 = scmp.eq.s32.totalorder %s23, 1
      %p41 = por %p39, %p40
      %p43 = scmp.ne.s32.totalorder %s28, %s42
      %p44 = scmp.eq.s32.totalorder %s23, 0
      %p45 = por %p43, %p44
      %s47 = sadd.s32 %s46, 1
      %p50 = scmp.eq.s32.totalorder %s17, 1
      %p51 = scmp.ne.s32.totalorder %s46, %s48
      %p52 = scmp.eq.s32.totalorder %s17, 0
      %p53 = por %p51, %p52
      %p54 = scmp.ne.s32.totalorder %s46, %s48
      %p55 = scmp.eq.s32.totalorder %s22, 1
      %p56 = por %p54, %p55
      %p57 = scmp.ne.s32.totalorder %s48, %s49
      %p58 = scmp.eq.s32.totalorder %s22, 0
      %p59 = por %p57, %p58
      %p60 = scmp.ne.s32.totalorder %s48, %s49
      %p61 = scmp.eq.s32.totalorder %s23, 1
      %p62 = por %p60, %p61
      %p64 = scmp.ne.s32.totalorder %s49, %s63
      %p65 = scmp.eq.s32.totalorder %s23, 0
      %p66 = por %p64, %p65
      %s68 = sadd.s32 %s67, 1
      %p71 = scmp.eq.s32.totalorder %s17, 1
      %p72 = scmp.ne.s32.totalorder %s67, %s69
      %p73 = scmp.eq.s32.totalorder %s17, 0
      %p74 = por %p72, %p73
      %p75 = scmp.ne.s32.totalorder %s67, %s69
      %p76 = scmp.eq.s32.totalorder %s22, 1
      %p77 = por %p75, %p76
      %p78 = scmp.ne.s32.totalorder %s69, %s70
      %p79 = scmp.eq.s32.totalorder %s22, 0
      %p80 = por %p78, %p79
      %p81 = scmp.ne.s32.totalorder %s69, %s70
      %p82 = scmp.eq.s32.totalorder %s23, 1
      %p83 = por %p81, %p82
      %p85 = scmp.ne.s32.totalorder %s70, %s84
      %p86 = scmp.eq.s32.totalorder %s23, 0
      %p87 = por %p85, %p86
      %s88 = ssub.s32 %s17, %s24
      %p89 = scmp.eq.s32.totalorder %s88, 0
      %s91 = sadd.s32 %s90, 1
      %s92 = scalar_select %p89, %s90, %s91
      %p95 = pneg %p89
      %p96 = scmp.eq.s32.totalorder %s17, 1
      %p97 = por %p95, %p96
      %p98 = scmp.ne.s32.totalorder %s90, %s93
      %p99 = scmp.eq.s32.totalorder %s17, 0
      %p100 = por %p98, %p99
      %p101 = scmp.ne.s32.totalorder %s90, %s93
      %p102 = scmp.eq.s32.totalorder %s22, 1
      %p103 = por %p101, %p102
      %p104 = scmp.ne.s32.totalorder %s93, %s94
      %p105 = scmp.eq.s32.totalorder %s22, 0
      %p106 = por %p104, %p105
      %p107 = scmp.ne.s32.totalorder %s93, %s94
      %p108 = scmp.eq.s32.totalorder %s23, 1
      %p109 = por %p107, %p108
      %p111 = scmp.ne.s32.totalorder %s94, %s110
      %p112 = scmp.eq.s32.totalorder %s23, 0
      %p113 = por %p111, %p112
      %s114 = ssub.s32 %s17, %s24
      %p115 = scmp.eq.s32.totalorder %s114, 0
      %s117 = sadd.s32 %s116, 1
      %s118 = scalar_select %p115, %s116, %s117
      %p121 = pneg %p115
      %p122 = scmp.eq.s32.totalorder %s17, 1
      %p123 = por %p121, %p122
      %p124 = scmp.ne.s32.totalorder %s116, %s119
      %p125 = scmp.eq.s32.totalorder %s17, 0
      %p126 = por %p124, %p125
      %p127 = scmp.ne.s32.totalorder %s116, %s119
      %p128 = scmp.eq.s32.totalorder %s22, 1
      %p129 = por %p127, %p128
      %p130 = scmp.ne.s32.totalorder %s119, %s120
      %p131 = scmp.eq.s32.totalorder %s22, 0
      %p132 = por %p130, %p131
      %p133 = scmp.ne.s32.totalorder %s119, %s120
      %p134 = scmp.eq.s32.totalorder %s23, 1
      %p135 = por %p133, %p134
      %p137 = scmp.ne.s32.totalorder %s120, %s136
      %p138 = scmp.eq.s32.totalorder %s23, 0
      %p139 = por %p137, %p138
      %p140 = scmp.le.s32.totalorder 1, %s17
      %p141 = scmp.lt.s32.totalorder %s17, 3
      %p142 = pnand %p140, %p141
      %p143 = pneg %p142
      // Predicated region
      $region9: #{tpu_custom_call.1} parent=5 // pred_check
        _
      $region10: #{tpu_custom_call.1} parent=5 // pred_check_branch
        %145 = sbr.rel (%p142) target = $region12
      $region11: #{tpu_custom_call.1} parent=5 // pred_region
        %s146 = ssub.s32 %s17, 1
        // Predicated region
        $region13: #{tpu_custom_call.1} parent=11 // pred_check
          %p147 = pneg %p38
        $region14: #{tpu_custom_call.1} parent=11 // pred_check_branch
          %149 = sbr.rel (%p147) target = $region16
        $region15: #{tpu_custom_call.1} parent=11 // pred_region
          %s151 = ssub.s32 36864, 36864
          %152 = vsyncadd [#allocation3], %s151
          %s153 = sshll.u32 [#allocation2], 4
          %s154 = int_to_ptr.vmem [resolvable:$true] %s153
          %159 = dma.hbm_to_vmem [thread:$0]  %s0, 36864, %s154, [#allocation3], 1024, 1024, 64
        $region16: #{tpu_custom_call.1} parent=11 // pred_fallthru
          _
        // Predicated region
        $region17: #{tpu_custom_call.1} parent=11 // pred_check
          %p160 = pneg %p59
        $region18: #{tpu_custom_call.1} parent=11 // pred_check_branch
          %162 = sbr.rel (%p160) target = $region20
        $region19: #{tpu_custom_call.1} parent=11 // pred_region
          _
        $region20: #{tpu_custom_call.1} parent=11 // pred_fallthru
          _
        // Predicated region
        $region21: #{tpu_custom_call.1} parent=11 // pred_check
          %p163 = pneg %p80
        $region22: #{tpu_custom_call.1} parent=11 // pred_check_branch
          %165 = sbr.rel (%p163) target = $region24
        $region23: #{tpu_custom_call.1} parent=11 // pred_region
          _
        $region24: #{tpu_custom_call.1} parent=11 // pred_fallthru
          _
      $region12: #{tpu_custom_call.1} parent=5 // pred_fallthru
        _
      %p166 = scmp.lt.s32.totalorder %s17, 2
      // Predicated region
      $region25: #{tpu_custom_call.1} parent=5 // pred_check
        %p167 = pneg %p166
      $region26: #{tpu_custom_call.1} parent=5 // pred_check_branch
        %169 = sbr.rel (%p167) target = $region28
      $region27: #{tpu_custom_call.1} parent=5 // pred_region
        // Predicated region
        $region29: #{tpu_custom_call.1} parent=27 // pred_check
          %p170 = pneg %p100
        $region30: #{tpu_custom_call.1} parent=27 // pred_check_branch
          %172 = sbr.rel (%p170) target = $region32
        $region31: #{tpu_custom_call.1} parent=27 // pred_region
          %s173 = sand.u32 %s90, 1
          %s174 = scalar_lea.sflag [#allocation6], %s173
          %s175 = sand.u32 %s90, 1
          %s176 = smul.addr %s175, 32
          %s177 = scalar_lea.vmem [#allocation5], %s176
          %s179 = ssub.s32 512, 512
          %180 = vsyncadd %s174, %s179
          %s181 = smul.addr %s17, 128
          %s182 = scalar_lea.hbm %s3, %s181
          %s183 = sshll.u32 %s177, 4
          %s184 = int_to_ptr.vmem [resolvable:$true] %s183
          %189 = dma.hbm_to_vmem [thread:$0]  %s182, 512, %s184, %s174, 256, 128, 8
        $region32: #{tpu_custom_call.1} parent=27 // pred_fallthru
          _
      $region28: #{tpu_custom_call.1} parent=5 // pred_fallthru
        _
      %p190 = scmp.le.s32.totalorder 1, %s17
      %p191 = scmp.lt.s32.totalorder %s17, 3
      %p192 = pnand %p190, %p191
      %p193 = pneg %p192
      // Predicated region
      $region33: #{tpu_custom_call.1} parent=5 // pred_check
        _
      $region34: #{tpu_custom_call.1} parent=5 // pred_check_branch
        %195 = sbr.rel (%p192) target = $region36
      $region35: #{tpu_custom_call.1} parent=5 // pred_region
        %s196 = ssub.s32 %s17, 1
        // Predicated region
        $region37: #{tpu_custom_call.1} parent=35 // pred_check
          %p197 = pneg %p38
        $region38: #{tpu_custom_call.1} parent=35 // pred_check_branch
          %199 = sbr.rel (%p197) target = $region40
        $region39: #{tpu_custom_call.1} parent=35 // pred_region
          %200 = dma.done [#allocation3], 36864
        $region40: #{tpu_custom_call.1} parent=35 // pred_fallthru
          _
        %s201 = sand.u32 %s93, 1
        %s202 = scalar_lea.sflag [#allocation6], %s201
        %s203 = sand.u32 %s93, 1
        %s204 = smul.addr %s203, 32
        %s205 = scalar_lea.vmem [#allocation5], %s204
        // Predicated region
        $region41: #{tpu_custom_call.1} parent=35 // pred_check
          %p206 = pneg %p106
        $region42: #{tpu_custom_call.1} parent=35 // pred_check_branch
          %208 = sbr.rel (%p206) target = $region44
        $region43: #{tpu_custom_call.1} parent=35 // pred_region
          %209 = dma.done %s202, 512
        $region44: #{tpu_custom_call.1} parent=35 // pred_fallthru
          _
        %p210 = pneg %p38
        %p211 = pneg %p35
        %p212 = pneg %p59
        %p213 = pneg %p56
        %p214 = pneg %p80
        %p215 = pneg %p77
        %s216 = sand.u32 %s93, 1
        %s217 = scalar_lea.sflag [#allocation6], %s216
        %s218 = sand.u32 %s93, 1
        %s219 = smul.addr %s218, 32
        %s220 = scalar_lea.vmem [#allocation5], %s219
        %p221 = pneg %p106
        %p222 = pneg %p103
        %p223 = pneg %p132
        %p224 = pneg %p129
        %s225 = sand.u32 %s119, 1
        %s226 = scalar_lea.sflag [#allocation4], %s225
        %s227 = sand.u32 %s119, 1
        %s228 = smul.addr %s227, 2
        %s229 = scalar_lea.vmem [#allocation7], %s228
        %v231 = vld [vmem:[%s1] sm:$0xf]
        %v232 = vld [vmem:[%s1 + $0x4] sm:$0xf]
        %v233 = vld [vmem:[%s1 + $0x8] sm:$0xf]
        %v234 = vld [vmem:[%s1 + $0xc] sm:$0xf]
        %v235 = vld [vmem:[%s1 + $0x10] sm:$0xf]
        %v236 = vld [vmem:[%s1 + $0x14] sm:$0xf]
        %v237 = vld [vmem:[%s1 + $0x18] sm:$0xf]
        %v238 = vld [vmem:[%s1 + $0x1c] sm:$0xf]
        %v239 = vld [vmem:[%s1 + $0x20] sm:$0xf]
        %v240 = vld [vmem:[%s1 + $0x24] sm:$0xf]
        %v241 = vld [vmem:[%s1 + $0x28] sm:$0xf]
        %v242 = vld [vmem:[%s1 + $0x2c] sm:$0xf]
        %v243 = vld [vmem:[%s1 + $0x30] sm:$0xf]
        %v244 = vld [vmem:[%s1 + $0x34] sm:$0xf]
        %v245 = vld [vmem:[%s1 + $0x38] sm:$0xf]
        %v246 = vld [vmem:[%s1 + $0x3c] sm:$0xf]
        %v247 = vld [vmem:[%s1 + $0x40] sm:$0xf]
        %v248 = vld [vmem:[%s1 + $0x44] sm:$0xf]
        %v249 = vld [vmem:[%s1 + $0x48] sm:$0xf]
        %v250 = vld [vmem:[%s1 + $0x4c] sm:$0xf]
        %v251 = vld [vmem:[%s1 + $0x50] sm:$0xf]
        %v252 = vld [vmem:[%s2] sm:$0xff]
        %v253 = vld [vmem:[%s2 + $0x8] sm:$0xff]
        %v254 = vld [vmem:[%s2 + $0x10] sm:$0xff]
        %v255 = vld [vmem:[%s2 + $0x18] sm:$0xff]
        %v256 = vld [vmem:[%s2] sm:$0x1]
        %v257 = vld [vmem:[%s205] sm:$0xff]
        %v258 = vld [vmem:[%s205 + $0x8] sm:$0xff]
        %v259 = vld [vmem:[%s205 + $0x10] sm:$0xff]
        %v260 = vld [vmem:[%s205 + $0x18] sm:$0xff]
        %v261 = vld [vmem:[#allocation2] sm:$0xff]
        %v262 = vld [vmem:[#allocation2 + $0x8] sm:$0xff]
        %v263 = vld [vmem:[#allocation2 + $0x10] sm:$0xff]
        %v264 = vld [vmem:[#allocation2 + $0x18] sm:$0xff]
        %v265 = vld [vmem:[#allocation2 + $0x20] sm:$0xff]
        %v266 = vld [vmem:[#allocation2 + $0x28] sm:$0xff]
        %v267 = vld [vmem:[#allocation2 + $0x30] sm:$0xff]
        %v268 = vld [vmem:[#allocation2 + $0x38] sm:$0xff]
        %v269 = vld [vmem:[#allocation2 + $0x40] sm:$0xff]
        %v270 = vld [vmem:[#allocation2 + $0x48] sm:$0xff]
        %v271 = vld [vmem:[#allocation2 + $0x50] sm:$0xff]
        %v272 = vld [vmem:[#allocation2 + $0x58] sm:$0xff]
        %v273 = vld [vmem:[#allocation2 + $0x60] sm:$0xff]
        %v274 = vld [vmem:[#allocation2 + $0x68] sm:$0xff]
        %v275 = vld [vmem:[#allocation2 + $0x70] sm:$0xff]
        %v276 = vld [vmem:[#allocation2 + $0x78] sm:$0xff]
        %v277 = vld [vmem:[#allocation2 + $0x80] sm:$0xff]
        %v278 = vld [vmem:[#allocation2 + $0x88] sm:$0xff]
        %v279 = vld [vmem:[#allocation2 + $0x90] sm:$0xff]
        %v280 = vld [vmem:[#allocation2 + $0x98] sm:$0xff]
        %v281 = vld [vmem:[#allocation2 + $0xa0] sm:$0xff]
        %v282 = vld [vmem:[#allocation2 + $0xa8] sm:$0xff]
        %v283 = vld [vmem:[#allocation2 + $0xb0] sm:$0xff]
        %v284 = vld [vmem:[#allocation2 + $0xb8] sm:$0xff]
        %v285 = vld [vmem:[#allocation2 + $0xc0] sm:$0xff]
        %v286 = vld [vmem:[#allocation2 + $0xc8] sm:$0xff]
        %v287 = vld [vmem:[#allocation2 + $0xd0] sm:$0xff]
        %v288 = vld [vmem:[#allocation2 + $0xd8] sm:$0xff]
        %v289 = vld [vmem:[#allocation2 + $0xe0] sm:$0xff]
        %v290 = vld [vmem:[#allocation2 + $0xe8] sm:$0xff]
        %v291 = vld [vmem:[#allocation2 + $0xf0] sm:$0xff]
        %v292 = vld [vmem:[#allocation2 + $0xf8] sm:$0xff]
        %v293 = vld [vmem:[#allocation2 + $0x100] sm:$0xff]
        %v294 = vld [vmem:[#allocation2 + $0x108] sm:$0xff]
        %v295 = vld [vmem:[#allocation2 + $0x110] sm:$0xff]
        %v296 = vld [vmem:[#allocation2 + $0x118] sm:$0xff]
        %v297 = vld [vmem:[#allocation2 + $0x120] sm:$0xff]
        %v298 = vld [vmem:[#allocation2 + $0x128] sm:$0xff]
        %v299 = vld [vmem:[#allocation2 + $0x130] sm:$0xff]
        %v300 = vld [vmem:[#allocation2 + $0x138] sm:$0xff]
        %v301 = vld [vmem:[#allocation2 + $0x140] sm:$0xff]
        %v302 = vld [vmem:[#allocation2 + $0x148] sm:$0xff]
        %v303 = vld [vmem:[#allocation2 + $0x150] sm:$0xff]
        %v304 = vld [vmem:[#allocation2 + $0x158] sm:$0xff]
        %v305 = vld [vmem:[#allocation2 + $0x160] sm:$0xff]
        %v306 = vld [vmem:[#allocation2 + $0x168] sm:$0xff]
        %v307 = vld [vmem:[#allocation2 + $0x170] sm:$0xff]
        %v308 = vld [vmem:[#allocation2 + $0x178] sm:$0xff]
        %v309 = vld [vmem:[#allocation2 + $0x180] sm:$0xff]
        %v310 = vld [vmem:[#allocation2 + $0x188] sm:$0xff]
        %v311 = vld [vmem:[#allocation2 + $0x190] sm:$0xff]
        %v312 = vld [vmem:[#allocation2 + $0x198] sm:$0xff]
        %v313 = vld [vmem:[#allocation2 + $0x1a0] sm:$0xff]
        %v314 = vld [vmem:[#allocation2 + $0x1a8] sm:$0xff]
        %v315 = vld [vmem:[#allocation2 + $0x1b0] sm:$0xff]
        %v316 = vld [vmem:[#allocation2 + $0x1b8] sm:$0xff]
        %v317 = vld [vmem:[#allocation2 + $0x1c0] sm:$0xff]
        %v318 = vld [vmem:[#allocation2 + $0x1c8] sm:$0xff]
        %v319 = vld [vmem:[#allocation2 + $0x1d0] sm:$0xff]
        %v320 = vld [vmem:[#allocation2 + $0x1d8] sm:$0xff]
        %v321 = vld [vmem:[#allocation2 + $0x1e0] sm:$0xff]
        %v322 = vld [vmem:[#allocation2 + $0x1e8] sm:$0xff]
        %v323 = vld [vmem:[#allocation2 + $0x1f0] sm:$0xff]
        %v324 = vld [vmem:[#allocation2 + $0x1f8] sm:$0xff]
        %v325 = vld [vmem:[#allocation2 + $0x200] sm:$0xff]
        %v326 = vld [vmem:[#allocation2 + $0x208] sm:$0xff]
        %v327 = vld [vmem:[#allocation2 + $0x210] sm:$0xff]
        %v328 = vld [vmem:[#allocation2 + $0x218] sm:$0xff]
        %v329 = vld [vmem:[#allocation2 + $0x220] sm:$0xff]
        %v330 = vld [vmem:[#allocation2 + $0x228] sm:$0xff]
        %v331 = vld [vmem:[#allocation2 + $0x230] sm:$0xff]
        %v332 = vld [vmem:[#allocation2 + $0x238] sm:$0xff]
        %v333 = vld [vmem:[#allocation2 + $0x240] sm:$0xff]
        %v334 = vld [vmem:[#allocation2 + $0x248] sm:$0xff]
        %v335 = vld [vmem:[#allocation2 + $0x250] sm:$0xff]
        %v336 = vld [vmem:[#allocation2 + $0x258] sm:$0xff]
        %v337 = vld [vmem:[#allocation2 + $0x260] sm:$0xff]
        %v338 = vld [vmem:[#allocation2 + $0x268] sm:$0xff]
        %v339 = vld [vmem:[#allocation2 + $0x270] sm:$0xff]
        %v340 = vld [vmem:[#allocation2 + $0x278] sm:$0xff]
        %v341 = vld [vmem:[#allocation2 + $0x280] sm:$0xff]
        %v342 = vld [vmem:[#allocation2 + $0x288] sm:$0xff]
        %v343 = vld [vmem:[#allocation2 + $0x290] sm:$0xff]
        %v344 = vld [vmem:[#allocation2 + $0x298] sm:$0xff]
        %v345 = vld [vmem:[#allocation2 + $0x2a0] sm:$0xff]
        %v346 = vld [vmem:[#allocation2 + $0x2a8] sm:$0xff]
        %v347 = vld [vmem:[#allocation2 + $0x2b0] sm:$0xff]
        %v348 = vld [vmem:[#allocation2 + $0x2b8] sm:$0xff]
        %v349 = vld [vmem:[#allocation2 + $0x2c0] sm:$0xff]
        %v350 = vld [vmem:[#allocation2 + $0x2c8] sm:$0xff]
        %v351 = vld [vmem:[#allocation2 + $0x2d0] sm:$0xff]
        %v352 = vld [vmem:[#allocation2 + $0x2d8] sm:$0xff]
        %v353 = vld [vmem:[#allocation2 + $0x2e0] sm:$0xff]
        %v354 = vld [vmem:[#allocation2 + $0x2e8] sm:$0xff]
        %v355 = vld [vmem:[#allocation2 + $0x2f0] sm:$0xff]
        %v356 = vld [vmem:[#allocation2 + $0x2f8] sm:$0xff]
        %v357 = vpack.c.bf16 %v258, %v257
        %v358 = vpack.c.bf16 %v260, %v259
        %v371 = vunpack.c.l.b16 %v231
        %v372 = vunpack.c.l.b16 %v232
        %v373 = vunpack.c.l.b16 %v233
        %v374 = vunpack.c.l.b16 %v234
        %v375 = vunpack.c.l.b16 %v235
        %v376 = vunpack.c.l.b16 %v236
        %v377 = vunpack.c.l.b16 %v237
        %v378 = vunpack.c.l.b16 %v238
        %v379 = vunpack.c.l.b16 %v239
        %v380 = vunpack.c.l.b16 %v240
        %v381 = vunpack.c.l.b16 %v241
        %v382 = vunpack.c.l.b16 %v242
        %v383 = vpack.c.b16 %v372, %v371
        %v384 = vpack.c.b16 %v374, %v373
        %v385 = vpack.c.b16 %v376, %v375
        %v386 = vpack.c.b16 %v378, %v377
        %v387 = vpack.c.b16 %v380, %v379
        %v388 = vpack.c.b16 %v382, %v381
        %vm389 = vcmask 261120
        %v391 = vsel %vm389, %v383, 0
        %v394 = vsel %vm389, %v384, 0
        %v397 = vsel %vm389, %v385, 0
        %v400 = vsel %vm389, %v386, 0
        %v403 = vsel %vm389, %v387, 0
        %v406 = vsel %vm389, %v388, 0
        %408 = vmatprep.subr.bf16.mxu0 %v357
        %409 = vmatpush1.bf16.msra.mxu0 %v357
        %410 = vmatprep.subr.bf16.mxu0 %v358
        %411 = vmatpush1.bf16.msra.mxu0 %v358
        %412 = vmatprep.subr.bf16.mxu0 0
        %413 = vmatpush1.bf16.msra.mxu0 0
        %414 = vmatprep.subr.bf16.mxu0 0
        %415 = vmatpush1.bf16.msra.mxu0 0
        %416 = vmatprep.subr.bf16.mxu0 0
        %417 = vmatpush1.bf16.msra.mxu0 0
        %418 = vmatprep.subr.bf16.mxu0 0
        %419 = vmatpush1.bf16.msra.mxu0 0
        %420 = vmatprep.subr.bf16.mxu0 0
        %421 = vmatpush1.bf16.msra.mxu0 0
        %422 = vmatprep.subr.bf16.mxu0 0
        %423 = vmatpush1.bf16.msra.mxu0 0
        %424 = vmatprep.subr.bf16.mxu0 0
        %425 = vmatpush1.bf16.msra.mxu0 0
        %426 = vmatprep.subr.bf16.mxu0 0
        %427 = vmatpush1.bf16.msra.mxu0 0
        %428 = vmatprep.subr.bf16.mxu0 0
        %429 = vmatpush1.bf16.msra.mxu0 0
        %430 = vmatprep.subr.bf16.mxu0 0
        %431 = vmatpush1.bf16.msra.mxu0 0
        %432 = vmatprep.subr.bf16.mxu0 0
        %433 = vmatpush1.bf16.msra.mxu0 0
        %434 = vmatprep.subr.bf16.mxu0 0
        %435 = vmatpush1.bf16.msra.mxu0 0
        %436 = vmatprep.subr.bf16.mxu0 0
        %437 = vmatpush1.bf16.msra.mxu0 0
        %438 = vmatprep.subr.bf16.mxu0 0
        %439 = vmatpush1.bf16.msra.mxu0 0
        %440 = vmatprep.mubr.bf16.mxu0 0
        %441 = vmatmul.mubr.bf16.gmra.mrb[0].mxu0 %v391
        %v442 = vpop.f32.mrb[0].mxu0
        %v443 = vadd.f32 0.0, %v442
        %v444 = vpop.f32.mrb[0].mxu0
        %v445 = vadd.f32 0.0, %v444
        %v446 = vpop.f32.mrb[0].mxu0
        %v447 = vadd.f32 0.0, %v446
        %v448 = vpop.f32.mrb[0].mxu0
        %v449 = vadd.f32 0.0, %v448
        %450 = vmatprep.mubr.bf16.mxu0 0
        %451 = vmatmul.mubr.bf16.gmra.mrb[0].mxu0 %v394
        %v452 = vpop.f32.mrb[0].mxu0
        %v453 = vadd.f32 0.0, %v452
        %v454 = vpop.f32.mrb[0].mxu0
        %v455 = vadd.f32 0.0, %v454
        %v456 = vpop.f32.mrb[0].mxu0
        %v457 = vadd.f32 0.0, %v456
        %v458 = vpop.f32.mrb[0].mxu0
        %v459 = vadd.f32 0.0, %v458
        %460 = vmatprep.mubr.bf16.mxu0 0
        %461 = vmatmul.mubr.bf16.gmra.mrb[0].mxu0 %v397
        %v462 = vpop.f32.mrb[0].mxu0
        %v463 = vadd.f32 0.0, %v462
        %v464 = vpop.f32.mrb[0].mxu0
        %v465 = vadd.f32 0.0, %v464
        %v466 = vpop.f32.mrb[0].mxu0
        %v467 = vadd.f32 0.0, %v466
        %v468 = vpop.f32.mrb[0].mxu0
        %v469 = vadd.f32 0.0, %v468
        %470 = vmatprep.mubr.bf16.mxu0 0
        %471 = vmatmul.mubr.bf16.gmra.mrb[0].mxu0 %v400
        %v472 = vpop.f32.mrb[0].mxu0
        %v473 = vadd.f32 0.0, %v472
        %v474 = vpop.f32.mrb[0].mxu0
        %v475 = vadd.f32 0.0, %v474
        %v476 = vpop.f32.mrb[0].mxu0
        %v477 = vadd.f32 0.0, %v476
        %v478 = vpop.f32.mrb[0].mxu0
        %v479 = vadd.f32 0.0, %v478
        %480 = vmatprep.mubr.bf16.mxu0 0
        %481 = vmatmul.mubr.bf16.gmra.mrb[0].mxu0 %v403
        %v482 = vpop.f32.mrb[0].mxu0
        %v483 = vadd.f32 0.0, %v482
        %v484 = vpop.f32.mrb[0].mxu0
        %v485 = vadd.f32 0.0, %v484
        %v486 = vpop.f32.mrb[0].mxu0
        %v487 = vadd.f32 0.0, %v486
        %v488 = vpop.f32.mrb[0].mxu0
        %v489 = vadd.f32 0.0, %v488
        %490 = vmatprep.mubr.bf16.mxu0 0
        %491 = vmatmul.mubr.bf16.gmra.mrb[0].mxu0 %v406
        %v492 = vpop.f32.mrb[0].mxu0
        %v493 = vadd.f32 0.0, %v492
        %v494 = vpop.f32.mrb[0].mxu0
        %v495 = vadd.f32 0.0, %v494
        %v496 = vpop.f32.mrb[0].mxu0
        %v497 = vadd.f32 0.0, %v496
        %v498 = vpop.f32.mrb[0].mxu0
        %v499 = vadd.f32 0.0, %v498
        %500 = vdwg.mxu0
        %v501 = vadd.f32 %v261, %v443
        %v502 = vadd.f32 %v262, %v445
        %v503 = vadd.f32 %v263, %v443
        %v504 = vadd.f32 %v264, %v445
        %v505 = vadd.f32 %v265, %v443
        %v506 = vadd.f32 %v266, %v445
        %v507 = vadd.f32 %v267, %v443
        %v508 = vadd.f32 %v268, %v445
        %v509 = vadd.f32 %v269, %v447
        %v510 = vadd.f32 %v270, %v449
        %v511 = vadd.f32 %v271, %v447
        %v512 = vadd.f32 %v272, %v449
        %v513 = vadd.f32 %v273, %v447
        %v514 = vadd.f32 %v274, %v449
        %v515 = vadd.f32 %v275, %v447
        %v516 = vadd.f32 %v276, %v449
        %v517 = vadd.f32 %v277, %v453
        %v518 = vadd.f32 %v278, %v455
        %v519 = vadd.f32 %v279, %v453
        %v520 = vadd.f32 %v280, %v455
        %v521 = vadd.f32 %v281, %v453
        %v522 = vadd.f32 %v282, %v455
        %v523 = vadd.f32 %v283, %v453
        %v524 = vadd.f32 %v284, %v455
        %v525 = vadd.f32 %v285, %v457
        %v526 = vadd.f32 %v286, %v459
        %v527 = vadd.f32 %v287, %v457
        %v528 = vadd.f32 %v288, %v459
        %v529 = vadd.f32 %v289, %v457
        %v530 = vadd.f32 %v290, %v459
        %v531 = vadd.f32 %v291, %v457
        %v532 = vadd.f32 %v292, %v459
        %v533 = vxor.u32 %v501, 2147483648
        %v534 = vxor.u32 %v502, 2147483648
        %v535 = vxor.u32 %v503, 2147483648
        %v536 = vxor.u32 %v504, 2147483648
        %v537 = vxor.u32 %v505, 2147483648
        %v538 = vxor.u32 %v506, 2147483648
        %v539 = vxor.u32 %v507, 2147483648
        %v540 = vxor.u32 %v508, 2147483648
        %v541 = vxor.u32 %v509, 2147483648
        %v542 = vxor.u32 %v510, 2147483648
        %v543 = vxor.u32 %v511, 2147483648
        %v544 = vxor.u32 %v512, 2147483648
        %v545 = vxor.u32 %v513, 2147483648
        %v546 = vxor.u32 %v514, 2147483648
        %v547 = vxor.u32 %v515, 2147483648
        %v548 = vxor.u32 %v516, 2147483648
        %v549 = vxor.u32 %v517, 2147483648
        %v550 = vxor.u32 %v518, 2147483648
        %v551 = vxor.u32 %v519, 2147483648
        %v552 = vxor.u32 %v520, 2147483648
        %v553 = vxor.u32 %v521, 2147483648
        %v554 = vxor.u32 %v522, 2147483648
        %v555 = vxor.u32 %v523, 2147483648
        %v556 = vxor.u32 %v524, 2147483648
        %v557 = vxor.u32 %v525, 2147483648
        %v558 = vxor.u32 %v526, 2147483648
        %v559 = vxor.u32 %v527, 2147483648
        %v560 = vxor.u32 %v528, 2147483648
        %v561 = vxor.u32 %v529, 2147483648
        %v562 = vxor.u32 %v530, 2147483648
        %v563 = vxor.u32 %v531, 2147483648
        %v564 = vxor.u32 %v532, 2147483648
        %v565 = vmul.f32 %v533, 1.442695
        %v566 = vpow.pop %v565
        %v567 = vmul.f32 %v534, 1.442695
        %v568 = vpow.pop %v567
        %v569 = vmul.f32 %v535, 1.442695
        %v570 = vpow.pop %v569
        %v571 = vmul.f32 %v536, 1.442695
        %v572 = vpow.pop %v571
        %v573 = vmul.f32 %v537, 1.442695
        %v574 = vpow.pop %v573
        %v575 = vmul.f32 %v538, 1.442695
        %v576 = vpow.pop %v575
        %v577 = vmul.f32 %v539, 1.442695
        %v578 = vpow.pop %v577
        %v579 = vmul.f32 %v540, 1.442695
        %v580 = vpow.pop %v579
        %v581 = vmul.f32 %v541, 1.442695
        %v582 = vpow.pop %v581
        %v583 = vmul.f32 %v542, 1.442695
        %v584 = vpow.pop %v583
        %v585 = vmul.f32 %v543, 1.442695
        %v586 = vpow.pop %v585
        %v587 = vmul.f32 %v544, 1.442695
        %v588 = vpow.pop %v587
        %v589 = vmul.f32 %v545, 1.442695
        %v590 = vpow.pop %v589
        %v591 = vmul.f32 %v546, 1.442695
        %v592 = vpow.pop %v591
        %v593 = vmul.f32 %v547, 1.442695
        %v594 = vpow.pop %v593
        %v595 = vmul.f32 %v548, 1.442695
        %v596 = vpow.pop %v595
        %v597 = vmul.f32 %v549, 1.442695
        %v598 = vpow.pop %v597
        %v599 = vmul.f32 %v550, 1.442695
        %v600 = vpow.pop %v599
        %v601 = vmul.f32 %v551, 1.442695
        %v602 = vpow.pop %v601
        %v603 = vmul.f32 %v552, 1.442695
        %v604 = vpow.pop %v603
        %v605 = vmul.f32 %v553, 1.442695
        %v606 = vpow.pop %v605
        %v607 = vmul.f32 %v554, 1.442695
        %v608 = vpow.pop %v607
        %v609 = vmul.f32 %v555, 1.442695
        %v610 = vpow.pop %v609
        %v611 = vmul.f32 %v556, 1.442695
        %v612 = vpow.pop %v611
        %v613 = vmul.f32 %v557, 1.442695
        %v614 = vpow.pop %v613
        %v615 = vmul.f32 %v558, 1.442695
        %v616 = vpow.pop %v615
        %v617 = vmul.f32 %v559, 1.442695
        %v618 = vpow.pop %v617
        %v619 = vmul.f32 %v560, 1.442695
        %v620 = vpow.pop %v619
        %v621 = vmul.f32 %v561, 1.442695
        %v622 = vpow.pop %v621
        %v623 = vmul.f32 %v562, 1.442695
        %v624 = vpow.pop %v623
        %v625 = vmul.f32 %v563, 1.442695
        %v626 = vpow.pop %v625
        %v627 = vmul.f32 %v564, 1.442695
        %v628 = vpow.pop %v627
        %v629 = vadd.f32 %v566, 1.0
        %v630 = vadd.f32 %v568, 1.0
        %v631 = vadd.f32 %v570, 1.0
        %v632 = vadd.f32 %v572, 1.0
        %v633 = vadd.f32 %v574, 1.0
        %v634 = vadd.f32 %v576, 1.0
        %v635 = vadd.f32 %v578, 1.0
        %v636 = vadd.f32 %v580, 1.0
        %v637 = vadd.f32 %v582, 1.0
        %v638 = vadd.f32 %v584, 1.0
        %v639 = vadd.f32 %v586, 1.0
        %v640 = vadd.f32 %v588, 1.0
        %v641 = vadd.f32 %v590, 1.0
        %v642 = vadd.f32 %v592, 1.0
        %v643 = vadd.f32 %v594, 1.0
        %v644 = vadd.f32 %v596, 1.0
        %v645 = vadd.f32 %v598, 1.0
        %v646 = vadd.f32 %v600, 1.0
        %v647 = vadd.f32 %v602, 1.0
        %v648 = vadd.f32 %v604, 1.0
        %v649 = vadd.f32 %v606, 1.0
        %v650 = vadd.f32 %v608, 1.0
        %v651 = vadd.f32 %v610, 1.0
        %v652 = vadd.f32 %v612, 1.0
        %v653 = vadd.f32 %v614, 1.0
        %v654 = vadd.f32 %v616, 1.0
        %v655 = vadd.f32 %v618, 1.0
        %v656 = vadd.f32 %v620, 1.0
        %v657 = vadd.f32 %v622, 1.0
        %v658 = vadd.f32 %v624, 1.0
        %v659 = vadd.f32 %v626, 1.0
        %v660 = vadd.f32 %v628, 1.0
        %v661 = vrcp.pop %v629
        %v662 = vmul.f32 1.0, %v661
        %v663 = vrcp.pop %v630
        %v664 = vmul.f32 1.0, %v663
        %v665 = vrcp.pop %v631
        %v666 = vmul.f32 1.0, %v665
        %v667 = vrcp.pop %v632
        %v668 = vmul.f32 1.0, %v667
        %v669 = vrcp.pop %v633
        %v670 = vmul.f32 1.0, %v669
        %v671 = vrcp.pop %v634
        %v672 = vmul.f32 1.0, %v671
        %v673 = vrcp.pop %v635
        %v674 = vmul.f32 1.0, %v673
        %v675 = vrcp.pop %v636
        %v676 = vmul.f32 1.0, %v675
        %v677 = vrcp.pop %v637
        %v678 = vmul.f32 1.0, %v677
        %v679 = vrcp.pop %v638
        %v680 = vmul.f32 1.0, %v679
        %v681 = vrcp.pop %v639
        %v682 = vmul.f32 1.0, %v681
        %v683 = vrcp.pop %v640
        %v684 = vmul.f32 1.0, %v683
        %v685 = vrcp.pop %v641
        %v686 = vmul.f32 1.0, %v685
        %v687 = vrcp.pop %v642
        %v688 = vmul.f32 1.0, %v687
        %v689 = vrcp.pop %v643
        %v690 = vmul.f32 1.0, %v689
        %v691 = vrcp.pop %v644
        %v692 = vmul.f32 1.0, %v691
        %v693 = vrcp.pop %v645
        %v694 = vmul.f32 1.0, %v693
        %v695 = vrcp.pop %v646
        %v696 = vmul.f32 1.0, %v695
        %v697 = vrcp.pop %v647
        %v698 = vmul.f32 1.0, %v697
        %v699 = vrcp.pop %v648
        %v700 = vmul.f32 1.0, %v699
        %v701 = vrcp.pop %v649
        %v702 = vmul.f32 1.0, %v701
        %v703 = vrcp.pop %v650
        %v704 = vmul.f32 1.0, %v703
        %v705 = vrcp.pop %v651
        %v706 = vmul.f32 1.0, %v705
        %v707 = vrcp.pop %v652
        %v708 = vmul.f32 1.0, %v707
        %v709 = vrcp.pop %v653
        %v710 = vmul.f32 1.0, %v709
        %v711 = vrcp.pop %v654
        %v712 = vmul.f32 1.0, %v711
        %v713 = vrcp.pop %v655
        %v714 = vmul.f32 1.0, %v713
        %v715 = vrcp.pop %v656
        %v716 = vmul.f32 1.0, %v715
        %v717 = vrcp.pop %v657
        %v718 = vmul.f32 1.0, %v717
        %v719 = vrcp.pop %v658
        %v720 = vmul.f32 1.0, %v719
        %v721 = vrcp.pop %v659
        %v722 = vmul.f32 1.0, %v721
        %v723 = vrcp.pop %v660
        %v724 = vmul.f32 1.0, %v723
        %v725 = vadd.f32 %v293, %v463
        %v726 = vadd.f32 %v294, %v465
        %v727 = vadd.f32 %v295, %v463
        %v728 = vadd.f32 %v296, %v465
        %v729 = vadd.f32 %v297, %v463
        %v730 = vadd.f32 %v298, %v465
        %v731 = vadd.f32 %v299, %v463
        %v732 = vadd.f32 %v300, %v465
        %v733 = vadd.f32 %v301, %v467
        %v734 = vadd.f32 %v302, %v469
        %v735 = vadd.f32 %v303, %v467
        %v736 = vadd.f32 %v304, %v469
        %v737 = vadd.f32 %v305, %v467
        %v738 = vadd.f32 %v306, %v469
        %v739 = vadd.f32 %v307, %v467
        %v740 = vadd.f32 %v308, %v469
        %v741 = vadd.f32 %v309, %v473
        %v742 = vadd.f32 %v310, %v475
        %v743 = vadd.f32 %v311, %v473
        %v744 = vadd.f32 %v312, %v475
        %v745 = vadd.f32 %v313, %v473
        %v746 = vadd.f32 %v314, %v475
        %v747 = vadd.f32 %v315, %v473
        %v748 = vadd.f32 %v316, %v475
        %v749 = vadd.f32 %v317, %v477
        %v750 = vadd.f32 %v318, %v479
        %v751 = vadd.f32 %v319, %v477
        %v752 = vadd.f32 %v320, %v479
        %v753 = vadd.f32 %v321, %v477
        %v754 = vadd.f32 %v322, %v479
        %v755 = vadd.f32 %v323, %v477
        %v756 = vadd.f32 %v324, %v479
        %v757 = vxor.u32 %v725, 2147483648
        %v758 = vxor.u32 %v726, 2147483648
        %v759 = vxor.u32 %v727, 2147483648
        %v760 = vxor.u32 %v728, 2147483648
        %v761 = vxor.u32 %v729, 2147483648
        %v762 = vxor.u32 %v730, 2147483648
        %v763 = vxor.u32 %v731, 2147483648
        %v764 = vxor.u32 %v732, 2147483648
        %v765 = vxor.u32 %v733, 2147483648
        %v766 = vxor.u32 %v734, 2147483648
        %v767 = vxor.u32 %v735, 2147483648
        %v768 = vxor.u32 %v736, 2147483648
        %v769 = vxor.u32 %v737, 2147483648
        %v770 = vxor.u32 %v738, 2147483648
        %v771 = vxor.u32 %v739, 2147483648
        %v772 = vxor.u32 %v740, 2147483648
        %v773 = vxor.u32 %v741, 2147483648
        %v774 = vxor.u32 %v742, 2147483648
        %v775 = vxor.u32 %v743, 2147483648
        %v776 = vxor.u32 %v744, 2147483648
        %v777 = vxor.u32 %v745, 2147483648
        %v778 = vxor.u32 %v746, 2147483648
        %v779 = vxor.u32 %v747, 2147483648
        %v780 = vxor.u32 %v748, 2147483648
        %v781 = vxor.u32 %v749, 2147483648
        %v782 = vxor.u32 %v750, 2147483648
        %v783 = vxor.u32 %v751, 2147483648
        %v784 = vxor.u32 %v752, 2147483648
        %v785 = vxor.u32 %v753, 2147483648
        %v786 = vxor.u32 %v754, 2147483648
        %v787 = vxor.u32 %v755, 2147483648
        %v788 = vxor.u32 %v756, 2147483648
        %v789 = vmul.f32 %v757, 1.442695
        %v790 = vpow.pop %v789
        %v791 = vmul.f32 %v758, 1.442695
        %v792 = vpow.pop %v791
        %v793 = vmul.f32 %v759, 1.442695
        %v794 = vpow.pop %v793
        %v795 = vmul.f32 %v760, 1.442695
        %v796 = vpow.pop %v795
        %v797 = vmul.f32 %v761, 1.442695
        %v798 = vpow.pop %v797
        %v799 = vmul.f32 %v762, 1.442695
        %v800 = vpow.pop %v799
        %v801 = vmul.f32 %v763, 1.442695
        %v802 = vpow.pop %v801
        %v803 = vmul.f32 %v764, 1.442695
        %v804 = vpow.pop %v803
        %v805 = vmul.f32 %v765, 1.442695
        %v806 = vpow.pop %v805
        %v807 = vmul.f32 %v766, 1.442695
        %v808 = vpow.pop %v807
        %v809 = vmul.f32 %v767, 1.442695
        %v810 = vpow.pop %v809
        %v811 = vmul.f32 %v768, 1.442695
        %v812 = vpow.pop %v811
        %v813 = vmul.f32 %v769, 1.442695
        %v814 = vpow.pop %v813
        %v815 = vmul.f32 %v770, 1.442695
        %v816 = vpow.pop %v815
        %v817 = vmul.f32 %v771, 1.442695
        %v818 = vpow.pop %v817
        %v819 = vmul.f32 %v772, 1.442695
        %v820 = vpow.pop %v819
        %v821 = vmul.f32 %v773, 1.442695
        %v822 = vpow.pop %v821
        %v823 = vmul.f32 %v774, 1.442695
        %v824 = vpow.pop %v823
        %v825 = vmul.f32 %v775, 1.442695
        %v826 = vpow.pop %v825
        %v827 = vmul.f32 %v776, 1.442695
        %v828 = vpow.pop %v827
        %v829 = vmul.f32 %v777, 1.442695
        %v830 = vpow.pop %v829
        %v831 = vmul.f32 %v778, 1.442695
        %v832 = vpow.pop %v831
        %v833 = vmul.f32 %v779, 1.442695
        %v834 = vpow.pop %v833
        %v835 = vmul.f32 %v780, 1.442695
        %v836 = vpow.pop %v835
        %v837 = vmul.f32 %v781, 1.442695
        %v838 = vpow.pop %v837
        %v839 = vmul.f32 %v782, 1.442695
        %v840 = vpow.pop %v839
        %v841 = vmul.f32 %v783, 1.442695
        %v842 = vpow.pop %v841
        %v843 = vmul.f32 %v784, 1.442695
        %v844 = vpow.pop %v843
        %v845 = vmul.f32 %v785, 1.442695
        %v846 = vpow.pop %v845
        %v847 = vmul.f32 %v786, 1.442695
        %v848 = vpow.pop %v847
        %v849 = vmul.f32 %v787, 1.442695
        %v850 = vpow.pop %v849
        %v851 = vmul.f32 %v788, 1.442695
        %v852 = vpow.pop %v851
        %v853 = vadd.f32 %v790, 1.0
        %v854 = vadd.f32 %v792, 1.0
        %v855 = vadd.f32 %v794, 1.0
        %v856 = vadd.f32 %v796, 1.0
        %v857 = vadd.f32 %v798, 1.0
        %v858 = vadd.f32 %v800, 1.0
        %v859 = vadd.f32 %v802, 1.0
        %v860 = vadd.f32 %v804, 1.0
        %v861 = vadd.f32 %v806, 1.0
        %v862 = vadd.f32 %v808, 1.0
        %v863 = vadd.f32 %v810, 1.0
        %v864 = vadd.f32 %v812, 1.0
        %v865 = vadd.f32 %v814, 1.0
        %v866 = vadd.f32 %v816, 1.0
        %v867 = vadd.f32 %v818, 1.0
        %v868 = vadd.f32 %v820, 1.0
        %v869 = vadd.f32 %v822, 1.0
        %v870 = vadd.f32 %v824, 1.0
        %v871 = vadd.f32 %v826, 1.0
        %v872 = vadd.f32 %v828, 1.0
        %v873 = vadd.f32 %v830, 1.0
        %v874 = vadd.f32 %v832, 1.0
        %v875 = vadd.f32 %v834, 1.0
        %v876 = vadd.f32 %v836, 1.0
        %v877 = vadd.f32 %v838, 1.0
        %v878 = vadd.f32 %v840, 1.0
        %v879 = vadd.f32 %v842, 1.0
        %v880 = vadd.f32 %v844, 1.0
        %v881 = vadd.f32 %v846, 1.0
        %v882 = vadd.f32 %v848, 1.0
        %v883 = vadd.f32 %v850, 1.0
        %v884 = vadd.f32 %v852, 1.0
        %v885 = vrcp.pop %v853
        %v886 = vmul.f32 1.0, %v885
        %v887 = vrcp.pop %v854
        %v888 = vmul.f32 1.0, %v887
        %v889 = vrcp.pop %v855
        %v890 = vmul.f32 1.0, %v889
        %v891 = vrcp.pop %v856
        %v892 = vmul.f32 1.0, %v891
        %v893 = vrcp.pop %v857
        %v894 = vmul.f32 1.0, %v893
        %v895 = vrcp.pop %v858
        %v896 = vmul.f32 1.0, %v895
        %v897 = vrcp.pop %v859
        %v898 = vmul.f32 1.0, %v897
        %v899 = vrcp.pop %v860
        %v900 = vmul.f32 1.0, %v899
        %v901 = vrcp.pop %v861
        %v902 = vmul.f32 1.0, %v901
        %v903 = vrcp.pop %v862
        %v904 = vmul.f32 1.0, %v903
        %v905 = vrcp.pop %v863
        %v906 = vmul.f32 1.0, %v905
        %v907 = vrcp.pop %v864
        %v908 = vmul.f32 1.0, %v907
        %v909 = vrcp.pop %v865
        %v910 = vmul.f32 1.0, %v909
        %v911 = vrcp.pop %v866
        %v912 = vmul.f32 1.0, %v911
        %v913 = vrcp.pop %v867
        %v914 = vmul.f32 1.0, %v913
        %v915 = vrcp.pop %v868
        %v916 = vmul.f32 1.0, %v915
        %v917 = vrcp.pop %v869
        %v918 = vmul.f32 1.0, %v917
        %v919 = vrcp.pop %v870
        %v920 = vmul.f32 1.0, %v919
        %v921 = vrcp.pop %v871
        %v922 = vmul.f32 1.0, %v921
        %v923 = vrcp.pop %v872
        %v924 = vmul.f32 1.0, %v923
        %v925 = vrcp.pop %v873
        %v926 = vmul.f32 1.0, %v925
        %v927 = vrcp.pop %v874
        %v928 = vmul.f32 1.0, %v927
        %v929 = vrcp.pop %v875
        %v930 = vmul.f32 1.0, %v929
        %v931 = vrcp.pop %v876
        %v932 = vmul.f32 1.0, %v931
        %v933 = vrcp.pop %v877
        %v934 = vmul.f32 1.0, %v933
        %v935 = vrcp.pop %v878
        %v936 = vmul.f32 1.0, %v935
        %v937 = vrcp.pop %v879
        %v938 = vmul.f32 1.0, %v937
        %v939 = vrcp.pop %v880
        %v940 = vmul.f32 1.0, %v939
        %v941 = vrcp.pop %v881
        %v942 = vmul.f32 1.0, %v941
        %v943 = vrcp.pop %v882
        %v944 = vmul.f32 1.0, %v943
        %v945 = vrcp.pop %v883
        %v946 = vmul.f32 1.0, %v945
        %v947 = vrcp.pop %v884
        %v948 = vmul.f32 1.0, %v947
        %950 = vset.pattern.permute.xlu0 0
        %951 = vperm.xlu0 %950, %v252
        %v952 = vpop.permute.xlu0 %951
        %955 = vset.pattern.permute.xlu0 0
        %956 = vperm.xlu0 %955, %v253
        %v957 = vpop.permute.xlu0 %956
        %960 = vset.pattern.permute.xlu0 0
        %961 = vperm.xlu0 %960, %v254
        %v962 = vpop.permute.xlu0 %961
        %965 = vset.pattern.permute.xlu0 0
        %966 = vperm.xlu0 %965, %v255
        %v967 = vpop.permute.xlu0 %966
        %v969 = vadd.f32 %v483, %v952
        %v970 = vadd.f32 %v485, %v952
        %v971 = vadd.f32 %v487, %v957
        %v972 = vadd.f32 %v489, %v957
        %v973 = vadd.f32 %v493, %v962
        %v974 = vadd.f32 %v495, %v962
        %v975 = vadd.f32 %v497, %v967
        %v976 = vadd.f32 %v499, %v967
        %v977 = vmul.f32 %v662, %v969
        %v978 = vmul.f32 %v664, %v970
        %v979 = vmul.f32 %v666, %v969
        %v980 = vmul.f32 %v668, %v970
        %v981 = vmul.f32 %v670, %v969
        %v982 = vmul.f32 %v672, %v970
        %v983 = vmul.f32 %v674, %v969
        %v984 = vmul.f32 %v676, %v970
        %v985 = vmul.f32 %v678, %v971
        %v986 = vmul.f32 %v680, %v972
        %v987 = vmul.f32 %v682, %v971
        %v988 = vmul.f32 %v684, %v972
        %v989 = vmul.f32 %v686, %v971
        %v990 = vmul.f32 %v688, %v972
        %v991 = vmul.f32 %v690, %v971
        %v992 = vmul.f32 %v692, %v972
        %v993 = vmul.f32 %v694, %v973
        %v994 = vmul.f32 %v696, %v974
        %v995 = vmul.f32 %v698, %v973
        %v996 = vmul.f32 %v700, %v974
        %v997 = vmul.f32 %v702, %v973
        %v998 = vmul.f32 %v704, %v974
        %v999 = vmul.f32 %v706, %v973
        %v1000 = vmul.f32 %v708, %v974
        %v1001 = vmul.f32 %v710, %v975
        %v1002 = vmul.f32 %v712, %v976
        %v1003 = vmul.f32 %v714, %v975
        %v1004 = vmul.f32 %v716, %v976
        %v1005 = vmul.f32 %v718, %v975
        %v1006 = vmul.f32 %v720, %v976
        %v1007 = vmul.f32 %v722, %v975
        %v1008 = vmul.f32 %v724, %v976
        %v1009 = vadd.f32 %v325, %v977
        %v1010 = vadd.f32 %v326, %v978
        %v1011 = vadd.f32 %v327, %v979
        %v1012 = vadd.f32 %v328, %v980
        %v1013 = vadd.f32 %v329, %v981
        %v1014 = vadd.f32 %v330, %v982
        %v1015 = vadd.f32 %v331, %v983
        %v1016 = vadd.f32 %v332, %v984
        %v1017 = vadd.f32 %v333, %v985
        %v1018 = vadd.f32 %v334, %v986
        %v1019 = vadd.f32 %v335, %v987
        %v1020 = vadd.f32 %v336, %v988
        %v1021 = vadd.f32 %v337, %v989
        %v1022 = vadd.f32 %v338, %v990
        %v1023 = vadd.f32 %v339, %v991
        %v1024 = vadd.f32 %v340, %v992
        %v1025 = vadd.f32 %v341, %v993
        %v1026 = vadd.f32 %v342, %v994
        %v1027 = vadd.f32 %v343, %v995
        %v1028 = vadd.f32 %v344, %v996
        %v1029 = vadd.f32 %v345, %v997
        %v1030 = vadd.f32 %v346, %v998
        %v1031 = vadd.f32 %v347, %v999
        %v1032 = vadd.f32 %v348, %v1000
        %v1033 = vadd.f32 %v349, %v1001
        %v1034 = vadd.f32 %v350, %v1002
        %v1035 = vadd.f32 %v351, %v1003
        %v1036 = vadd.f32 %v352, %v1004
        %v1037 = vadd.f32 %v353, %v1005
        %v1038 = vadd.f32 %v354, %v1006
        %v1039 = vadd.f32 %v355, %v1007
        %v1040 = vadd.f32 %v356, %v1008
        %v1041 = vtanh.pop %v1009
        %v1042 = vtanh.pop %v1010
        %v1043 = vtanh.pop %v1011
        %v1044 = vtanh.pop %v1012
        %v1045 = vtanh.pop %v1013
        %v1046 = vtanh.pop %v1014
        %v1047 = vtanh.pop %v1015
        %v1048 = vtanh.pop %v1016
        %v1049 = vtanh.pop %v1017
        %v1050 = vtanh.pop %v1018
        %v1051 = vtanh.pop %v1019
        %v1052 = vtanh.pop %v1020
        %v1053 = vtanh.pop %v1021
        %v1054 = vtanh.pop %v1022
        %v1055 = vtanh.pop %v1023
        %v1056 = vtanh.pop %v1024
        %v1057 = vtanh.pop %v1025
        %v1058 = vtanh.pop %v1026
        %v1059 = vtanh.pop %v1027
        %v1060 = vtanh.pop %v1028
        %v1061 = vtanh.pop %v1029
        %v1062 = vtanh.pop %v1030
        %v1063 = vtanh.pop %v1031
        %v1064 = vtanh.pop %v1032
        %v1065 = vtanh.pop %v1033
        %v1066 = vtanh.pop %v1034
        %v1067 = vtanh.pop %v1035
        %v1068 = vtanh.pop %v1036
        %v1069 = vtanh.pop %v1037
        %v1070 = vtanh.pop %v1038
        %v1071 = vtanh.pop %v1039
        %v1072 = vtanh.pop %v1040
        %v1073 = vsub.f32 1.0, %v886
        %v1074 = vsub.f32 1.0, %v888
        %v1075 = vsub.f32 1.0, %v890
        %v1076 = vsub.f32 1.0, %v892
        %v1077 = vsub.f32 1.0, %v894
        %v1078 = vsub.f32 1.0, %v896
        %v1079 = vsub.f32 1.0, %v898
        %v1080 = vsub.f32 1.0, %v900
        %v1081 = vsub.f32 1.0, %v902
        %v1082 = vsub.f32 1.0, %v904
        %v1083 = vsub.f32 1.0, %v906
        %v1084 = vsub.f32 1.0, %v908
        %v1085 = vsub.f32 1.0, %v910
        %v1086 = vsub.f32 1.0, %v912
        %v1087 = vsub.f32 1.0, %v914
        %v1088 = vsub.f32 1.0, %v916
        %v1089 = vsub.f32 1.0, %v918
        %v1090 = vsub.f32 1.0, %v920
        %v1091 = vsub.f32 1.0, %v922
        %v1092 = vsub.f32 1.0, %v924
        %v1093 = vsub.f32 1.0, %v926
        %v1094 = vsub.f32 1.0, %v928
        %v1095 = vsub.f32 1.0, %v930
        %v1096 = vsub.f32 1.0, %v932
        %v1097 = vsub.f32 1.0, %v934
        %v1098 = vsub.f32 1.0, %v936
        %v1099 = vsub.f32 1.0, %v938
        %v1100 = vsub.f32 1.0, %v940
        %v1101 = vsub.f32 1.0, %v942
        %v1102 = vsub.f32 1.0, %v944
        %v1103 = vsub.f32 1.0, %v946
        %v1104 = vsub.f32 1.0, %v948
        %v1105 = vmul.f32 %v1073, %v1041
        %v1106 = vmul.f32 %v1074, %v1042
        %v1107 = vmul.f32 %v1075, %v1043
        %v1108 = vmul.f32 %v1076, %v1044
        %v1109 = vmul.f32 %v1077, %v1045
        %v1110 = vmul.f32 %v1078, %v1046
        %v1111 = vmul.f32 %v1079, %v1047
        %v1112 = vmul.f32 %v1080, %v1048
        %v1113 = vmul.f32 %v1081, %v1049
        %v1114 = vmul.f32 %v1082, %v1050
        %v1115 = vmul.f32 %v1083, %v1051
        %v1116 = vmul.f32 %v1084, %v1052
        %v1117 = vmul.f32 %v1085, %v1053
        %v1118 = vmul.f32 %v1086, %v1054
        %v1119 = vmul.f32 %v1087, %v1055
        %v1120 = vmul.f32 %v1088, %v1056
        %v1121 = vmul.f32 %v1089, %v1057
        %v1122 = vmul.f32 %v1090, %v1058
        %v1123 = vmul.f32 %v1091, %v1059
        %v1124 = vmul.f32 %v1092, %v1060
        %v1125 = vmul.f32 %v1093, %v1061
        %v1126 = vmul.f32 %v1094, %v1062
        %v1127 = vmul.f32 %v1095, %v1063
        %v1128 = vmul.f32 %v1096, %v1064
        %v1129 = vmul.f32 %v1097, %v1065
        %v1130 = vmul.f32 %v1098, %v1066
        %v1131 = vmul.f32 %v1099, %v1067
        %v1132 = vmul.f32 %v1100, %v1068
        %v1133 = vmul.f32 %v1101, %v1069
        %v1134 = vmul.f32 %v1102, %v1070
        %v1135 = vmul.f32 %v1103, %v1071
        %v1136 = vmul.f32 %v1104, %v1072
        %v1137 = vmul.f32 %v886, %v257
        %v1138 = vmul.f32 %v888, %v257
        %v1139 = vmul.f32 %v890, %v257
        %v1140 = vmul.f32 %v892, %v257
        %v1141 = vmul.f32 %v894, %v257
        %v1142 = vmul.f32 %v896, %v257
        %v1143 = vmul.f32 %v898, %v257
        %v1144 = vmul.f32 %v900, %v257
        %v1145 = vmul.f32 %v902, %v258
        %v1146 = vmul.f32 %v904, %v258
        %v1147 = vmul.f32 %v906, %v258
        %v1148 = vmul.f32 %v908, %v258
        %v1149 = vmul.f32 %v910, %v258
        %v1150 = vmul.f32 %v912, %v258
        %v1151 = vmul.f32 %v914, %v258
        %v1152 = vmul.f32 %v916, %v258
        %v1153 = vmul.f32 %v918, %v259
        %v1154 = vmul.f32 %v920, %v259
        %v1155 = vmul.f32 %v922, %v259
        %v1156 = vmul.f32 %v924, %v259
        %v1157 = vmul.f32 %v926, %v259
        %v1158 = vmul.f32 %v928, %v259
        %v1159 = vmul.f32 %v930, %v259
        %v1160 = vmul.f32 %v932, %v259
        %v1161 = vmul.f32 %v934, %v260
        %v1162 = vmul.f32 %v936, %v260
        %v1163 = vmul.f32 %v938, %v260
        %v1164 = vmul.f32 %v940, %v260
        %v1165 = vmul.f32 %v942, %v260
        %v1166 = vmul.f32 %v944, %v260
        %v1167 = vmul.f32 %v946, %v260
        %v1168 = vmul.f32 %v948, %v260
        %v1169 = vadd.f32 %v1105, %v1137
        %v1170 = vadd.f32 %v1106, %v1138
        %v1171 = vadd.f32 %v1107, %v1139
        %v1172 = vadd.f32 %v1108, %v1140
        %v1173 = vadd.f32 %v1109, %v1141
        %v1174 = vadd.f32 %v1110, %v1142
        %v1175 = vadd.f32 %v1111, %v1143
        %v1176 = vadd.f32 %v1112, %v1144
        %v1177 = vadd.f32 %v1113, %v1145
        %v1178 = vadd.f32 %v1114, %v1146
        %v1179 = vadd.f32 %v1115, %v1147
        %v1180 = vadd.f32 %v1116, %v1148
        %v1181 = vadd.f32 %v1117, %v1149
        %v1182 = vadd.f32 %v1118, %v1150
        %v1183 = vadd.f32 %v1119, %v1151
        %v1184 = vadd.f32 %v1120, %v1152
        %v1185 = vadd.f32 %v1121, %v1153
        %v1186 = vadd.f32 %v1122, %v1154
        %v1187 = vadd.f32 %v1123, %v1155
        %v1188 = vadd.f32 %v1124, %v1156
        %v1189 = vadd.f32 %v1125, %v1157
        %v1190 = vadd.f32 %v1126, %v1158
        %v1191 = vadd.f32 %v1127, %v1159
        %v1192 = vadd.f32 %v1128, %v1160
        %v1193 = vadd.f32 %v1129, %v1161
        %v1194 = vadd.f32 %v1130, %v1162
        %v1195 = vadd.f32 %v1131, %v1163
        %v1196 = vadd.f32 %v1132, %v1164
        %v1197 = vadd.f32 %v1133, %v1165
        %v1198 = vadd.f32 %v1134, %v1166
        %v1199 = vadd.f32 %v1135, %v1167
        %v1200 = vadd.f32 %v1136, %v1168
        %s1201 = scalar_lea.vmem [#allocation2], 768
        %v1202 = vld [vmem:[%s1201] sm:$0xff]
        %v1203 = vld [vmem:[%s1201 + $0x8] sm:$0xff]
        %v1204 = vld [vmem:[%s1201 + $0x10] sm:$0xff]
        %v1205 = vld [vmem:[%s1201 + $0x18] sm:$0xff]
        %v1206 = vld [vmem:[%s1201 + $0x20] sm:$0xff]
        %v1207 = vld [vmem:[%s1201 + $0x28] sm:$0xff]
        %v1208 = vld [vmem:[%s1201 + $0x30] sm:$0xff]
        %v1209 = vld [vmem:[%s1201 + $0x38] sm:$0xff]
        %v1210 = vld [vmem:[%s1201 + $0x40] sm:$0xff]
        %v1211 = vld [vmem:[%s1201 + $0x48] sm:$0xff]
        %v1212 = vld [vmem:[%s1201 + $0x50] sm:$0xff]
        %v1213 = vld [vmem:[%s1201 + $0x58] sm:$0xff]
        %v1214 = vld [vmem:[%s1201 + $0x60] sm:$0xff]
        %v1215 = vld [vmem:[%s1201 + $0x68] sm:$0xff]
        %v1216 = vld [vmem:[%s1201 + $0x70] sm:$0xff]
        %v1217 = vld [vmem:[%s1201 + $0x78] sm:$0xff]
        %v1218 = vld [vmem:[%s1201 + $0x80] sm:$0xff]
        %v1219 = vld [vmem:[%s1201 + $0x88] sm:$0xff]
        %v1220 = vld [vmem:[%s1201 + $0x90] sm:$0xff]
        %v1221 = vld [vmem:[%s1201 + $0x98] sm:$0xff]
        %v1222 = vld [vmem:[%s1201 + $0xa0] sm:$0xff]
        %v1223 = vld [vmem:[%s1201 + $0xa8] sm:$0xff]
        %v1224 = vld [vmem:[%s1201 + $0xb0] sm:$0xff]
        %v1225 = vld [vmem:[%s1201 + $0xb8] sm:$0xff]
        %v1226 = vld [vmem:[%s1201 + $0xc0] sm:$0xff]
        %v1227 = vld [vmem:[%s1201 + $0xc8] sm:$0xff]
        %v1228 = vld [vmem:[%s1201 + $0xd0] sm:$0xff]
        %v1229 = vld [vmem:[%s1201 + $0xd8] sm:$0xff]
        %v1230 = vld [vmem:[%s1201 + $0xe0] sm:$0xff]
        %v1231 = vld [vmem:[%s1201 + $0xe8] sm:$0xff]
        %v1232 = vld [vmem:[%s1201 + $0xf0] sm:$0xff]
        %v1233 = vld [vmem:[%s1201 + $0xf8] sm:$0xff]
        %v1234 = vld [vmem:[%s1201 + $0x100] sm:$0xff]
        %v1235 = vld [vmem:[%s1201 + $0x108] sm:$0xff]
        %v1236 = vld [vmem:[%s1201 + $0x110] sm:$0xff]
        %v1237 = vld [vmem:[%s1201 + $0x118] sm:$0xff]
        %v1238 = vld [vmem:[%s1201 + $0x120] sm:$0xff]
        %v1239 = vld [vmem:[%s1201 + $0x128] sm:$0xff]
        %v1240 = vld [vmem:[%s1201 + $0x130] sm:$0xff]
        %v1241 = vld [vmem:[%s1201 + $0x138] sm:$0xff]
        %v1242 = vld [vmem:[%s1201 + $0x140] sm:$0xff]
        %v1243 = vld [vmem:[%s1201 + $0x148] sm:$0xff]
        %v1244 = vld [vmem:[%s1201 + $0x150] sm:$0xff]
        %v1245 = vld [vmem:[%s1201 + $0x158] sm:$0xff]
        %v1246 = vld [vmem:[%s1201 + $0x160] sm:$0xff]
        %v1247 = vld [vmem:[%s1201 + $0x168] sm:$0xff]
        %v1248 = vld [vmem:[%s1201 + $0x170] sm:$0xff]
        %v1249 = vld [vmem:[%s1201 + $0x178] sm:$0xff]
        %v1250 = vld [vmem:[%s1201 + $0x180] sm:$0xff]
        %v1251 = vld [vmem:[%s1201 + $0x188] sm:$0xff]
        %v1252 = vld [vmem:[%s1201 + $0x190] sm:$0xff]
        %v1253 = vld [vmem:[%s1201 + $0x198] sm:$0xff]
        %v1254 = vld [vmem:[%s1201 + $0x1a0] sm:$0xff]
        %v1255 = vld [vmem:[%s1201 + $0x1a8] sm:$0xff]
        %v1256 = vld [vmem:[%s1201 + $0x1b0] sm:$0xff]
        %v1257 = vld [vmem:[%s1201 + $0x1b8] sm:$0xff]
        %v1258 = vld [vmem:[%s1201 + $0x1c0] sm:$0xff]
        %v1259 = vld [vmem:[%s1201 + $0x1c8] sm:$0xff]
        %v1260 = vld [vmem:[%s1201 + $0x1d0] sm:$0xff]
        %v1261 = vld [vmem:[%s1201 + $0x1d8] sm:$0xff]
        %v1262 = vld [vmem:[%s1201 + $0x1e0] sm:$0xff]
        %v1263 = vld [vmem:[%s1201 + $0x1e8] sm:$0xff]
        %v1264 = vld [vmem:[%s1201 + $0x1f0] sm:$0xff]
        %v1265 = vld [vmem:[%s1201 + $0x1f8] sm:$0xff]
        %v1266 = vld [vmem:[%s1201 + $0x200] sm:$0xff]
        %v1267 = vld [vmem:[%s1201 + $0x208] sm:$0xff]
        %v1268 = vld [vmem:[%s1201 + $0x210] sm:$0xff]
        %v1269 = vld [vmem:[%s1201 + $0x218] sm:$0xff]
        %v1270 = vld [vmem:[%s1201 + $0x220] sm:$0xff]
        %v1271 = vld [vmem:[%s1201 + $0x228] sm:$0xff]
        %v1272 = vld [vmem:[%s1201 + $0x230] sm:$0xff]
        %v1273 = vld [vmem:[%s1201 + $0x238] sm:$0xff]
        %v1274 = vld [vmem:[%s1201 + $0x240] sm:$0xff]
        %v1275 = vld [vmem:[%s1201 + $0x248] sm:$0xff]
        %v1276 = vld [vmem:[%s1201 + $0x250] sm:$0xff]
        %v1277 = vld [vmem:[%s1201 + $0x258] sm:$0xff]
        %v1278 = vld [vmem:[%s1201 + $0x260] sm:$0xff]
        %v1279 = vld [vmem:[%s1201 + $0x268] sm:$0xff]
        %v1280 = vld [vmem:[%s1201 + $0x270] sm:$0xff]
        %v1281 = vld [vmem:[%s1201 + $0x278] sm:$0xff]
        %v1282 = vld [vmem:[%s1201 + $0x280] sm:$0xff]
        %v1283 = vld [vmem:[%s1201 + $0x288] sm:$0xff]
        %v1284 = vld [vmem:[%s1201 + $0x290] sm:$0xff]
        %v1285 = vld [vmem:[%s1201 + $0x298] sm:$0xff]
        %v1286 = vld [vmem:[%s1201 + $0x2a0] sm:$0xff]
        %v1287 = vld [vmem:[%s1201 + $0x2a8] sm:$0xff]
        %v1288 = vld [vmem:[%s1201 + $0x2b0] sm:$0xff]
        %v1289 = vld [vmem:[%s1201 + $0x2b8] sm:$0xff]
        %v1290 = vld [vmem:[%s1201 + $0x2c0] sm:$0xff]
        %v1291 = vld [vmem:[%s1201 + $0x2c8] sm:$0xff]
        %v1292 = vld [vmem:[%s1201 + $0x2d0] sm:$0xff]
        %v1293 = vld [vmem:[%s1201 + $0x2d8] sm:$0xff]
        %v1294 = vld [vmem:[%s1201 + $0x2e0] sm:$0xff]
        %v1295 = vld [vmem:[%s1201 + $0x2e8] sm:$0xff]
        %v1296 = vld [vmem:[%s1201 + $0x2f0] sm:$0xff]
        %v1297 = vld [vmem:[%s1201 + $0x2f8] sm:$0xff]
        %v1298 = vpack.c.bf16 %v1177, %v1169
        %v1299 = vpack.c.bf16 %v1178, %v1170
        %v1300 = vpack.c.bf16 %v1179, %v1171
        %v1301 = vpack.c.bf16 %v1180, %v1172
        %v1302 = vpack.c.bf16 %v1181, %v1173
        %v1303 = vpack.c.bf16 %v1182, %v1174
        %v1304 = vpack.c.bf16 %v1183, %v1175
        %v1305 = vpack.c.bf16 %v1184, %v1176
        %v1306 = vpack.c.bf16 %v1193, %v1185
        %v1307 = vpack.c.bf16 %v1194, %v1186
        %v1308 = vpack.c.bf16 %v1195, %v1187
        %v1309 = vpack.c.bf16 %v1196, %v1188
        %v1310 = vpack.c.bf16 %v1197, %v1189
        %v1311 = vpack.c.bf16 %v1198, %v1190
        %v1312 = vpack.c.bf16 %v1199, %v1191
        %v1313 = vpack.c.bf16 %v1200, %v1192
        %1314 = vmatprep.subr.bf16.mxu0 %v1299
        %1315 = vmatpush1.bf16.msra.mxu0 %v1298
        %1316 = vmatprep.subr.bf16.mxu0 %v1307
        %1317 = vmatpush1.bf16.msra.mxu0 %v1306
        %1318 = vmatprep.subr.bf16.mxu0 0
        %1319 = vmatpush1.bf16.msra.mxu0 0
        %1320 = vmatprep.subr.bf16.mxu0 0
        %1321 = vmatpush1.bf16.msra.mxu0 0
        %1322 = vmatprep.subr.bf16.mxu0 0
        %1323 = vmatpush1.bf16.msra.mxu0 0
        %1324 = vmatprep.subr.bf16.mxu0 0
        %1325 = vmatpush1.bf16.msra.mxu0 0
        %1326 = vmatprep.subr.bf16.mxu0 0
        %1327 = vmatpush1.bf16.msra.mxu0 0
        %1328 = vmatprep.subr.bf16.mxu0 0
        %1329 = vmatpush1.bf16.msra.mxu0 0
        %1330 = vmatprep.subr.bf16.mxu0 0
        %1331 = vmatpush1.bf16.msra.mxu0 0
        %1332 = vmatprep.subr.bf16.mxu0 0
        %1333 = vmatpush1.bf16.msra.mxu0 0
        %1334 = vmatprep.subr.bf16.mxu0 0
        %1335 = vmatpush1.bf16.msra.mxu0 0
        %1336 = vmatprep.subr.bf16.mxu0 0
        %1337 = vmatpush1.bf16.msra.mxu0 0
        %1338 = vmatprep.subr.bf16.mxu0 0
        %1339 = vmatpush1.bf16.msra.mxu0 0
        %1340 = vmatprep.subr.bf16.mxu0 0
        %1341 = vmatpush1.bf16.msra.mxu0 0
        %1342 = vmatprep.subr.bf16.mxu0 0
        %1343 = vmatpush1.bf16.msra.mxu0 0
        %1344 = vmatprep.subr.bf16.mxu0 0
        %1345 = vmatpush1.bf16.msra.mxu0 0
        %1346 = vmatprep.mubr.bf16.mxu0 0
        %1347 = vmatmul.mubr.bf16.gmra.mrb[0].mxu0 %v391
        %v1348 = vpop.f32.mrb[0].mxu0
        %v1349 = vadd.f32 0.0, %v1348
        %v1350 = vpop.f32.mrb[0].mxu0
        %v1351 = vadd.f32 0.0, %v1350
        %v1352 = vpop.f32.mrb[0].mxu0
        %v1353 = vadd.f32 0.0, %v1352
        %v1354 = vpop.f32.mrb[0].mxu0
        %v1355 = vadd.f32 0.0, %v1354
        %1356 = vmatprep.mubr.bf16.mxu0 0
        %1357 = vmatmul.mubr.bf16.gmra.mrb[0].mxu0 %v394
        %v1358 = vpop.f32.mrb[0].mxu0
        %v1359 = vadd.f32 0.0, %v1358
        %v1360 = vpop.f32.mrb[0].mxu0
        %v1361 = vadd.f32 0.0, %v1360
        %v1362 = vpop.f32.mrb[0].mxu0
        %v1363 = vadd.f32 0.0, %v1362
        %v1364 = vpop.f32.mrb[0].mxu0
        %v1365 = vadd.f32 0.0, %v1364
        %1366 = vmatprep.mubr.bf16.mxu0 0
        %1367 = vmatmul.mubr.bf16.gmra.mrb[0].mxu0 %v397
        %v1368 = vpop.f32.mrb[0].mxu0
        %v1369 = vadd.f32 0.0, %v1368
        %v1370 = vpop.f32.mrb[0].mxu0
        %v1371 = vadd.f32 0.0, %v1370
        %v1372 = vpop.f32.mrb[0].mxu0
        %v1373 = vadd.f32 0.0, %v1372
        %v1374 = vpop.f32.mrb[0].mxu0
        %v1375 = vadd.f32 0.0, %v1374
        %1376 = vmatprep.mubr.bf16.mxu0 0
        %1377 = vmatmul.mubr.bf16.gmra.mrb[0].mxu0 %v400
        %v1378 = vpop.f32.mrb[0].mxu0
        %v1379 = vadd.f32 0.0, %v1378
        %v1380 = vpop.f32.mrb[0].mxu0
        %v1381 = vadd.f32 0.0, %v1380
        %v1382 = vpop.f32.mrb[0].mxu0
        %v1383 = vadd.f32 0.0, %v1382
        %v1384 = vpop.f32.mrb[0].mxu0
        %v1385 = vadd.f32 0.0, %v1384
        %1386 = vmatprep.mubr.bf16.mxu0 0
        %1387 = vmatmul.mubr.bf16.gmra.mrb[0].mxu0 %v403
        %v1388 = vpop.f32.mrb[0].mxu0
        %v1389 = vadd.f32 0.0, %v1388
        %v1390 = vpop.f32.mrb[0].mxu0
        %v1391 = vadd.f32 0.0, %v1390
        %v1392 = vpop.f32.mrb[0].mxu0
        %v1393 = vadd.f32 0.0, %v1392
        %v1394 = vpop.f32.mrb[0].mxu0
        %v1395 = vadd.f32 0.0, %v1394
        %1396 = vmatprep.mubr.bf16.mxu0 0
        %1397 = vmatmul.mubr.bf16.gmra.mrb[0].mxu0 %v406
        %v1398 = vpop.f32.mrb[0].mxu0
        %v1399 = vadd.f32 0.0, %v1398
        %v1400 = vpop.f32.mrb[0].mxu0
        %v1401 = vadd.f32 0.0, %v1400
        %v1402 = vpop.f32.mrb[0].mxu0
        %v1403 = vadd.f32 0.0, %v1402
        %v1404 = vpop.f32.mrb[0].mxu0
        %v1405 = vadd.f32 0.0, %v1404
        %1406 = vdwg.mxu0
        %1407 = vmatprep.subr.bf16.mxu0 %v1301
        %1408 = vmatpush1.bf16.msra.mxu0 %v1300
        %1409 = vmatprep.subr.bf16.mxu0 %v1309
        %1410 = vmatpush1.bf16.msra.mxu0 %v1308
        %1411 = vmatprep.subr.bf16.mxu0 0
        %1412 = vmatpush1.bf16.msra.mxu0 0
        %1413 = vmatprep.subr.bf16.mxu0 0
        %1414 = vmatpush1.bf16.msra.mxu0 0
        %1415 = vmatprep.subr.bf16.mxu0 0
        %1416 = vmatpush1.bf16.msra.mxu0 0
        %1417 = vmatprep.subr.bf16.mxu0 0
        %1418 = vmatpush1.bf16.msra.mxu0 0
        %1419 = vmatprep.subr.bf16.mxu0 0
        %1420 = vmatpush1.bf16.msra.mxu0 0
        %1421 = vmatprep.subr.bf16.mxu0 0
        %1422 = vmatpush1.bf16.msra.mxu0 0
        %1423 = vmatprep.subr.bf16.mxu0 0
        %1424 = vmatpush1.bf16.msra.mxu0 0
        %1425 = vmatprep.subr.bf16.mxu0 0
        %1426 = vmatpush1.bf16.msra.mxu0 0
        %1427 = vmatprep.subr.bf16.mxu0 0
        %1428 = vmatpush1.bf16.msra.mxu0 0
        %1429 = vmatprep.subr.bf16.mxu0 0
        %1430 = vmatpush1.bf16.msra.mxu0 0
        %1431 = vmatprep.subr.bf16.mxu0 0
        %1432 = vmatpush1.bf16.msra.mxu0 0
        %1433 = vmatprep.subr.bf16.mxu0 0
        %1434 = vmatpush1.bf16.msra.mxu0 0
        %1435 = vmatprep.subr.bf16.mxu0 0
        %1436 = vmatpush1.bf16.msra.mxu0 0
        %1437 = vmatprep.subr.bf16.mxu0 0
        %1438 = vmatpush1.bf16.msra.mxu0 0
        %1439 = vmatprep.mubr.bf16.mxu0 0
        %1440 = vmatmul.mubr.bf16.gmra.mrb[0].mxu0 %v391
        %v1441 = vpop.f32.mrb[0].mxu0
        %v1442 = vadd.f32 0.0, %v1441
        %v1443 = vpop.f32.mrb[0].mxu0
        %v1444 = vadd.f32 0.0, %v1443
        %v1445 = vpop.f32.mrb[0].mxu0
        %v1446 = vadd.f32 0.0, %v1445
        %v1447 = vpop.f32.mrb[0].mxu0
        %v1448 = vadd.f32 0.0, %v1447
        %1449 = vmatprep.mubr.bf16.mxu0 0
        %1450 = vmatmul.mubr.bf16.gmra.mrb[0].mxu0 %v394
        %v1451 = vpop.f32.mrb[0].mxu0
        %v1452 = vadd.f32 0.0, %v1451
        %v1453 = vpop.f32.mrb[0].mxu0
        %v1454 = vadd.f32 0.0, %v1453
        %v1455 = vpop.f32.mrb[0].mxu0
        %v1456 = vadd.f32 0.0, %v1455
        %v1457 = vpop.f32.mrb[0].mxu0
        %v1458 = vadd.f32 0.0, %v1457
        %1459 = vmatprep.mubr.bf16.mxu0 0
        %1460 = vmatmul.mubr.bf16.gmra.mrb[0].mxu0 %v397
        %v1461 = vpop.f32.mrb[0].mxu0
        %v1462 = vadd.f32 0.0, %v1461
        %v1463 = vpop.f32.mrb[0].mxu0
        %v1464 = vadd.f32 0.0, %v1463
        %v1465 = vpop.f32.mrb[0].mxu0
        %v1466 = vadd.f32 0.0, %v1465
        %v1467 = vpop.f32.mrb[0].mxu0
        %v1468 = vadd.f32 0.0, %v1467
        %1469 = vmatprep.mubr.bf16.mxu0 0
        %1470 = vmatmul.mubr.bf16.gmra.mrb[0].mxu0 %v400
        %v1471 = vpop.f32.mrb[0].mxu0
        %v1472 = vadd.f32 0.0, %v1471
        %v1473 = vpop.f32.mrb[0].mxu0
        %v1474 = vadd.f32 0.0, %v1473
        %v1475 = vpop.f32.mrb[0].mxu0
        %v1476 = vadd.f32 0.0, %v1475
        %v1477 = vpop.f32.mrb[0].mxu0
        %v1478 = vadd.f32 0.0, %v1477
        %1479 = vmatprep.mubr.bf16.mxu0 0
        %1480 = vmatmul.mubr.bf16.gmra.mrb[0].mxu0 %v403
        %v1481 = vpop.f32.mrb[0].mxu0
        %v1482 = vadd.f32 0.0, %v1481
        %v1483 = vpop.f32.mrb[0].mxu0
        %v1484 = vadd.f32 0.0, %v1483
        %v1485 = vpop.f32.mrb[0].mxu0
        %v1486 = vadd.f32 0.0, %v1485
        %v1487 = vpop.f32.mrb[0].mxu0
        %v1488 = vadd.f32 0.0, %v1487
        %1489 = vmatprep.mubr.bf16.mxu0 0
        %1490 = vmatmul.mubr.bf16.gmra.mrb[0].mxu0 %v406
        %v1491 = vpop.f32.mrb[0].mxu0
        %v1492 = vadd.f32 0.0, %v1491
        %v1493 = vpop.f32.mrb[0].mxu0
        %v1494 = vadd.f32 0.0, %v1493
        %v1495 = vpop.f32.mrb[0].mxu0
        %v1496 = vadd.f32 0.0, %v1495
        %v1497 = vpop.f32.mrb[0].mxu0
        %v1498 = vadd.f32 0.0, %v1497
        %1499 = vdwg.mxu0
        %1500 = vmatprep.subr.bf16.mxu0 %v1303
        %1501 = vmatpush1.bf16.msra.mxu0 %v1302
        %1502 = vmatprep.subr.bf16.mxu0 %v1311
        %1503 = vmatpush1.bf16.msra.mxu0 %v1310
        %1504 = vmatprep.subr.bf16.mxu0 0
        %1505 = vmatpush1.bf16.msra.mxu0 0
        %1506 = vmatprep.subr.bf16.mxu0 0
        %1507 = vmatpush1.bf16.msra.mxu0 0
        %1508 = vmatprep.subr.bf16.mxu0 0
        %1509 = vmatpush1.bf16.msra.mxu0 0
        %1510 = vmatprep.subr.bf16.mxu0 0
        %1511 = vmatpush1.bf16.msra.mxu0 0
        %1512 = vmatprep.subr.bf16.mxu0 0
        %1513 = vmatpush1.bf16.msra.mxu0 0
        %1514 = vmatprep.subr.bf16.mxu0 0
        %1515 = vmatpush1.bf16.msra.mxu0 0
        %1516 = vmatprep.subr.bf16.mxu0 0
        %1517 = vmatpush1.bf16.msra.mxu0 0
        %1518 = vmatprep.subr.bf16.mxu0 0
        %1519 = vmatpush1.bf16.msra.mxu0 0
        %1520 = vmatprep.subr.bf16.mxu0 0
        %1521 = vmatpush1.bf16.msra.mxu0 0
        %1522 = vmatprep.subr.bf16.mxu0 0
        %1523 = vmatpush1.bf16.msra.mxu0 0
        %1524 = vmatprep.subr.bf16.mxu0 0
        %1525 = vmatpush1.bf16.msra.mxu0 0
        %1526 = vmatprep.subr.bf16.mxu0 0
        %1527 = vmatpush1.bf16.msra.mxu0 0
        %1528 = vmatprep.subr.bf16.mxu0 0
        %1529 = vmatpush1.bf16.msra.mxu0 0
        %1530 = vmatprep.subr.bf16.mxu0 0
        %1531 = vmatpush1.bf16.msra.mxu0 0
        %1532 = vmatprep.mubr.bf16.mxu0 0
        %1533 = vmatmul.mubr.bf16.gmra.mrb[0].mxu0 %v391
        %v1534 = vpop.f32.mrb[0].mxu0
        %v1535 = vadd.f32 0.0, %v1534
        %v1536 = vpop.f32.mrb[0].mxu0
        %v1537 = vadd.f32 0.0, %v1536
        %v1538 = vpop.f32.mrb[0].mxu0
        %v1539 = vadd.f32 0.0, %v1538
        %v1540 = vpop.f32.mrb[0].mxu0
        %v1541 = vadd.f32 0.0, %v1540
        %1542 = vmatprep.mubr.bf16.mxu0 0
        %1543 = vmatmul.mubr.bf16.gmra.mrb[0].mxu0 %v394
        %v1544 = vpop.f32.mrb[0].mxu0
        %v1545 = vadd.f32 0.0, %v1544
        %v1546 = vpop.f32.mrb[0].mxu0
        %v1547 = vadd.f32 0.0, %v1546
        %v1548 = vpop.f32.mrb[0].mxu0
        %v1549 = vadd.f32 0.0, %v1548
        %v1550 = vpop.f32.mrb[0].mxu0
        %v1551 = vadd.f32 0.0, %v1550
        %1552 = vmatprep.mubr.bf16.mxu0 0
        %1553 = vmatmul.mubr.bf16.gmra.mrb[0].mxu0 %v397
        %v1554 = vpop.f32.mrb[0].mxu0
        %v1555 = vadd.f32 0.0, %v1554
        %v1556 = vpop.f32.mrb[0].mxu0
        %v1557 = vadd.f32 0.0, %v1556
        %v1558 = vpop.f32.mrb[0].mxu0
        %v1559 = vadd.f32 0.0, %v1558
        %v1560 = vpop.f32.mrb[0].mxu0
        %v1561 = vadd.f32 0.0, %v1560
        %1562 = vmatprep.mubr.bf16.mxu0 0
        %1563 = vmatmul.mubr.bf16.gmra.mrb[0].mxu0 %v400
        %v1564 = vpop.f32.mrb[0].mxu0
        %v1565 = vadd.f32 0.0, %v1564
        %v1566 = vpop.f32.mrb[0].mxu0
        %v1567 = vadd.f32 0.0, %v1566
        %v1568 = vpop.f32.mrb[0].mxu0
        %v1569 = vadd.f32 0.0, %v1568
        %v1570 = vpop.f32.mrb[0].mxu0
        %v1571 = vadd.f32 0.0, %v1570
        %1572 = vmatprep.mubr.bf16.mxu0 0
        %1573 = vmatmul.mubr.bf16.gmra.mrb[0].mxu0 %v403
        %v1574 = vpop.f32.mrb[0].mxu0
        %v1575 = vadd.f32 0.0, %v1574
        %v1576 = vpop.f32.mrb[0].mxu0
        %v1577 = vadd.f32 0.0, %v1576
        %v1578 = vpop.f32.mrb[0].mxu0
        %v1579 = vadd.f32 0.0, %v1578
        %v1580 = vpop.f32.mrb[0].mxu0
        %v1581 = vadd.f32 0.0, %v1580
        %1582 = vmatprep.mubr.bf16.mxu0 0
        %1583 = vmatmul.mubr.bf16.gmra.mrb[0].mxu0 %v406
        %v1584 = vpop.f32.mrb[0].mxu0
        %v1585 = vadd.f32 0.0, %v1584
        %v1586 = vpop.f32.mrb[0].mxu0
        %v1587 = vadd.f32 0.0, %v1586
        %v1588 = vpop.f32.mrb[0].mxu0
        %v1589 = vadd.f32 0.0, %v1588
        %v1590 = vpop.f32.mrb[0].mxu0
        %v1591 = vadd.f32 0.0, %v1590
        %1592 = vdwg.mxu0
        %1593 = vmatprep.subr.bf16.mxu0 %v1305
        %1594 = vmatpush1.bf16.msra.mxu0 %v1304
        %1595 = vmatprep.subr.bf16.mxu0 %v1313
        %1596 = vmatpush1.bf16.msra.mxu0 %v1312
        %1597 = vmatprep.subr.bf16.mxu0 0
        %1598 = vmatpush1.bf16.msra.mxu0 0
        %1599 = vmatprep.subr.bf16.mxu0 0
        %1600 = vmatpush1.bf16.msra.mxu0 0
        %1601 = vmatprep.subr.bf16.mxu0 0
        %1602 = vmatpush1.bf16.msra.mxu0 0
        %1603 = vmatprep.subr.bf16.mxu0 0
        %1604 = vmatpush1.bf16.msra.mxu0 0
        %1605 = vmatprep.subr.bf16.mxu0 0
        %1606 = vmatpush1.bf16.msra.mxu0 0
        %1607 = vmatprep.subr.bf16.mxu0 0
        %1608 = vmatpush1.bf16.msra.mxu0 0
        %1609 = vmatprep.subr.bf16.mxu0 0
        %1610 = vmatpush1.bf16.msra.mxu0 0
        %1611 = vmatprep.subr.bf16.mxu0 0
        %1612 = vmatpush1.bf16.msra.mxu0 0
        %1613 = vmatprep.subr.bf16.mxu0 0
        %1614 = vmatpush1.bf16.msra.mxu0 0
        %1615 = vmatprep.subr.bf16.mxu0 0
        %1616 = vmatpush1.bf16.msra.mxu0 0
        %1617 = vmatprep.subr.bf16.mxu0 0
        %1618 = vmatpush1.bf16.msra.mxu0 0
        %1619 = vmatprep.subr.bf16.mxu0 0
        %1620 = vmatpush1.bf16.msra.mxu0 0
        %1621 = vmatprep.subr.bf16.mxu0 0
        %1622 = vmatpush1.bf16.msra.mxu0 0
        %1623 = vmatprep.subr.bf16.mxu0 0
        %1624 = vmatpush1.bf16.msra.mxu0 0
        %1625 = vmatprep.mubr.bf16.mxu0 0
        %1626 = vmatmul.mubr.bf16.gmra.mrb[0].mxu0 %v391
        %v1627 = vpop.f32.mrb[0].mxu0
        %v1628 = vadd.f32 0.0, %v1627
        %v1629 = vpop.f32.mrb[0].mxu0
        %v1630 = vadd.f32 0.0, %v1629
        %v1631 = vpop.f32.mrb[0].mxu0
        %v1632 = vadd.f32 0.0, %v1631
        %v1633 = vpop.f32.mrb[0].mxu0
        %v1634 = vadd.f32 0.0, %v1633
        %1635 = vmatprep.mubr.bf16.mxu0 0
        %1636 = vmatmul.mubr.bf16.gmra.mrb[0].mxu0 %v394
        %v1637 = vpop.f32.mrb[0].mxu0
        %v1638 = vadd.f32 0.0, %v1637
        %v1639 = vpop.f32.mrb[0].mxu0
        %v1640 = vadd.f32 0.0, %v1639
        %v1641 = vpop.f32.mrb[0].mxu0
        %v1642 = vadd.f32 0.0, %v1641
        %v1643 = vpop.f32.mrb[0].mxu0
        %v1644 = vadd.f32 0.0, %v1643
        %1645 = vmatprep.mubr.bf16.mxu0 0
        %1646 = vmatmul.mubr.bf16.gmra.mrb[0].mxu0 %v397
        %v1647 = vpop.f32.mrb[0].mxu0
        %v1648 = vadd.f32 0.0, %v1647
        %v1649 = vpop.f32.mrb[0].mxu0
        %v1650 = vadd.f32 0.0, %v1649
        %v1651 = vpop.f32.mrb[0].mxu0
        %v1652 = vadd.f32 0.0, %v1651
        %v1653 = vpop.f32.mrb[0].mxu0
        %v1654 = vadd.f32 0.0, %v1653
        %1655 = vmatprep.mubr.bf16.mxu0 0
        %1656 = vmatmul.mubr.bf16.gmra.mrb[0].mxu0 %v400
        %v1657 = vpop.f32.mrb[0].mxu0
        %v1658 = vadd.f32 0.0, %v1657
        %v1659 = vpop.f32.mrb[0].mxu0
        %v1660 = vadd.f32 0.0, %v1659
        %v1661 = vpop.f32.mrb[0].mxu0
        %v1662 = vadd.f32 0.0, %v1661
        %v1663 = vpop.f32.mrb[0].mxu0
        %v1664 = vadd.f32 0.0, %v1663
        %1665 = vmatprep.mubr.bf16.mxu0 0
        %1666 = vmatmul.mubr.bf16.gmra.mrb[0].mxu0 %v403
        %v1667 = vpop.f32.mrb[0].mxu0
        %v1668 = vadd.f32 0.0, %v1667
        %v1669 = vpop.f32.mrb[0].mxu0
        %v1670 = vadd.f32 0.0, %v1669
        %v1671 = vpop.f32.mrb[0].mxu0
        %v1672 = vadd.f32 0.0, %v1671
        %v1673 = vpop.f32.mrb[0].mxu0
        %v1674 = vadd.f32 0.0, %v1673
        %1675 = vmatprep.mubr.bf16.mxu0 0
        %1676 = vmatmul.mubr.bf16.gmra.mrb[0].mxu0 %v406
        %v1677 = vpop.f32.mrb[0].mxu0
        %v1678 = vadd.f32 0.0, %v1677
        %v1679 = vpop.f32.mrb[0].mxu0
        %v1680 = vadd.f32 0.0, %v1679
        %v1681 = vpop.f32.mrb[0].mxu0
        %v1682 = vadd.f32 0.0, %v1681
        %v1683 = vpop.f32.mrb[0].mxu0
        %v1684 = vadd.f32 0.0, %v1683
        %1685 = vdwg.mxu0
        %v1686 = vadd.f32 %v1202, %v1349
        %v1687 = vadd.f32 %v1203, %v1351
        %v1688 = vadd.f32 %v1204, %v1442
        %v1689 = vadd.f32 %v1205, %v1444
        %v1690 = vadd.f32 %v1206, %v1535
        %v1691 = vadd.f32 %v1207, %v1537
        %v1692 = vadd.f32 %v1208, %v1628
        %v1693 = vadd.f32 %v1209, %v1630
        %v1694 = vadd.f32 %v1210, %v1353
        %v1695 = vadd.f32 %v1211, %v1355
        %v1696 = vadd.f32 %v1212, %v1446
        %v1697 = vadd.f32 %v1213, %v1448
        %v1698 = vadd.f32 %v1214, %v1539
        %v1699 = vadd.f32 %v1215, %v1541
        %v1700 = vadd.f32 %v1216, %v1632
        %v1701 = vadd.f32 %v1217, %v1634
        %v1702 = vadd.f32 %v1218, %v1359
        %v1703 = vadd.f32 %v1219, %v1361
        %v1704 = vadd.f32 %v1220, %v1452
        %v1705 = vadd.f32 %v1221, %v1454
        %v1706 = vadd.f32 %v1222, %v1545
        %v1707 = vadd.f32 %v1223, %v1547
        %v1708 = vadd.f32 %v1224, %v1638
        %v1709 = vadd.f32 %v1225, %v1640
        %v1710 = vadd.f32 %v1226, %v1363
        %v1711 = vadd.f32 %v1227, %v1365
        %v1712 = vadd.f32 %v1228, %v1456
        %v1713 = vadd.f32 %v1229, %v1458
        %v1714 = vadd.f32 %v1230, %v1549
        %v1715 = vadd.f32 %v1231, %v1551
        %v1716 = vadd.f32 %v1232, %v1642
        %v1717 = vadd.f32 %v1233, %v1644
        %v1718 = vxor.u32 %v1686, 2147483648
        %v1719 = vxor.u32 %v1687, 2147483648
        %v1720 = vxor.u32 %v1688, 2147483648
        %v1721 = vxor.u32 %v1689, 2147483648
        %v1722 = vxor.u32 %v1690, 2147483648
        %v1723 = vxor.u32 %v1691, 2147483648
        %v1724 = vxor.u32 %v1692, 2147483648
        %v1725 = vxor.u32 %v1693, 2147483648
        %v1726 = vxor.u32 %v1694, 2147483648
        %v1727 = vxor.u32 %v1695, 2147483648
        %v1728 = vxor.u32 %v1696, 2147483648
        %v1729 = vxor.u32 %v1697, 2147483648
        %v1730 = vxor.u32 %v1698, 2147483648
        %v1731 = vxor.u32 %v1699, 2147483648
        %v1732 = vxor.u32 %v1700, 2147483648
        %v1733 = vxor.u32 %v1701, 2147483648
        %v1734 = vxor.u32 %v1702, 2147483648
        %v1735 = vxor.u32 %v1703, 2147483648
        %v1736 = vxor.u32 %v1704, 2147483648
        %v1737 = vxor.u32 %v1705, 2147483648
        %v1738 = vxor.u32 %v1706, 2147483648
        %v1739 = vxor.u32 %v1707, 2147483648
        %v1740 = vxor.u32 %v1708, 2147483648
        %v1741 = vxor.u32 %v1709, 2147483648
        %v1742 = vxor.u32 %v1710, 2147483648
        %v1743 = vxor.u32 %v1711, 2147483648
        %v1744 = vxor.u32 %v1712, 2147483648
        %v1745 = vxor.u32 %v1713, 2147483648
        %v1746 = vxor.u32 %v1714, 2147483648
        %v1747 = vxor.u32 %v1715, 2147483648
        %v1748 = vxor.u32 %v1716, 2147483648
        %v1749 = vxor.u32 %v1717, 2147483648
        %v1750 = vmul.f32 %v1718, 1.442695
        %v1751 = vpow.pop %v1750
        %v1752 = vmul.f32 %v1719, 1.442695
        %v1753 = vpow.pop %v1752
        %v1754 = vmul.f32 %v1720, 1.442695
        %v1755 = vpow.pop %v1754
        %v1756 = vmul.f32 %v1721, 1.442695
        %v1757 = vpow.pop %v1756
        %v1758 = vmul.f32 %v1722, 1.442695
        %v1759 = vpow.pop %v1758
        %v1760 = vmul.f32 %v1723, 1.442695
        %v1761 = vpow.pop %v1760
        %v1762 = vmul.f32 %v1724, 1.442695
        %v1763 = vpow.pop %v1762
        %v1764 = vmul.f32 %v1725, 1.442695
        %v1765 = vpow.pop %v1764
        %v1766 = vmul.f32 %v1726, 1.442695
        %v1767 = vpow.pop %v1766
        %v1768 = vmul.f32 %v1727, 1.442695
        %v1769 = vpow.pop %v1768
        %v1770 = vmul.f32 %v1728, 1.442695
        %v1771 = vpow.pop %v1770
        %v1772 = vmul.f32 %v1729, 1.442695
        %v1773 = vpow.pop %v1772
        %v1774 = vmul.f32 %v1730, 1.442695
        %v1775 = vpow.pop %v1774
        %v1776 = vmul.f32 %v1731, 1.442695
        %v1777 = vpow.pop %v1776
        %v1778 = vmul.f32 %v1732, 1.442695
        %v1779 = vpow.pop %v1778
        %v1780 = vmul.f32 %v1733, 1.442695
        %v1781 = vpow.pop %v1780
        %v1782 = vmul.f32 %v1734, 1.442695
        %v1783 = vpow.pop %v1782
        %v1784 = vmul.f32 %v1735, 1.442695
        %v1785 = vpow.pop %v1784
        %v1786 = vmul.f32 %v1736, 1.442695
        %v1787 = vpow.pop %v1786
        %v1788 = vmul.f32 %v1737, 1.442695
        %v1789 = vpow.pop %v1788
        %v1790 = vmul.f32 %v1738, 1.442695
        %v1791 = vpow.pop %v1790
        %v1792 = vmul.f32 %v1739, 1.442695
        %v1793 = vpow.pop %v1792
        %v1794 = vmul.f32 %v1740, 1.442695
        %v1795 = vpow.pop %v1794
        %v1796 = vmul.f32 %v1741, 1.442695
        %v1797 = vpow.pop %v1796
        %v1798 = vmul.f32 %v1742, 1.442695
        %v1799 = vpow.pop %v1798
        %v1800 = vmul.f32 %v1743, 1.442695
        %v1801 = vpow.pop %v1800
        %v1802 = vmul.f32 %v1744, 1.442695
        %v1803 = vpow.pop %v1802
        %v1804 = vmul.f32 %v1745, 1.442695
        %v1805 = vpow.pop %v1804
        %v1806 = vmul.f32 %v1746, 1.442695
        %v1807 = vpow.pop %v1806
        %v1808 = vmul.f32 %v1747, 1.442695
        %v1809 = vpow.pop %v1808
        %v1810 = vmul.f32 %v1748, 1.442695
        %v1811 = vpow.pop %v1810
        %v1812 = vmul.f32 %v1749, 1.442695
        %v1813 = vpow.pop %v1812
        %v1814 = vadd.f32 %v1751, 1.0
        %v1815 = vadd.f32 %v1753, 1.0
        %v1816 = vadd.f32 %v1755, 1.0
        %v1817 = vadd.f32 %v1757, 1.0
        %v1818 = vadd.f32 %v1759, 1.0
        %v1819 = vadd.f32 %v1761, 1.0
        %v1820 = vadd.f32 %v1763, 1.0
        %v1821 = vadd.f32 %v1765, 1.0
        %v1822 = vadd.f32 %v1767, 1.0
        %v1823 = vadd.f32 %v1769, 1.0
        %v1824 = vadd.f32 %v1771, 1.0
        %v1825 = vadd.f32 %v1773, 1.0
        %v1826 = vadd.f32 %v1775, 1.0
        %v1827 = vadd.f32 %v1777, 1.0
        %v1828 = vadd.f32 %v1779, 1.0
        %v1829 = vadd.f32 %v1781, 1.0
        %v1830 = vadd.f32 %v1783, 1.0
        %v1831 = vadd.f32 %v1785, 1.0
        %v1832 = vadd.f32 %v1787, 1.0
        %v1833 = vadd.f32 %v1789, 1.0
        %v1834 = vadd.f32 %v1791, 1.0
        %v1835 = vadd.f32 %v1793, 1.0
        %v1836 = vadd.f32 %v1795, 1.0
        %v1837 = vadd.f32 %v1797, 1.0
        %v1838 = vadd.f32 %v1799, 1.0
        %v1839 = vadd.f32 %v1801, 1.0
        %v1840 = vadd.f32 %v1803, 1.0
        %v1841 = vadd.f32 %v1805, 1.0
        %v1842 = vadd.f32 %v1807, 1.0
        %v1843 = vadd.f32 %v1809, 1.0
        %v1844 = vadd.f32 %v1811, 1.0
        %v1845 = vadd.f32 %v1813, 1.0
        %v1846 = vrcp.pop %v1814
        %v1847 = vmul.f32 1.0, %v1846
        %v1848 = vrcp.pop %v1815
        %v1849 = vmul.f32 1.0, %v1848
        %v1850 = vrcp.pop %v1816
        %v1851 = vmul.f32 1.0, %v1850
        %v1852 = vrcp.pop %v1817
        %v1853 = vmul.f32 1.0, %v1852
        %v1854 = vrcp.pop %v1818
        %v1855 = vmul.f32 1.0, %v1854
        %v1856 = vrcp.pop %v1819
        %v1857 = vmul.f32 1.0, %v1856
        %v1858 = vrcp.pop %v1820
        %v1859 = vmul.f32 1.0, %v1858
        %v1860 = vrcp.pop %v1821
        %v1861 = vmul.f32 1.0, %v1860
        %v1862 = vrcp.pop %v1822
        %v1863 = vmul.f32 1.0, %v1862
        %v1864 = vrcp.pop %v1823
        %v1865 = vmul.f32 1.0, %v1864
        %v1866 = vrcp.pop %v1824
        %v1867 = vmul.f32 1.0, %v1866
        %v1868 = vrcp.pop %v1825
        %v1869 = vmul.f32 1.0, %v1868
        %v1870 = vrcp.pop %v1826
        %v1871 = vmul.f32 1.0, %v1870
        %v1872 = vrcp.pop %v1827
        %v1873 = vmul.f32 1.0, %v1872
        %v1874 = vrcp.pop %v1828
        %v1875 = vmul.f32 1.0, %v1874
        %v1876 = vrcp.pop %v1829
        %v1877 = vmul.f32 1.0, %v1876
        %v1878 = vrcp.pop %v1830
        %v1879 = vmul.f32 1.0, %v1878
        %v1880 = vrcp.pop %v1831
        %v1881 = vmul.f32 1.0, %v1880
        %v1882 = vrcp.pop %v1832
        %v1883 = vmul.f32 1.0, %v1882
        %v1884 = vrcp.pop %v1833
        %v1885 = vmul.f32 1.0, %v1884
        %v1886 = vrcp.pop %v1834
        %v1887 = vmul.f32 1.0, %v1886
        %v1888 = vrcp.pop %v1835
        %v1889 = vmul.f32 1.0, %v1888
        %v1890 = vrcp.pop %v1836
        %v1891 = vmul.f32 1.0, %v1890
        %v1892 = vrcp.pop %v1837
        %v1893 = vmul.f32 1.0, %v1892
        %v1894 = vrcp.pop %v1838
        %v1895 = vmul.f32 1.0, %v1894
        %v1896 = vrcp.pop %v1839
        %v1897 = vmul.f32 1.0, %v1896
        %v1898 = vrcp.pop %v1840
        %v1899 = vmul.f32 1.0, %v1898
        %v1900 = vrcp.pop %v1841
        %v1901 = vmul.f32 1.0, %v1900
        %v1902 = vrcp.pop %v1842
        %v1903 = vmul.f32 1.0, %v1902
        %v1904 = vrcp.pop %v1843
        %v1905 = vmul.f32 1.0, %v1904
        %v1906 = vrcp.pop %v1844
        %v1907 = vmul.f32 1.0, %v1906
        %v1908 = vrcp.pop %v1845
        %v1909 = vmul.f32 1.0, %v1908
        %v1910 = vadd.f32 %v1234, %v1369
        %v1911 = vadd.f32 %v1235, %v1371
        %v1912 = vadd.f32 %v1236, %v1462
        %v1913 = vadd.f32 %v1237, %v1464
        %v1914 = vadd.f32 %v1238, %v1555
        %v1915 = vadd.f32 %v1239, %v1557
        %v1916 = vadd.f32 %v1240, %v1648
        %v1917 = vadd.f32 %v1241, %v1650
        %v1918 = vadd.f32 %v1242, %v1373
        %v1919 = vadd.f32 %v1243, %v1375
        %v1920 = vadd.f32 %v1244, %v1466
        %v1921 = vadd.f32 %v1245, %v1468
        %v1922 = vadd.f32 %v1246, %v1559
        %v1923 = vadd.f32 %v1247, %v1561
        %v1924 = vadd.f32 %v1248, %v1652
        %v1925 = vadd.f32 %v1249, %v1654
        %v1926 = vadd.f32 %v1250, %v1379
        %v1927 = vadd.f32 %v1251, %v1381
        %v1928 = vadd.f32 %v1252, %v1472
        %v1929 = vadd.f32 %v1253, %v1474
        %v1930 = vadd.f32 %v1254, %v1565
        %v1931 = vadd.f32 %v1255, %v1567
        %v1932 = vadd.f32 %v1256, %v1658
        %v1933 = vadd.f32 %v1257, %v1660
        %v1934 = vadd.f32 %v1258, %v1383
        %v1935 = vadd.f32 %v1259, %v1385
        %v1936 = vadd.f32 %v1260, %v1476
        %v1937 = vadd.f32 %v1261, %v1478
        %v1938 = vadd.f32 %v1262, %v1569
        %v1939 = vadd.f32 %v1263, %v1571
        %v1940 = vadd.f32 %v1264, %v1662
        %v1941 = vadd.f32 %v1265, %v1664
        %v1942 = vxor.u32 %v1910, 2147483648
        %v1943 = vxor.u32 %v1911, 2147483648
        %v1944 = vxor.u32 %v1912, 2147483648
        %v1945 = vxor.u32 %v1913, 2147483648
        %v1946 = vxor.u32 %v1914, 2147483648
        %v1947 = vxor.u32 %v1915, 2147483648
        %v1948 = vxor.u32 %v1916, 2147483648
        %v1949 = vxor.u32 %v1917, 2147483648
        %v1950 = vxor.u32 %v1918, 2147483648
        %v1951 = vxor.u32 %v1919, 2147483648
        %v1952 = vxor.u32 %v1920, 2147483648
        %v1953 = vxor.u32 %v1921, 2147483648
        %v1954 = vxor.u32 %v1922, 2147483648
        %v1955 = vxor.u32 %v1923, 2147483648
        %v1956 = vxor.u32 %v1924, 2147483648
        %v1957 = vxor.u32 %v1925, 2147483648
        %v1958 = vxor.u32 %v1926, 2147483648
        %v1959 = vxor.u32 %v1927, 2147483648
        %v1960 = vxor.u32 %v1928, 2147483648
        %v1961 = vxor.u32 %v1929, 2147483648
        %v1962 = vxor.u32 %v1930, 2147483648
        %v1963 = vxor.u32 %v1931, 2147483648
        %v1964 = vxor.u32 %v1932, 2147483648
        %v1965 = vxor.u32 %v1933, 2147483648
        %v1966 = vxor.u32 %v1934, 2147483648
        %v1967 = vxor.u32 %v1935, 2147483648
        %v1968 = vxor.u32 %v1936, 2147483648
        %v1969 = vxor.u32 %v1937, 2147483648
        %v1970 = vxor.u32 %v1938, 2147483648
        %v1971 = vxor.u32 %v1939, 2147483648
        %v1972 = vxor.u32 %v1940, 2147483648
        %v1973 = vxor.u32 %v1941, 2147483648
        %v1974 = vmul.f32 %v1942, 1.442695
        %v1975 = vpow.pop %v1974
        %v1976 = vmul.f32 %v1943, 1.442695
        %v1977 = vpow.pop %v1976
        %v1978 = vmul.f32 %v1944, 1.442695
        %v1979 = vpow.pop %v1978
        %v1980 = vmul.f32 %v1945, 1.442695
        %v1981 = vpow.pop %v1980
        %v1982 = vmul.f32 %v1946, 1.442695
        %v1983 = vpow.pop %v1982
        %v1984 = vmul.f32 %v1947, 1.442695
        %v1985 = vpow.pop %v1984
        %v1986 = vmul.f32 %v1948, 1.442695
        %v1987 = vpow.pop %v1986
        %v1988 = vmul.f32 %v1949, 1.442695
        %v1989 = vpow.pop %v1988
        %v1990 = vmul.f32 %v1950, 1.442695
        %v1991 = vpow.pop %v1990
        %v1992 = vmul.f32 %v1951, 1.442695
        %v1993 = vpow.pop %v1992
        %v1994 = vmul.f32 %v1952, 1.442695
        %v1995 = vpow.pop %v1994
        %v1996 = vmul.f32 %v1953, 1.442695
        %v1997 = vpow.pop %v1996
        %v1998 = vmul.f32 %v1954, 1.442695
        %v1999 = vpow.pop %v1998
        %v2000 = vmul.f32 %v1955, 1.442695
        %v2001 = vpow.pop %v2000
        %v2002 = vmul.f32 %v1956, 1.442695
        %v2003 = vpow.pop %v2002
        %v2004 = vmul.f32 %v1957, 1.442695
        %v2005 = vpow.pop %v2004
        %v2006 = vmul.f32 %v1958, 1.442695
        %v2007 = vpow.pop %v2006
        %v2008 = vmul.f32 %v1959, 1.442695
        %v2009 = vpow.pop %v2008
        %v2010 = vmul.f32 %v1960, 1.442695
        %v2011 = vpow.pop %v2010
        %v2012 = vmul.f32 %v1961, 1.442695
        %v2013 = vpow.pop %v2012
        %v2014 = vmul.f32 %v1962, 1.442695
        %v2015 = vpow.pop %v2014
        %v2016 = vmul.f32 %v1963, 1.442695
        %v2017 = vpow.pop %v2016
        %v2018 = vmul.f32 %v1964, 1.442695
        %v2019 = vpow.pop %v2018
        %v2020 = vmul.f32 %v1965, 1.442695
        %v2021 = vpow.pop %v2020
        %v2022 = vmul.f32 %v1966, 1.442695
        %v2023 = vpow.pop %v2022
        %v2024 = vmul.f32 %v1967, 1.442695
        %v2025 = vpow.pop %v2024
        %v2026 = vmul.f32 %v1968, 1.442695
        %v2027 = vpow.pop %v2026
        %v2028 = vmul.f32 %v1969, 1.442695
        %v2029 = vpow.pop %v2028
        %v2030 = vmul.f32 %v1970, 1.442695
        %v2031 = vpow.pop %v2030
        %v2032 = vmul.f32 %v1971, 1.442695
        %v2033 = vpow.pop %v2032
        %v2034 = vmul.f32 %v1972, 1.442695
        %v2035 = vpow.pop %v2034
        %v2036 = vmul.f32 %v1973, 1.442695
        %v2037 = vpow.pop %v2036
        %v2038 = vadd.f32 %v1975, 1.0
        %v2039 = vadd.f32 %v1977, 1.0
        %v2040 = vadd.f32 %v1979, 1.0
        %v2041 = vadd.f32 %v1981, 1.0
        %v2042 = vadd.f32 %v1983, 1.0
        %v2043 = vadd.f32 %v1985, 1.0
        %v2044 = vadd.f32 %v1987, 1.0
        %v2045 = vadd.f32 %v1989, 1.0
        %v2046 = vadd.f32 %v1991, 1.0
        %v2047 = vadd.f32 %v1993, 1.0
        %v2048 = vadd.f32 %v1995, 1.0
        %v2049 = vadd.f32 %v1997, 1.0
        %v2050 = vadd.f32 %v1999, 1.0
        %v2051 = vadd.f32 %v2001, 1.0
        %v2052 = vadd.f32 %v2003, 1.0
        %v2053 = vadd.f32 %v2005, 1.0
        %v2054 = vadd.f32 %v2007, 1.0
        %v2055 = vadd.f32 %v2009, 1.0
        %v2056 = vadd.f32 %v2011, 1.0
        %v2057 = vadd.f32 %v2013, 1.0
        %v2058 = vadd.f32 %v2015, 1.0
        %v2059 = vadd.f32 %v2017, 1.0
        %v2060 = vadd.f32 %v2019, 1.0
        %v2061 = vadd.f32 %v2021, 1.0
        %v2062 = vadd.f32 %v2023, 1.0
        %v2063 = vadd.f32 %v2025, 1.0
        %v2064 = vadd.f32 %v2027, 1.0
        %v2065 = vadd.f32 %v2029, 1.0
        %v2066 = vadd.f32 %v2031, 1.0
        %v2067 = vadd.f32 %v2033, 1.0
        %v2068 = vadd.f32 %v2035, 1.0
        %v2069 = vadd.f32 %v2037, 1.0
        %v2070 = vrcp.pop %v2038
        %v2071 = vmul.f32 1.0, %v2070
        %v2072 = vrcp.pop %v2039
        %v2073 = vmul.f32 1.0, %v2072
        %v2074 = vrcp.pop %v2040
        %v2075 = vmul.f32 1.0, %v2074
        %v2076 = vrcp.pop %v2041
        %v2077 = vmul.f32 1.0, %v2076
        %v2078 = vrcp.pop %v2042
        %v2079 = vmul.f32 1.0, %v2078
        %v2080 = vrcp.pop %v2043
        %v2081 = vmul.f32 1.0, %v2080
        %v2082 = vrcp.pop %v2044
        %v2083 = vmul.f32 1.0, %v2082
        %v2084 = vrcp.pop %v2045
        %v2085 = vmul.f32 1.0, %v2084
        %v2086 = vrcp.pop %v2046
        %v2087 = vmul.f32 1.0, %v2086
        %v2088 = vrcp.pop %v2047
        %v2089 = vmul.f32 1.0, %v2088
        %v2090 = vrcp.pop %v2048
        %v2091 = vmul.f32 1.0, %v2090
        %v2092 = vrcp.pop %v2049
        %v2093 = vmul.f32 1.0, %v2092
        %v2094 = vrcp.pop %v2050
        %v2095 = vmul.f32 1.0, %v2094
        %v2096 = vrcp.pop %v2051
        %v2097 = vmul.f32 1.0, %v2096
        %v2098 = vrcp.pop %v2052
        %v2099 = vmul.f32 1.0, %v2098
        %v2100 = vrcp.pop %v2053
        %v2101 = vmul.f32 1.0, %v2100
        %v2102 = vrcp.pop %v2054
        %v2103 = vmul.f32 1.0, %v2102
        %v2104 = vrcp.pop %v2055
        %v2105 = vmul.f32 1.0, %v2104
        %v2106 = vrcp.pop %v2056
        %v2107 = vmul.f32 1.0, %v2106
        %v2108 = vrcp.pop %v2057
        %v2109 = vmul.f32 1.0, %v2108
        %v2110 = vrcp.pop %v2058
        %v2111 = vmul.f32 1.0, %v2110
        %v2112 = vrcp.pop %v2059
        %v2113 = vmul.f32 1.0, %v2112
        %v2114 = vrcp.pop %v2060
        %v2115 = vmul.f32 1.0, %v2114
        %v2116 = vrcp.pop %v2061
        %v2117 = vmul.f32 1.0, %v2116
        %v2118 = vrcp.pop %v2062
        %v2119 = vmul.f32 1.0, %v2118
        %v2120 = vrcp.pop %v2063
        %v2121 = vmul.f32 1.0, %v2120
        %v2122 = vrcp.pop %v2064
        %v2123 = vmul.f32 1.0, %v2122
        %v2124 = vrcp.pop %v2065
        %v2125 = vmul.f32 1.0, %v2124
        %v2126 = vrcp.pop %v2066
        %v2127 = vmul.f32 1.0, %v2126
        %v2128 = vrcp.pop %v2067
        %v2129 = vmul.f32 1.0, %v2128
        %v2130 = vrcp.pop %v2068
        %v2131 = vmul.f32 1.0, %v2130
        %v2132 = vrcp.pop %v2069
        %v2133 = vmul.f32 1.0, %v2132
        %v2134 = vadd.f32 %v1389, %v952
        %v2135 = vadd.f32 %v1391, %v952
        %v2136 = vadd.f32 %v1482, %v952
        %v2137 = vadd.f32 %v1484, %v952
        %v2138 = vadd.f32 %v1575, %v952
        %v2139 = vadd.f32 %v1577, %v952
        %v2140 = vadd.f32 %v1668, %v952
        %v2141 = vadd.f32 %v1670, %v952
        %v2142 = vadd.f32 %v1393, %v957
        %v2143 = vadd.f32 %v1395, %v957
        %v2144 = vadd.f32 %v1486, %v957
        %v2145 = vadd.f32 %v1488, %v957
        %v2146 = vadd.f32 %v1579, %v957
        %v2147 = vadd.f32 %v1581, %v957
        %v2148 = vadd.f32 %v1672, %v957
        %v2149 = vadd.f32 %v1674, %v957
        %v2150 = vadd.f32 %v1399, %v962
        %v2151 = vadd.f32 %v1401, %v962
        %v2152 = vadd.f32 %v1492, %v962
        %v2153 = vadd.f32 %v1494, %v962
        %v2154 = vadd.f32 %v1585, %v962
        %v2155 = vadd.f32 %v1587, %v962
        %v2156 = vadd.f32 %v1678, %v962
        %v2157 = vadd.f32 %v1680, %v962
        %v2158 = vadd.f32 %v1403, %v967
        %v2159 = vadd.f32 %v1405, %v967
        %v2160 = vadd.f32 %v1496, %v967
        %v2161 = vadd.f32 %v1498, %v967
        %v2162 = vadd.f32 %v1589, %v967
        %v2163 = vadd.f32 %v1591, %v967
        %v2164 = vadd.f32 %v1682, %v967
        %v2165 = vadd.f32 %v1684, %v967
        %v2166 = vmul.f32 %v1847, %v2134
        %v2167 = vmul.f32 %v1849, %v2135
        %v2168 = vmul.f32 %v1851, %v2136
        %v2169 = vmul.f32 %v1853, %v2137
        %v2170 = vmul.f32 %v1855, %v2138
        %v2171 = vmul.f32 %v1857, %v2139
        %v2172 = vmul.f32 %v1859, %v2140
        %v2173 = vmul.f32 %v1861, %v2141
        %v2174 = vmul.f32 %v1863, %v2142
        %v2175 = vmul.f32 %v1865, %v2143
        %v2176 = vmul.f32 %v1867, %v2144
        %v2177 = vmul.f32 %v1869, %v2145
        %v2178 = vmul.f32 %v1871, %v2146
        %v2179 = vmul.f32 %v1873, %v2147
        %v2180 = vmul.f32 %v1875, %v2148
        %v2181 = vmul.f32 %v1877, %v2149
        %v2182 = vmul.f32 %v1879, %v2150
        %v2183 = vmul.f32 %v1881, %v2151
        %v2184 = vmul.f32 %v1883, %v2152
        %v2185 = vmul.f32 %v1885, %v2153
        %v2186 = vmul.f32 %v1887, %v2154
        %v2187 = vmul.f32 %v1889, %v2155
        %v2188 = vmul.f32 %v1891, %v2156
        %v2189 = vmul.f32 %v1893, %v2157
        %v2190 = vmul.f32 %v1895, %v2158
        %v2191 = vmul.f32 %v1897, %v2159
        %v2192 = vmul.f32 %v1899, %v2160
        %v2193 = vmul.f32 %v1901, %v2161
        %v2194 = vmul.f32 %v1903, %v2162
        %v2195 = vmul.f32 %v1905, %v2163
        %v2196 = vmul.f32 %v1907, %v2164
        %v2197 = vmul.f32 %v1909, %v2165
        %v2198 = vadd.f32 %v1266, %v2166
        %v2199 = vadd.f32 %v1267, %v2167
        %v2200 = vadd.f32 %v1268, %v2168
        %v2201 = vadd.f32 %v1269, %v2169
        %v2202 = vadd.f32 %v1270, %v2170
        %v2203 = vadd.f32 %v1271, %v2171
        %v2204 = vadd.f32 %v1272, %v2172
        %v2205 = vadd.f32 %v1273, %v2173
        %v2206 = vadd.f32 %v1274, %v2174
        %v2207 = vadd.f32 %v1275, %v2175
        %v2208 = vadd.f32 %v1276, %v2176
        %v2209 = vadd.f32 %v1277, %v2177
        %v2210 = vadd.f32 %v1278, %v2178
        %v2211 = vadd.f32 %v1279, %v2179
        %v2212 = vadd.f32 %v1280, %v2180
        %v2213 = vadd.f32 %v1281, %v2181
        %v2214 = vadd.f32 %v1282, %v2182
        %v2215 = vadd.f32 %v1283, %v2183
        %v2216 = vadd.f32 %v1284, %v2184
        %v2217 = vadd.f32 %v1285, %v2185
        %v2218 = vadd.f32 %v1286, %v2186
        %v2219 = vadd.f32 %v1287, %v2187
        %v2220 = vadd.f32 %v1288, %v2188
        %v2221 = vadd.f32 %v1289, %v2189
        %v2222 = vadd.f32 %v1290, %v2190
        %v2223 = vadd.f32 %v1291, %v2191
        %v2224 = vadd.f32 %v1292, %v2192
        %v2225 = vadd.f32 %v1293, %v2193
        %v2226 = vadd.f32 %v1294, %v2194
        %v2227 = vadd.f32 %v1295, %v2195
        %v2228 = vadd.f32 %v1296, %v2196
        %v2229 = vadd.f32 %v1297, %v2197
        %v2230 = vtanh.pop %v2198
        %v2231 = vtanh.pop %v2199
        %v2232 = vtanh.pop %v2200
        %v2233 = vtanh.pop %v2201
        %v2234 = vtanh.pop %v2202
        %v2235 = vtanh.pop %v2203
        %v2236 = vtanh.pop %v2204
        %v2237 = vtanh.pop %v2205
        %v2238 = vtanh.pop %v2206
        %v2239 = vtanh.pop %v2207
        %v2240 = vtanh.pop %v2208
        %v2241 = vtanh.pop %v2209
        %v2242 = vtanh.pop %v2210
        %v2243 = vtanh.pop %v2211
        %v2244 = vtanh.pop %v2212
        %v2245 = vtanh.pop %v2213
        %v2246 = vtanh.pop %v2214
        %v2247 = vtanh.pop %v2215
        %v2248 = vtanh.pop %v2216
        %v2249 = vtanh.pop %v2217
        %v2250 = vtanh.pop %v2218
        %v2251 = vtanh.pop %v2219
        %v2252 = vtanh.pop %v2220
        %v2253 = vtanh.pop %v2221
        %v2254 = vtanh.pop %v2222
        %v2255 = vtanh.pop %v2223
        %v2256 = vtanh.pop %v2224
        %v2257 = vtanh.pop %v2225
        %v2258 = vtanh.pop %v2226
        %v2259 = vtanh.pop %v2227
        %v2260 = vtanh.pop %v2228
        %v2261 = vtanh.pop %v2229
        %v2262 = vsub.f32 1.0, %v2071
        %v2263 = vsub.f32 1.0, %v2073
        %v2264 = vsub.f32 1.0, %v2075
        %v2265 = vsub.f32 1.0, %v2077
        %v2266 = vsub.f32 1.0, %v2079
        %v2267 = vsub.f32 1.0, %v2081
        %v2268 = vsub.f32 1.0, %v2083
        %v2269 = vsub.f32 1.0, %v2085
        %v2270 = vsub.f32 1.0, %v2087
        %v2271 = vsub.f32 1.0, %v2089
        %v2272 = vsub.f32 1.0, %v2091
        %v2273 = vsub.f32 1.0, %v2093
        %v2274 = vsub.f32 1.0, %v2095
        %v2275 = vsub.f32 1.0, %v2097
        %v2276 = vsub.f32 1.0, %v2099
        %v2277 = vsub.f32 1.0, %v2101
        %v2278 = vsub.f32 1.0, %v2103
        %v2279 = vsub.f32 1.0, %v2105
        %v2280 = vsub.f32 1.0, %v2107
        %v2281 = vsub.f32 1.0, %v2109
        %v2282 = vsub.f32 1.0, %v2111
        %v2283 = vsub.f32 1.0, %v2113
        %v2284 = vsub.f32 1.0, %v2115
        %v2285 = vsub.f32 1.0, %v2117
        %v2286 = vsub.f32 1.0, %v2119
        %v2287 = vsub.f32 1.0, %v2121
        %v2288 = vsub.f32 1.0, %v2123
        %v2289 = vsub.f32 1.0, %v2125
        %v2290 = vsub.f32 1.0, %v2127
        %v2291 = vsub.f32 1.0, %v2129
        %v2292 = vsub.f32 1.0, %v2131
        %v2293 = vsub.f32 1.0, %v2133
        %v2294 = vmul.f32 %v2262, %v2230
        %v2295 = vmul.f32 %v2263, %v2231
        %v2296 = vmul.f32 %v2264, %v2232
        %v2297 = vmul.f32 %v2265, %v2233
        %v2298 = vmul.f32 %v2266, %v2234
        %v2299 = vmul.f32 %v2267, %v2235
        %v2300 = vmul.f32 %v2268, %v2236
        %v2301 = vmul.f32 %v2269, %v2237
        %v2302 = vmul.f32 %v2270, %v2238
        %v2303 = vmul.f32 %v2271, %v2239
        %v2304 = vmul.f32 %v2272, %v2240
        %v2305 = vmul.f32 %v2273, %v2241
        %v2306 = vmul.f32 %v2274, %v2242
        %v2307 = vmul.f32 %v2275, %v2243
        %v2308 = vmul.f32 %v2276, %v2244
        %v2309 = vmul.f32 %v2277, %v2245
        %v2310 = vmul.f32 %v2278, %v2246
        %v2311 = vmul.f32 %v2279, %v2247
        %v2312 = vmul.f32 %v2280, %v2248
        %v2313 = vmul.f32 %v2281, %v2249
        %v2314 = vmul.f32 %v2282, %v2250
        %v2315 = vmul.f32 %v2283, %v2251
        %v2316 = vmul.f32 %v2284, %v2252
        %v2317 = vmul.f32 %v2285, %v2253
        %v2318 = vmul.f32 %v2286, %v2254
        %v2319 = vmul.f32 %v2287, %v2255
        %v2320 = vmul.f32 %v2288, %v2256
        %v2321 = vmul.f32 %v2289, %v2257
        %v2322 = vmul.f32 %v2290, %v2258
        %v2323 = vmul.f32 %v2291, %v2259
        %v2324 = vmul.f32 %v2292, %v2260
        %v2325 = vmul.f32 %v2293, %v2261
        %v2326 = vmul.f32 %v2071, %v1169
        %v2327 = vmul.f32 %v2073, %v1170
        %v2328 = vmul.f32 %v2075, %v1171
        %v2329 = vmul.f32 %v2077, %v1172
        %v2330 = vmul.f32 %v2079, %v1173
        %v2331 = vmul.f32 %v2081, %v1174
        %v2332 = vmul.f32 %v2083, %v1175
        %v2333 = vmul.f32 %v2085, %v1176
        %v2334 = vmul.f32 %v2087, %v1177
        %v2335 = vmul.f32 %v2089, %v1178
        %v2336 = vmul.f32 %v2091, %v1179
        %v2337 = vmul.f32 %v2093, %v1180
        %v2338 = vmul.f32 %v2095, %v1181
        %v2339 = vmul.f32 %v2097, %v1182
        %v2340 = vmul.f32 %v2099, %v1183
        %v2341 = vmul.f32 %v2101, %v1184
        %v2342 = vmul.f32 %v2103, %v1185
        %v2343 = vmul.f32 %v2105, %v1186
        %v2344 = vmul.f32 %v2107, %v1187
        %v2345 = vmul.f32 %v2109, %v1188
        %v2346 = vmul.f32 %v2111, %v1189
        %v2347 = vmul.f32 %v2113, %v1190
        %v2348 = vmul.f32 %v2115, %v1191
        %v2349 = vmul.f32 %v2117, %v1192
        %v2350 = vmul.f32 %v2119, %v1193
        %v2351 = vmul.f32 %v2121, %v1194
        %v2352 = vmul.f32 %v2123, %v1195
        %v2353 = vmul.f32 %v2125, %v1196
        %v2354 = vmul.f32 %v2127, %v1197
        %v2355 = vmul.f32 %v2129, %v1198
        %v2356 = vmul.f32 %v2131, %v1199
        %v2357 = vmul.f32 %v2133, %v1200
        %v2358 = vadd.f32 %v2294, %v2326
        %v2359 = vadd.f32 %v2295, %v2327
        %v2360 = vadd.f32 %v2296, %v2328
        %v2361 = vadd.f32 %v2297, %v2329
        %v2362 = vadd.f32 %v2298, %v2330
        %v2363 = vadd.f32 %v2299, %v2331
        %v2364 = vadd.f32 %v2300, %v2332
        %v2365 = vadd.f32 %v2301, %v2333
        %v2366 = vadd.f32 %v2302, %v2334
        %v2367 = vadd.f32 %v2303, %v2335
        %v2368 = vadd.f32 %v2304, %v2336
        %v2369 = vadd.f32 %v2305, %v2337
        %v2370 = vadd.f32 %v2306, %v2338
        %v2371 = vadd.f32 %v2307, %v2339
        %v2372 = vadd.f32 %v2308, %v2340
        %v2373 = vadd.f32 %v2309, %v2341
        %v2374 = vadd.f32 %v2310, %v2342
        %v2375 = vadd.f32 %v2311, %v2343
        %v2376 = vadd.f32 %v2312, %v2344
        %v2377 = vadd.f32 %v2313, %v2345
        %v2378 = vadd.f32 %v2314, %v2346
        %v2379 = vadd.f32 %v2315, %v2347
        %v2380 = vadd.f32 %v2316, %v2348
        %v2381 = vadd.f32 %v2317, %v2349
        %v2382 = vadd.f32 %v2318, %v2350
        %v2383 = vadd.f32 %v2319, %v2351
        %v2384 = vadd.f32 %v2320, %v2352
        %v2385 = vadd.f32 %v2321, %v2353
        %v2386 = vadd.f32 %v2322, %v2354
        %v2387 = vadd.f32 %v2323, %v2355
        %v2388 = vadd.f32 %v2324, %v2356
        %v2389 = vadd.f32 %v2325, %v2357
        %s2390 = scalar_lea.vmem [#allocation2], 1536
        %v2391 = vld [vmem:[%s2390] sm:$0xff]
        %v2392 = vld [vmem:[%s2390 + $0x8] sm:$0xff]
        %v2393 = vld [vmem:[%s2390 + $0x10] sm:$0xff]
        %v2394 = vld [vmem:[%s2390 + $0x18] sm:$0xff]
        %v2395 = vld [vmem:[%s2390 + $0x20] sm:$0xff]
        %v2396 = vld [vmem:[%s2390 + $0x28] sm:$0xff]
        %v2397 = vld [vmem:[%s2390 + $0x30] sm:$0xff]
        %v2398 = vld [vmem:[%s2390 + $0x38] sm:$0xff]
        %v2399 = vld [vmem:[%s2390 + $0x40] sm:$0xff]
        %v2400 = vld [vmem:[%s2390 + $0x48] sm:$0xff]
        %v2401 = vld [vmem:[%s2390 + $0x50] sm:$0xff]
        %v2402 = vld [vmem:[%s2390 + $0x58] sm:$0xff]
        %v2403 = vld [vmem:[%s2390 + $0x60] sm:$0xff]
        %v2404 = vld [vmem:[%s2390 + $0x68] sm:$0xff]
        %v2405 = vld [vmem:[%s2390 + $0x70] sm:$0xff]
        %v2406 = vld [vmem:[%s2390 + $0x78] sm:$0xff]
        %v2407 = vld [vmem:[%s2390 + $0x80] sm:$0xff]
        %v2408 = vld [vmem:[%s2390 + $0x88] sm:$0xff]
        %v2409 = vld [vmem:[%s2390 + $0x90] sm:$0xff]
        %v2410 = vld [vmem:[%s2390 + $0x98] sm:$0xff]
        %v2411 = vld [vmem:[%s2390 + $0xa0] sm:$0xff]
        %v2412 = vld [vmem:[%s2390 + $0xa8] sm:$0xff]
        %v2413 = vld [vmem:[%s2390 + $0xb0] sm:$0xff]
        %v2414 = vld [vmem:[%s2390 + $0xb8] sm:$0xff]
        %v2415 = vld [vmem:[%s2390 + $0xc0] sm:$0xff]
        %v2416 = vld [vmem:[%s2390 + $0xc8] sm:$0xff]
        %v2417 = vld [vmem:[%s2390 + $0xd0] sm:$0xff]
        %v2418 = vld [vmem:[%s2390 + $0xd8] sm:$0xff]
        %v2419 = vld [vmem:[%s2390 + $0xe0] sm:$0xff]
        %v2420 = vld [vmem:[%s2390 + $0xe8] sm:$0xff]
        %v2421 = vld [vmem:[%s2390 + $0xf0] sm:$0xff]
        %v2422 = vld [vmem:[%s2390 + $0xf8] sm:$0xff]
        %v2423 = vld [vmem:[%s2390 + $0x100] sm:$0xff]
        %v2424 = vld [vmem:[%s2390 + $0x108] sm:$0xff]
        %v2425 = vld [vmem:[%s2390 + $0x110] sm:$0xff]
        %v2426 = vld [vmem:[%s2390 + $0x118] sm:$0xff]
        %v2427 = vld [vmem:[%s2390 + $0x120] sm:$0xff]
        %v2428 = vld [vmem:[%s2390 + $0x128] sm:$0xff]
        %v2429 = vld [vmem:[%s2390 + $0x130] sm:$0xff]
        %v2430 = vld [vmem:[%s2390 + $0x138] sm:$0xff]
        %v2431 = vld [vmem:[%s2390 + $0x140] sm:$0xff]
        %v2432 = vld [vmem:[%s2390 + $0x148] sm:$0xff]
        %v2433 = vld [vmem:[%s2390 + $0x150] sm:$0xff]
        %v2434 = vld [vmem:[%s2390 + $0x158] sm:$0xff]
        %v2435 = vld [vmem:[%s2390 + $0x160] sm:$0xff]
        %v2436 = vld [vmem:[%s2390 + $0x168] sm:$0xff]
        %v2437 = vld [vmem:[%s2390 + $0x170] sm:$0xff]
        %v2438 = vld [vmem:[%s2390 + $0x178] sm:$0xff]
        %v2439 = vld [vmem:[%s2390 + $0x180] sm:$0xff]
        %v2440 = vld [vmem:[%s2390 + $0x188] sm:$0xff]
        %v2441 = vld [vmem:[%s2390 + $0x190] sm:$0xff]
        %v2442 = vld [vmem:[%s2390 + $0x198] sm:$0xff]
        %v2443 = vld [vmem:[%s2390 + $0x1a0] sm:$0xff]
        %v2444 = vld [vmem:[%s2390 + $0x1a8] sm:$0xff]
        %v2445 = vld [vmem:[%s2390 + $0x1b0] sm:$0xff]
        %v2446 = vld [vmem:[%s2390 + $0x1b8] sm:$0xff]
        %v2447 = vld [vmem:[%s2390 + $0x1c0] sm:$0xff]
        %v2448 = vld [vmem:[%s2390 + $0x1c8] sm:$0xff]
        %v2449 = vld [vmem:[%s2390 + $0x1d0] sm:$0xff]
        %v2450 = vld [vmem:[%s2390 + $0x1d8] sm:$0xff]
        %v2451 = vld [vmem:[%s2390 + $0x1e0] sm:$0xff]
        %v2452 = vld [vmem:[%s2390 + $0x1e8] sm:$0xff]
        %v2453 = vld [vmem:[%s2390 + $0x1f0] sm:$0xff]
        %v2454 = vld [vmem:[%s2390 + $0x1f8] sm:$0xff]
        %v2455 = vld [vmem:[%s2390 + $0x200] sm:$0xff]
        %v2456 = vld [vmem:[%s2390 + $0x208] sm:$0xff]
        %v2457 = vld [vmem:[%s2390 + $0x210] sm:$0xff]
        %v2458 = vld [vmem:[%s2390 + $0x218] sm:$0xff]
        %v2459 = vld [vmem:[%s2390 + $0x220] sm:$0xff]
        %v2460 = vld [vmem:[%s2390 + $0x228] sm:$0xff]
        %v2461 = vld [vmem:[%s2390 + $0x230] sm:$0xff]
        %v2462 = vld [vmem:[%s2390 + $0x238] sm:$0xff]
        %v2463 = vld [vmem:[%s2390 + $0x240] sm:$0xff]
        %v2464 = vld [vmem:[%s2390 + $0x248] sm:$0xff]
        %v2465 = vld [vmem:[%s2390 + $0x250] sm:$0xff]
        %v2466 = vld [vmem:[%s2390 + $0x258] sm:$0xff]
        %v2467 = vld [vmem:[%s2390 + $0x260] sm:$0xff]
        %v2468 = vld [vmem:[%s2390 + $0x268] sm:$0xff]
        %v2469 = vld [vmem:[%s2390 + $0x270] sm:$0xff]
        %v2470 = vld [vmem:[%s2390 + $0x278] sm:$0xff]
        %v2471 = vld [vmem:[%s2390 + $0x280] sm:$0xff]
        %v2472 = vld [vmem:[%s2390 + $0x288] sm:$0xff]
        %v2473 = vld [vmem:[%s2390 + $0x290] sm:$0xff]
        %v2474 = vld [vmem:[%s2390 + $0x298] sm:$0xff]
        %v2475 = vld [vmem:[%s2390 + $0x2a0] sm:$0xff]
        %v2476 = vld [vmem:[%s2390 + $0x2a8] sm:$0xff]
        %v2477 = vld [vmem:[%s2390 + $0x2b0] sm:$0xff]
        %v2478 = vld [vmem:[%s2390 + $0x2b8] sm:$0xff]
        %v2479 = vld [vmem:[%s2390 + $0x2c0] sm:$0xff]
        %v2480 = vld [vmem:[%s2390 + $0x2c8] sm:$0xff]
        %v2481 = vld [vmem:[%s2390 + $0x2d0] sm:$0xff]
        %v2482 = vld [vmem:[%s2390 + $0x2d8] sm:$0xff]
        %v2483 = vld [vmem:[%s2390 + $0x2e0] sm:$0xff]
        %v2484 = vld [vmem:[%s2390 + $0x2e8] sm:$0xff]
        %v2485 = vld [vmem:[%s2390 + $0x2f0] sm:$0xff]
        %v2486 = vld [vmem:[%s2390 + $0x2f8] sm:$0xff]
        %v2487 = vpack.c.bf16 %v2366, %v2358
        %v2488 = vpack.c.bf16 %v2367, %v2359
        %v2489 = vpack.c.bf16 %v2368, %v2360
        %v2490 = vpack.c.bf16 %v2369, %v2361
        %v2491 = vpack.c.bf16 %v2370, %v2362
        %v2492 = vpack.c.bf16 %v2371, %v2363
        %v2493 = vpack.c.bf16 %v2372, %v2364
        %v2494 = vpack.c.bf16 %v2373, %v2365
        %v2495 = vpack.c.bf16 %v2382, %v2374
        %v2496 = vpack.c.bf16 %v2383, %v2375
        %v2497 = vpack.c.bf16 %v2384, %v2376
        %v2498 = vpack.c.bf16 %v2385, %v2377
        %v2499 = vpack.c.bf16 %v2386, %v2378
        %v2500 = vpack.c.bf16 %v2387, %v2379
        %v2501 = vpack.c.bf16 %v2388, %v2380
        %v2502 = vpack.c.bf16 %v2389, %v2381
        %2503 = vmatprep.subr.bf16.mxu0 %v2488
        %2504 = vmatpush1.bf16.msra.mxu0 %v2487
        %2505 = vmatprep.subr.bf16.mxu0 %v2496
        %2506 = vmatpush1.bf16.msra.mxu0 %v2495
        %2507 = vmatprep.subr.bf16.mxu0 0
        %2508 = vmatpush1.bf16.msra.mxu0 0
        %2509 = vmatprep.subr.bf16.mxu0 0
        %2510 = vmatpush1.bf16.msra.mxu0 0
        %2511 = vmatprep.subr.bf16.mxu0 0
        %2512 = vmatpush1.bf16.msra.mxu0 0
        %2513 = vmatprep.subr.bf16.mxu0 0
        %2514 = vmatpush1.bf16.msra.mxu0 0
        %2515 = vmatprep.subr.bf16.mxu0 0
        %2516 = vmatpush1.bf16.msra.mxu0 0
        %2517 = vmatprep.subr.bf16.mxu0 0
        %2518 = vmatpush1.bf16.msra.mxu0 0
        %2519 = vmatprep.subr.bf16.mxu0 0
        %2520 = vmatpush1.bf16.msra.mxu0 0
        %2521 = vmatprep.subr.bf16.mxu0 0
        %2522 = vmatpush1.bf16.msra.mxu0 0
        %2523 = vmatprep.subr.bf16.mxu0 0
        %2524 = vmatpush1.bf16.msra.mxu0 0
        %2525 = vmatprep.subr.bf16.mxu0 0
        %2526 = vmatpush1.bf16.msra.mxu0 0
        %2527 = vmatprep.subr.bf16.mxu0 0
        %2528 = vmatpush1.bf16.msra.mxu0 0
        %2529 = vmatprep.subr.bf16.mxu0 0
        %2530 = vmatpush1.bf16.msra.mxu0 0
        %2531 = vmatprep.subr.bf16.mxu0 0
        %2532 = vmatpush1.bf16.msra.mxu0 0
        %2533 = vmatprep.subr.bf16.mxu0 0
        %2534 = vmatpush1.bf16.msra.mxu0 0
        %2535 = vmatprep.mubr.bf16.mxu0 0
        %2536 = vmatmul.mubr.bf16.gmra.mrb[0].mxu0 %v391
        %v2537 = vpop.f32.mrb[0].mxu0
        %v2538 = vadd.f32 0.0, %v2537
        %v2539 = vpop.f32.mrb[0].mxu0
        %v2540 = vadd.f32 0.0, %v2539
        %v2541 = vpop.f32.mrb[0].mxu0
        %v2542 = vadd.f32 0.0, %v2541
        %v2543 = vpop.f32.mrb[0].mxu0
        %v2544 = vadd.f32 0.0, %v2543
        %2545 = vmatprep.mubr.bf16.mxu0 0
        %2546 = vmatmul.mubr.bf16.gmra.mrb[0].mxu0 %v394
        %v2547 = vpop.f32.mrb[0].mxu0
        %v2548 = vadd.f32 0.0, %v2547
        %v2549 = vpop.f32.mrb[0].mxu0
        %v2550 = vadd.f32 0.0, %v2549
        %v2551 = vpop.f32.mrb[0].mxu0
        %v2552 = vadd.f32 0.0, %v2551
        %v2553 = vpop.f32.mrb[0].mxu0
        %v2554 = vadd.f32 0.0, %v2553
        %2555 = vmatprep.mubr.bf16.mxu0 0
        %2556 = vmatmul.mubr.bf16.gmra.mrb[0].mxu0 %v397
        %v2557 = vpop.f32.mrb[0].mxu0
        %v2558 = vadd.f32 0.0, %v2557
        %v2559 = vpop.f32.mrb[0].mxu0
        %v2560 = vadd.f32 0.0, %v2559
        %v2561 = vpop.f32.mrb[0].mxu0
        %v2562 = vadd.f32 0.0, %v2561
        %v2563 = vpop.f32.mrb[0].mxu0
        %v2564 = vadd.f32 0.0, %v2563
        %2565 = vmatprep.mubr.bf16.mxu0 0
        %2566 = vmatmul.mubr.bf16.gmra.mrb[0].mxu0 %v400
        %v2567 = vpop.f32.mrb[0].mxu0
        %v2568 = vadd.f32 0.0, %v2567
        %v2569 = vpop.f32.mrb[0].mxu0
        %v2570 = vadd.f32 0.0, %v2569
        %v2571 = vpop.f32.mrb[0].mxu0
        %v2572 = vadd.f32 0.0, %v2571
        %v2573 = vpop.f32.mrb[0].mxu0
        %v2574 = vadd.f32 0.0, %v2573
        %2575 = vmatprep.mubr.bf16.mxu0 0
        %2576 = vmatmul.mubr.bf16.gmra.mrb[0].mxu0 %v403
        %v2577 = vpop.f32.mrb[0].mxu0
        %v2578 = vadd.f32 0.0, %v2577
        %v2579 = vpop.f32.mrb[0].mxu0
        %v2580 = vadd.f32 0.0, %v2579
        %v2581 = vpop.f32.mrb[0].mxu0
        %v2582 = vadd.f32 0.0, %v2581
        %v2583 = vpop.f32.mrb[0].mxu0
        %v2584 = vadd.f32 0.0, %v2583
        %2585 = vmatprep.mubr.bf16.mxu0 0
        %2586 = vmatmul.mubr.bf16.gmra.mrb[0].mxu0 %v406
        %v2587 = vpop.f32.mrb[0].mxu0
        %v2588 = vadd.f32 0.0, %v2587
        %v2589 = vpop.f32.mrb[0].mxu0
        %v2590 = vadd.f32 0.0, %v2589
        %v2591 = vpop.f32.mrb[0].mxu0
        %v2592 = vadd.f32 0.0, %v2591
        %v2593 = vpop.f32.mrb[0].mxu0
        %v2594 = vadd.f32 0.0, %v2593
        %2595 = vdwg.mxu0
        %2596 = vmatprep.subr.bf16.mxu0 %v2490
        %2597 = vmatpush1.bf16.msra.mxu0 %v2489
        %2598 = vmatprep.subr.bf16.mxu0 %v2498
        %2599 = vmatpush1.bf16.msra.mxu0 %v2497
        %2600 = vmatprep.subr.bf16.mxu0 0
        %2601 = vmatpush1.bf16.msra.mxu0 0
        %2602 = vmatprep.subr.bf16.mxu0 0
        %2603 = vmatpush1.bf16.msra.mxu0 0
        %2604 = vmatprep.subr.bf16.mxu0 0
        %2605 = vmatpush1.bf16.msra.mxu0 0
        %2606 = vmatprep.subr.bf16.mxu0 0
        %2607 = vmatpush1.bf16.msra.mxu0 0
        %2608 = vmatprep.subr.bf16.mxu0 0
        %2609 = vmatpush1.bf16.msra.mxu0 0
        %2610 = vmatprep.subr.bf16.mxu0 0
        %2611 = vmatpush1.bf16.msra.mxu0 0
        %2612 = vmatprep.subr.bf16.mxu0 0
        %2613 = vmatpush1.bf16.msra.mxu0 0
        %2614 = vmatprep.subr.bf16.mxu0 0
        %2615 = vmatpush1.bf16.msra.mxu0 0
        %2616 = vmatprep.subr.bf16.mxu0 0
        %2617 = vmatpush1.bf16.msra.mxu0 0
        %2618 = vmatprep.subr.bf16.mxu0 0
        %2619 = vmatpush1.bf16.msra.mxu0 0
        %2620 = vmatprep.subr.bf16.mxu0 0
        %2621 = vmatpush1.bf16.msra.mxu0 0
        %2622 = vmatprep.subr.bf16.mxu0 0
        %2623 = vmatpush1.bf16.msra.mxu0 0
        %2624 = vmatprep.subr.bf16.mxu0 0
        %2625 = vmatpush1.bf16.msra.mxu0 0
        %2626 = vmatprep.subr.bf16.mxu0 0
        %2627 = vmatpush1.bf16.msra.mxu0 0
        %2628 = vmatprep.mubr.bf16.mxu0 0
        %2629 = vmatmul.mubr.bf16.gmra.mrb[0].mxu0 %v391
        %v2630 = vpop.f32.mrb[0].mxu0
        %v2631 = vadd.f32 0.0, %v2630
        %v2632 = vpop.f32.mrb[0].mxu0
        %v2633 = vadd.f32 0.0, %v2632
        %v2634 = vpop.f32.mrb[0].mxu0
        %v2635 = vadd.f32 0.0, %v2634
        %v2636 = vpop.f32.mrb[0].mxu0
        %v2637 = vadd.f32 0.0, %v2636
        %2638 = vmatprep.mubr.bf16.mxu0 0
        %2639 = vmatmul.mubr.bf16.gmra.mrb[0].mxu0 %v394
        %v2640 = vpop.f32.mrb[0].mxu0
        %v2641 = vadd.f32 0.0, %v2640
        %v2642 = vpop.f32.mrb[0].mxu0
        %v2643 = vadd.f32 0.0, %v2642
        %v2644 = vpop.f32.mrb[0].mxu0
        %v2645 = vadd.f32 0.0, %v2644
        %v2646 = vpop.f32.mrb[0].mxu0
        %v2647 = vadd.f32 0.0, %v2646
        %2648 = vmatprep.mubr.bf16.mxu0 0
        %2649 = vmatmul.mubr.bf16.gmra.mrb[0].mxu0 %v397
        %v2650 = vpop.f32.mrb[0].mxu0
        %v2651 = vadd.f32 0.0, %v2650
        %v2652 = vpop.f32.mrb[0].mxu0
        %v2653 = vadd.f32 0.0, %v2652
        %v2654 = vpop.f32.mrb[0].mxu0
        %v2655 = vadd.f32 0.0, %v2654
        %v2656 = vpop.f32.mrb[0].mxu0
        %v2657 = vadd.f32 0.0, %v2656
        %2658 = vmatprep.mubr.bf16.mxu0 0
        %2659 = vmatmul.mubr.bf16.gmra.mrb[0].mxu0 %v400
        %v2660 = vpop.f32.mrb[0].mxu0
        %v2661 = vadd.f32 0.0, %v2660
        %v2662 = vpop.f32.mrb[0].mxu0
        %v2663 = vadd.f32 0.0, %v2662
        %v2664 = vpop.f32.mrb[0].mxu0
        %v2665 = vadd.f32 0.0, %v2664
        %v2666 = vpop.f32.mrb[0].mxu0
        %v2667 = vadd.f32 0.0, %v2666
        %2668 = vmatprep.mubr.bf16.mxu0 0
        %2669 = vmatmul.mubr.bf16.gmra.mrb[0].mxu0 %v403
        %v2670 = vpop.f32.mrb[0].mxu0
        %v2671 = vadd.f32 0.0, %v2670
        %v2672 = vpop.f32.mrb[0].mxu0
        %v2673 = vadd.f32 0.0, %v2672
        %v2674 = vpop.f32.mrb[0].mxu0
        %v2675 = vadd.f32 0.0, %v2674
        %v2676 = vpop.f32.mrb[0].mxu0
        %v2677 = vadd.f32 0.0, %v2676
        %2678 = vmatprep.mubr.bf16.mxu0 0
        %2679 = vmatmul.mubr.bf16.gmra.mrb[0].mxu0 %v406
        %v2680 = vpop.f32.mrb[0].mxu0
        %v2681 = vadd.f32 0.0, %v2680
        %v2682 = vpop.f32.mrb[0].mxu0
        %v2683 = vadd.f32 0.0, %v2682
        %v2684 = vpop.f32.mrb[0].mxu0
        %v2685 = vadd.f32 0.0, %v2684
        %v2686 = vpop.f32.mrb[0].mxu0
        %v2687 = vadd.f32 0.0, %v2686
        %2688 = vdwg.mxu0
        %2689 = vmatprep.subr.bf16.mxu0 %v2492
        %2690 = vmatpush1.bf16.msra.mxu0 %v2491
        %2691 = vmatprep.subr.bf16.mxu0 %v2500
        %2692 = vmatpush1.bf16.msra.mxu0 %v2499
        %2693 = vmatprep.subr.bf16.mxu0 0
        %2694 = vmatpush1.bf16.msra.mxu0 0
        %2695 = vmatprep.subr.bf16.mxu0 0
        %2696 = vmatpush1.bf16.msra.mxu0 0
        %2697 = vmatprep.subr.bf16.mxu0 0
        %2698 = vmatpush1.bf16.msra.mxu0 0
        %2699 = vmatprep.subr.bf16.mxu0 0
        %2700 = vmatpush1.bf16.msra.mxu0 0
        %2701 = vmatprep.subr.bf16.mxu0 0
        %2702 = vmatpush1.bf16.msra.mxu0 0
        %2703 = vmatprep.subr.bf16.mxu0 0
        %2704 = vmatpush1.bf16.msra.mxu0 0
        %2705 = vmatprep.subr.bf16.mxu0 0
        %2706 = vmatpush1.bf16.msra.mxu0 0
        %2707 = vmatprep.subr.bf16.mxu0 0
        %2708 = vmatpush1.bf16.msra.mxu0 0
        %2709 = vmatprep.subr.bf16.mxu0 0
        %2710 = vmatpush1.bf16.msra.mxu0 0
        %2711 = vmatprep.subr.bf16.mxu0 0
        %2712 = vmatpush1.bf16.msra.mxu0 0
        %2713 = vmatprep.subr.bf16.mxu0 0
        %2714 = vmatpush1.bf16.msra.mxu0 0
        %2715 = vmatprep.subr.bf16.mxu0 0
        %2716 = vmatpush1.bf16.msra.mxu0 0
        %2717 = vmatprep.subr.bf16.mxu0 0
        %2718 = vmatpush1.bf16.msra.mxu0 0
        %2719 = vmatprep.subr.bf16.mxu0 0
        %2720 = vmatpush1.bf16.msra.mxu0 0
        %2721 = vmatprep.mubr.bf16.mxu0 0
        %2722 = vmatmul.mubr.bf16.gmra.mrb[0].mxu0 %v391
        %v2723 = vpop.f32.mrb[0].mxu0
        %v2724 = vadd.f32 0.0, %v2723
        %v2725 = vpop.f32.mrb[0].mxu0
        %v2726 = vadd.f32 0.0, %v2725
        %v2727 = vpop.f32.mrb[0].mxu0
        %v2728 = vadd.f32 0.0, %v2727
        %v2729 = vpop.f32.mrb[0].mxu0
        %v2730 = vadd.f32 0.0, %v2729
        %2731 = vmatprep.mubr.bf16.mxu0 0
        %2732 = vmatmul.mubr.bf16.gmra.mrb[0].mxu0 %v394
        %v2733 = vpop.f32.mrb[0].mxu0
        %v2734 = vadd.f32 0.0, %v2733
        %v2735 = vpop.f32.mrb[0].mxu0
        %v2736 = vadd.f32 0.0, %v2735
        %v2737 = vpop.f32.mrb[0].mxu0
        %v2738 = vadd.f32 0.0, %v2737
        %v2739 = vpop.f32.mrb[0].mxu0
        %v2740 = vadd.f32 0.0, %v2739
        %2741 = vmatprep.mubr.bf16.mxu0 0
        %2742 = vmatmul.mubr.bf16.gmra.mrb[0].mxu0 %v397
        %v2743 = vpop.f32.mrb[0].mxu0
        %v2744 = vadd.f32 0.0, %v2743
        %v2745 = vpop.f32.mrb[0].mxu0
        %v2746 = vadd.f32 0.0, %v2745
        %v2747 = vpop.f32.mrb[0].mxu0
        %v2748 = vadd.f32 0.0, %v2747
        %v2749 = vpop.f32.mrb[0].mxu0
        %v2750 = vadd.f32 0.0, %v2749
        %2751 = vmatprep.mubr.bf16.mxu0 0
        %2752 = vmatmul.mubr.bf16.gmra.mrb[0].mxu0 %v400
        %v2753 = vpop.f32.mrb[0].mxu0
        %v2754 = vadd.f32 0.0, %v2753
        %v2755 = vpop.f32.mrb[0].mxu0
        %v2756 = vadd.f32 0.0, %v2755
        %v2757 = vpop.f32.mrb[0].mxu0
        %v2758 = vadd.f32 0.0, %v2757
        %v2759 = vpop.f32.mrb[0].mxu0
        %v2760 = vadd.f32 0.0, %v2759
        %2761 = vmatprep.mubr.bf16.mxu0 0
        %2762 = vmatmul.mubr.bf16.gmra.mrb[0].mxu0 %v403
        %v2763 = vpop.f32.mrb[0].mxu0
        %v2764 = vadd.f32 0.0, %v2763
        %v2765 = vpop.f32.mrb[0].mxu0
        %v2766 = vadd.f32 0.0, %v2765
        %v2767 = vpop.f32.mrb[0].mxu0
        %v2768 = vadd.f32 0.0, %v2767
        %v2769 = vpop.f32.mrb[0].mxu0
        %v2770 = vadd.f32 0.0, %v2769
        %2771 = vmatprep.mubr.bf16.mxu0 0
        %2772 = vmatmul.mubr.bf16.gmra.mrb[0].mxu0 %v406
        %v2773 = vpop.f32.mrb[0].mxu0
        %v2774 = vadd.f32 0.0, %v2773
        %v2775 = vpop.f32.mrb[0].mxu0
        %v2776 = vadd.f32 0.0, %v2775
        %v2777 = vpop.f32.mrb[0].mxu0
        %v2778 = vadd.f32 0.0, %v2777
        %v2779 = vpop.f32.mrb[0].mxu0
        %v2780 = vadd.f32 0.0, %v2779
        %2781 = vdwg.mxu0
        %2782 = vmatprep.subr.bf16.mxu0 %v2494
        %2783 = vmatpush1.bf16.msra.mxu0 %v2493
        %2784 = vmatprep.subr.bf16.mxu0 %v2502
        %2785 = vmatpush1.bf16.msra.mxu0 %v2501
        %2786 = vmatprep.subr.bf16.mxu0 0
        %2787 = vmatpush1.bf16.msra.mxu0 0
        %2788 = vmatprep.subr.bf16.mxu0 0
        %2789 = vmatpush1.bf16.msra.mxu0 0
        %2790 = vmatprep.subr.bf16.mxu0 0
        %2791 = vmatpush1.bf16.msra.mxu0 0
        %2792 = vmatprep.subr.bf16.mxu0 0
        %2793 = vmatpush1.bf16.msra.mxu0 0
        %2794 = vmatprep.subr.bf16.mxu0 0
        %2795 = vmatpush1.bf16.msra.mxu0 0
        %2796 = vmatprep.subr.bf16.mxu0 0
        %2797 = vmatpush1.bf16.msra.mxu0 0
        %2798 = vmatprep.subr.bf16.mxu0 0
        %2799 = vmatpush1.bf16.msra.mxu0 0
        %2800 = vmatprep.subr.bf16.mxu0 0
        %2801 = vmatpush1.bf16.msra.mxu0 0
        %2802 = vmatprep.subr.bf16.mxu0 0
        %2803 = vmatpush1.bf16.msra.mxu0 0
        %2804 = vmatprep.subr.bf16.mxu0 0
        %2805 = vmatpush1.bf16.msra.mxu0 0
        %2806 = vmatprep.subr.bf16.mxu0 0
        %2807 = vmatpush1.bf16.msra.mxu0 0
        %2808 = vmatprep.subr.bf16.mxu0 0
        %2809 = vmatpush1.bf16.msra.mxu0 0
        %2810 = vmatprep.subr.bf16.mxu0 0
        %2811 = vmatpush1.bf16.msra.mxu0 0
        %2812 = vmatprep.subr.bf16.mxu0 0
        %2813 = vmatpush1.bf16.msra.mxu0 0
        %2814 = vmatprep.mubr.bf16.mxu0 0
        %2815 = vmatmul.mubr.bf16.gmra.mrb[0].mxu0 %v391
        %v2816 = vpop.f32.mrb[0].mxu0
        %v2817 = vadd.f32 0.0, %v2816
        %v2818 = vpop.f32.mrb[0].mxu0
        %v2819 = vadd.f32 0.0, %v2818
        %v2820 = vpop.f32.mrb[0].mxu0
        %v2821 = vadd.f32 0.0, %v2820
        %v2822 = vpop.f32.mrb[0].mxu0
        %v2823 = vadd.f32 0.0, %v2822
        %2824 = vmatprep.mubr.bf16.mxu0 0
        %2825 = vmatmul.mubr.bf16.gmra.mrb[0].mxu0 %v394
        %v2826 = vpop.f32.mrb[0].mxu0
        %v2827 = vadd.f32 0.0, %v2826
        %v2828 = vpop.f32.mrb[0].mxu0
        %v2829 = vadd.f32 0.0, %v2828
        %v2830 = vpop.f32.mrb[0].mxu0
        %v2831 = vadd.f32 0.0, %v2830
        %v2832 = vpop.f32.mrb[0].mxu0
        %v2833 = vadd.f32 0.0, %v2832
        %2834 = vmatprep.mubr.bf16.mxu0 0
        %2835 = vmatmul.mubr.bf16.gmra.mrb[0].mxu0 %v397
        %v2836 = vpop.f32.mrb[0].mxu0
        %v2837 = vadd.f32 0.0, %v2836
        %v2838 = vpop.f32.mrb[0].mxu0
        %v2839 = vadd.f32 0.0, %v2838
        %v2840 = vpop.f32.mrb[0].mxu0
        %v2841 = vadd.f32 0.0, %v2840
        %v2842 = vpop.f32.mrb[0].mxu0
        %v2843 = vadd.f32 0.0, %v2842
        %2844 = vmatprep.mubr.bf16.mxu0 0
        %2845 = vmatmul.mubr.bf16.gmra.mrb[0].mxu0 %v400
        %v2846 = vpop.f32.mrb[0].mxu0
        %v2847 = vadd.f32 0.0, %v2846
        %v2848 = vpop.f32.mrb[0].mxu0
        %v2849 = vadd.f32 0.0, %v2848
        %v2850 = vpop.f32.mrb[0].mxu0
        %v2851 = vadd.f32 0.0, %v2850
        %v2852 = vpop.f32.mrb[0].mxu0
        %v2853 = vadd.f32 0.0, %v2852
        %2854 = vmatprep.mubr.bf16.mxu0 0
        %2855 = vmatmul.mubr.bf16.gmra.mrb[0].mxu0 %v403
        %v2856 = vpop.f32.mrb[0].mxu0
        %v2857 = vadd.f32 0.0, %v2856
        %v2858 = vpop.f32.mrb[0].mxu0
        %v2859 = vadd.f32 0.0, %v2858
        %v2860 = vpop.f32.mrb[0].mxu0
        %v2861 = vadd.f32 0.0, %v2860
        %v2862 = vpop.f32.mrb[0].mxu0
        %v2863 = vadd.f32 0.0, %v2862
        %2864 = vmatprep.mubr.bf16.mxu0 0
        %2865 = vmatmul.mubr.bf16.gmra.mrb[0].mxu0 %v406
        %v2866 = vpop.f32.mrb[0].mxu0
        %v2867 = vadd.f32 0.0, %v2866
        %v2868 = vpop.f32.mrb[0].mxu0
        %v2869 = vadd.f32 0.0, %v2868
        %v2870 = vpop.f32.mrb[0].mxu0
        %v2871 = vadd.f32 0.0, %v2870
        %v2872 = vpop.f32.mrb[0].mxu0
        %v2873 = vadd.f32 0.0, %v2872
        %2874 = vdwg.mxu0
        %v2875 = vadd.f32 %v2391, %v2538
        %v2876 = vadd.f32 %v2392, %v2540
        %v2877 = vadd.f32 %v2393, %v2631
        %v2878 = vadd.f32 %v2394, %v2633
        %v2879 = vadd.f32 %v2395, %v2724
        %v2880 = vadd.f32 %v2396, %v2726
        %v2881 = vadd.f32 %v2397, %v2817
        %v2882 = vadd.f32 %v2398, %v2819
        %v2883 = vadd.f32 %v2399, %v2542
        %v2884 = vadd.f32 %v2400, %v2544
        %v2885 = vadd.f32 %v2401, %v2635
        %v2886 = vadd.f32 %v2402, %v2637
        %v2887 = vadd.f32 %v2403, %v2728
        %v2888 = vadd.f32 %v2404, %v2730
        %v2889 = vadd.f32 %v2405, %v2821
        %v2890 = vadd.f32 %v2406, %v2823
        %v2891 = vadd.f32 %v2407, %v2548
        %v2892 = vadd.f32 %v2408, %v2550
        %v2893 = vadd.f32 %v2409, %v2641
        %v2894 = vadd.f32 %v2410, %v2643
        %v2895 = vadd.f32 %v2411, %v2734
        %v2896 = vadd.f32 %v2412, %v2736
        %v2897 = vadd.f32 %v2413, %v2827
        %v2898 = vadd.f32 %v2414, %v2829
        %v2899 = vadd.f32 %v2415, %v2552
        %v2900 = vadd.f32 %v2416, %v2554
        %v2901 = vadd.f32 %v2417, %v2645
        %v2902 = vadd.f32 %v2418, %v2647
        %v2903 = vadd.f32 %v2419, %v2738
        %v2904 = vadd.f32 %v2420, %v2740
        %v2905 = vadd.f32 %v2421, %v2831
        %v2906 = vadd.f32 %v2422, %v2833
        %v2907 = vxor.u32 %v2875, 2147483648
        %v2908 = vxor.u32 %v2876, 2147483648
        %v2909 = vxor.u32 %v2877, 2147483648
        %v2910 = vxor.u32 %v2878, 2147483648
        %v2911 = vxor.u32 %v2879, 2147483648
        %v2912 = vxor.u32 %v2880, 2147483648
        %v2913 = vxor.u32 %v2881, 2147483648
        %v2914 = vxor.u32 %v2882, 2147483648
        %v2915 = vxor.u32 %v2883, 2147483648
        %v2916 = vxor.u32 %v2884, 2147483648
        %v2917 = vxor.u32 %v2885, 2147483648
        %v2918 = vxor.u32 %v2886, 2147483648
        %v2919 = vxor.u32 %v2887, 2147483648
        %v2920 = vxor.u32 %v2888, 2147483648
        %v2921 = vxor.u32 %v2889, 2147483648
        %v2922 = vxor.u32 %v2890, 2147483648
        %v2923 = vxor.u32 %v2891, 2147483648
        %v2924 = vxor.u32 %v2892, 2147483648
        %v2925 = vxor.u32 %v2893, 2147483648
        %v2926 = vxor.u32 %v2894, 2147483648
        %v2927 = vxor.u32 %v2895, 2147483648
        %v2928 = vxor.u32 %v2896, 2147483648
        %v2929 = vxor.u32 %v2897, 2147483648
        %v2930 = vxor.u32 %v2898, 2147483648
        %v2931 = vxor.u32 %v2899, 2147483648
        %v2932 = vxor.u32 %v2900, 2147483648
        %v2933 = vxor.u32 %v2901, 2147483648
        %v2934 = vxor.u32 %v2902, 2147483648
        %v2935 = vxor.u32 %v2903, 2147483648
        %v2936 = vxor.u32 %v2904, 2147483648
        %v2937 = vxor.u32 %v2905, 2147483648
        %v2938 = vxor.u32 %v2906, 2147483648
        %v2939 = vmul.f32 %v2907, 1.442695
        %v2940 = vpow.pop %v2939
        %v2941 = vmul.f32 %v2908, 1.442695
        %v2942 = vpow.pop %v2941
        %v2943 = vmul.f32 %v2909, 1.442695
        %v2944 = vpow.pop %v2943
        %v2945 = vmul.f32 %v2910, 1.442695
        %v2946 = vpow.pop %v2945
        %v2947 = vmul.f32 %v2911, 1.442695
        %v2948 = vpow.pop %v2947
        %v2949 = vmul.f32 %v2912, 1.442695
        %v2950 = vpow.pop %v2949
        %v2951 = vmul.f32 %v2913, 1.442695
        %v2952 = vpow.pop %v2951
        %v2953 = vmul.f32 %v2914, 1.442695
        %v2954 = vpow.pop %v2953
        %v2955 = vmul.f32 %v2915, 1.442695
        %v2956 = vpow.pop %v2955
        %v2957 = vmul.f32 %v2916, 1.442695
        %v2958 = vpow.pop %v2957
        %v2959 = vmul.f32 %v2917, 1.442695
        %v2960 = vpow.pop %v2959
        %v2961 = vmul.f32 %v2918, 1.442695
        %v2962 = vpow.pop %v2961
        %v2963 = vmul.f32 %v2919, 1.442695
        %v2964 = vpow.pop %v2963
        %v2965 = vmul.f32 %v2920, 1.442695
        %v2966 = vpow.pop %v2965
        %v2967 = vmul.f32 %v2921, 1.442695
        %v2968 = vpow.pop %v2967
        %v2969 = vmul.f32 %v2922, 1.442695
        %v2970 = vpow.pop %v2969
        %v2971 = vmul.f32 %v2923, 1.442695
        %v2972 = vpow.pop %v2971
        %v2973 = vmul.f32 %v2924, 1.442695
        %v2974 = vpow.pop %v2973
        %v2975 = vmul.f32 %v2925, 1.442695
        %v2976 = vpow.pop %v2975
        %v2977 = vmul.f32 %v2926, 1.442695
        %v2978 = vpow.pop %v2977
        %v2979 = vmul.f32 %v2927, 1.442695
        %v2980 = vpow.pop %v2979
        %v2981 = vmul.f32 %v2928, 1.442695
        %v2982 = vpow.pop %v2981
        %v2983 = vmul.f32 %v2929, 1.442695
        %v2984 = vpow.pop %v2983
        %v2985 = vmul.f32 %v2930, 1.442695
        %v2986 = vpow.pop %v2985
        %v2987 = vmul.f32 %v2931, 1.442695
        %v2988 = vpow.pop %v2987
        %v2989 = vmul.f32 %v2932, 1.442695
        %v2990 = vpow.pop %v2989
        %v2991 = vmul.f32 %v2933, 1.442695
        %v2992 = vpow.pop %v2991
        %v2993 = vmul.f32 %v2934, 1.442695
        %v2994 = vpow.pop %v2993
        %v2995 = vmul.f32 %v2935, 1.442695
        %v2996 = vpow.pop %v2995
        %v2997 = vmul.f32 %v2936, 1.442695
        %v2998 = vpow.pop %v2997
        %v2999 = vmul.f32 %v2937, 1.442695
        %v3000 = vpow.pop %v2999
        %v3001 = vmul.f32 %v2938, 1.442695
        %v3002 = vpow.pop %v3001
        %v3003 = vadd.f32 %v2940, 1.0
        %v3004 = vadd.f32 %v2942, 1.0
        %v3005 = vadd.f32 %v2944, 1.0
        %v3006 = vadd.f32 %v2946, 1.0
        %v3007 = vadd.f32 %v2948, 1.0
        %v3008 = vadd.f32 %v2950, 1.0
        %v3009 = vadd.f32 %v2952, 1.0
        %v3010 = vadd.f32 %v2954, 1.0
        %v3011 = vadd.f32 %v2956, 1.0
        %v3012 = vadd.f32 %v2958, 1.0
        %v3013 = vadd.f32 %v2960, 1.0
        %v3014 = vadd.f32 %v2962, 1.0
        %v3015 = vadd.f32 %v2964, 1.0
        %v3016 = vadd.f32 %v2966, 1.0
        %v3017 = vadd.f32 %v2968, 1.0
        %v3018 = vadd.f32 %v2970, 1.0
        %v3019 = vadd.f32 %v2972, 1.0
        %v3020 = vadd.f32 %v2974, 1.0
        %v3021 = vadd.f32 %v2976, 1.0
        %v3022 = vadd.f32 %v2978, 1.0
        %v3023 = vadd.f32 %v2980, 1.0
        %v3024 = vadd.f32 %v2982, 1.0
        %v3025 = vadd.f32 %v2984, 1.0
        %v3026 = vadd.f32 %v2986, 1.0
        %v3027 = vadd.f32 %v2988, 1.0
        %v3028 = vadd.f32 %v2990, 1.0
        %v3029 = vadd.f32 %v2992, 1.0
        %v3030 = vadd.f32 %v2994, 1.0
        %v3031 = vadd.f32 %v2996, 1.0
        %v3032 = vadd.f32 %v2998, 1.0
        %v3033 = vadd.f32 %v3000, 1.0
        %v3034 = vadd.f32 %v3002, 1.0
        %v3035 = vrcp.pop %v3003
        %v3036 = vmul.f32 1.0, %v3035
        %v3037 = vrcp.pop %v3004
        %v3038 = vmul.f32 1.0, %v3037
        %v3039 = vrcp.pop %v3005
        %v3040 = vmul.f32 1.0, %v3039
        %v3041 = vrcp.pop %v3006
        %v3042 = vmul.f32 1.0, %v3041
        %v3043 = vrcp.pop %v3007
        %v3044 = vmul.f32 1.0, %v3043
        %v3045 = vrcp.pop %v3008
        %v3046 = vmul.f32 1.0, %v3045
        %v3047 = vrcp.pop %v3009
        %v3048 = vmul.f32 1.0, %v3047
        %v3049 = vrcp.pop %v3010
        %v3050 = vmul.f32 1.0, %v3049
        %v3051 = vrcp.pop %v3011
        %v3052 = vmul.f32 1.0, %v3051
        %v3053 = vrcp.pop %v3012
        %v3054 = vmul.f32 1.0, %v3053
        %v3055 = vrcp.pop %v3013
        %v3056 = vmul.f32 1.0, %v3055
        %v3057 = vrcp.pop %v3014
        %v3058 = vmul.f32 1.0, %v3057
        %v3059 = vrcp.pop %v3015
        %v3060 = vmul.f32 1.0, %v3059
        %v3061 = vrcp.pop %v3016
        %v3062 = vmul.f32 1.0, %v3061
        %v3063 = vrcp.pop %v3017
        %v3064 = vmul.f32 1.0, %v3063
        %v3065 = vrcp.pop %v3018
        %v3066 = vmul.f32 1.0, %v3065
        %v3067 = vrcp.pop %v3019
        %v3068 = vmul.f32 1.0, %v3067
        %v3069 = vrcp.pop %v3020
        %v3070 = vmul.f32 1.0, %v3069
        %v3071 = vrcp.pop %v3021
        %v3072 = vmul.f32 1.0, %v3071
        %v3073 = vrcp.pop %v3022
        %v3074 = vmul.f32 1.0, %v3073
        %v3075 = vrcp.pop %v3023
        %v3076 = vmul.f32 1.0, %v3075
        %v3077 = vrcp.pop %v3024
        %v3078 = vmul.f32 1.0, %v3077
        %v3079 = vrcp.pop %v3025
        %v3080 = vmul.f32 1.0, %v3079
        %v3081 = vrcp.pop %v3026
        %v3082 = vmul.f32 1.0, %v3081
        %v3083 = vrcp.pop %v3027
        %v3084 = vmul.f32 1.0, %v3083
        %v3085 = vrcp.pop %v3028
        %v3086 = vmul.f32 1.0, %v3085
        %v3087 = vrcp.pop %v3029
        %v3088 = vmul.f32 1.0, %v3087
        %v3089 = vrcp.pop %v3030
        %v3090 = vmul.f32 1.0, %v3089
        %v3091 = vrcp.pop %v3031
        %v3092 = vmul.f32 1.0, %v3091
        %v3093 = vrcp.pop %v3032
        %v3094 = vmul.f32 1.0, %v3093
        %v3095 = vrcp.pop %v3033
        %v3096 = vmul.f32 1.0, %v3095
        %v3097 = vrcp.pop %v3034
        %v3098 = vmul.f32 1.0, %v3097
        %v3099 = vadd.f32 %v2423, %v2558
        %v3100 = vadd.f32 %v2424, %v2560
        %v3101 = vadd.f32 %v2425, %v2651
        %v3102 = vadd.f32 %v2426, %v2653
        %v3103 = vadd.f32 %v2427, %v2744
        %v3104 = vadd.f32 %v2428, %v2746
        %v3105 = vadd.f32 %v2429, %v2837
        %v3106 = vadd.f32 %v2430, %v2839
        %v3107 = vadd.f32 %v2431, %v2562
        %v3108 = vadd.f32 %v2432, %v2564
        %v3109 = vadd.f32 %v2433, %v2655
        %v3110 = vadd.f32 %v2434, %v2657
        %v3111 = vadd.f32 %v2435, %v2748
        %v3112 = vadd.f32 %v2436, %v2750
        %v3113 = vadd.f32 %v2437, %v2841
        %v3114 = vadd.f32 %v2438, %v2843
        %v3115 = vadd.f32 %v2439, %v2568
        %v3116 = vadd.f32 %v2440, %v2570
        %v3117 = vadd.f32 %v2441, %v2661
        %v3118 = vadd.f32 %v2442, %v2663
        %v3119 = vadd.f32 %v2443, %v2754
        %v3120 = vadd.f32 %v2444, %v2756
        %v3121 = vadd.f32 %v2445, %v2847
        %v3122 = vadd.f32 %v2446, %v2849
        %v3123 = vadd.f32 %v2447, %v2572
        %v3124 = vadd.f32 %v2448, %v2574
        %v3125 = vadd.f32 %v2449, %v2665
        %v3126 = vadd.f32 %v2450, %v2667
        %v3127 = vadd.f32 %v2451, %v2758
        %v3128 = vadd.f32 %v2452, %v2760
        %v3129 = vadd.f32 %v2453, %v2851
        %v3130 = vadd.f32 %v2454, %v2853
        %v3131 = vxor.u32 %v3099, 2147483648
        %v3132 = vxor.u32 %v3100, 2147483648
        %v3133 = vxor.u32 %v3101, 2147483648
        %v3134 = vxor.u32 %v3102, 2147483648
        %v3135 = vxor.u32 %v3103, 2147483648
        %v3136 = vxor.u32 %v3104, 2147483648
        %v3137 = vxor.u32 %v3105, 2147483648
        %v3138 = vxor.u32 %v3106, 2147483648
        %v3139 = vxor.u32 %v3107, 2147483648
        %v3140 = vxor.u32 %v3108, 2147483648
        %v3141 = vxor.u32 %v3109, 2147483648
        %v3142 = vxor.u32 %v3110, 2147483648
        %v3143 = vxor.u32 %v3111, 2147483648
        %v3144 = vxor.u32 %v3112, 2147483648
        %v3145 = vxor.u32 %v3113, 2147483648
        %v3146 = vxor.u32 %v3114, 2147483648
        %v3147 = vxor.u32 %v3115, 2147483648
        %v3148 = vxor.u32 %v3116, 2147483648
        %v3149 = vxor.u32 %v3117, 2147483648
        %v3150 = vxor.u32 %v3118, 2147483648
        %v3151 = vxor.u32 %v3119, 2147483648
        %v3152 = vxor.u32 %v3120, 2147483648
        %v3153 = vxor.u32 %v3121, 2147483648
        %v3154 = vxor.u32 %v3122, 2147483648
        %v3155 = vxor.u32 %v3123, 2147483648
        %v3156 = vxor.u32 %v3124, 2147483648
        %v3157 = vxor.u32 %v3125, 2147483648
        %v3158 = vxor.u32 %v3126, 2147483648
        %v3159 = vxor.u32 %v3127, 2147483648
        %v3160 = vxor.u32 %v3128, 2147483648
        %v3161 = vxor.u32 %v3129, 2147483648
        %v3162 = vxor.u32 %v3130, 2147483648
        %v3163 = vmul.f32 %v3131, 1.442695
        %v3164 = vpow.pop %v3163
        %v3165 = vmul.f32 %v3132, 1.442695
        %v3166 = vpow.pop %v3165
        %v3167 = vmul.f32 %v3133, 1.442695
        %v3168 = vpow.pop %v3167
        %v3169 = vmul.f32 %v3134, 1.442695
        %v3170 = vpow.pop %v3169
        %v3171 = vmul.f32 %v3135, 1.442695
        %v3172 = vpow.pop %v3171
        %v3173 = vmul.f32 %v3136, 1.442695
        %v3174 = vpow.pop %v3173
        %v3175 = vmul.f32 %v3137, 1.442695
        %v3176 = vpow.pop %v3175
        %v3177 = vmul.f32 %v3138, 1.442695
        %v3178 = vpow.pop %v3177
        %v3179 = vmul.f32 %v3139, 1.442695
        %v3180 = vpow.pop %v3179
        %v3181 = vmul.f32 %v3140, 1.442695
        %v3182 = vpow.pop %v3181
        %v3183 = vmul.f32 %v3141, 1.442695
        %v3184 = vpow.pop %v3183
        %v3185 = vmul.f32 %v3142, 1.442695
        %v3186 = vpow.pop %v3185
        %v3187 = vmul.f32 %v3143, 1.442695
        %v3188 = vpow.pop %v3187
        %v3189 = vmul.f32 %v3144, 1.442695
        %v3190 = vpow.pop %v3189
        %v3191 = vmul.f32 %v3145, 1.442695
        %v3192 = vpow.pop %v3191
        %v3193 = vmul.f32 %v3146, 1.442695
        %v3194 = vpow.pop %v3193
        %v3195 = vmul.f32 %v3147, 1.442695
        %v3196 = vpow.pop %v3195
        %v3197 = vmul.f32 %v3148, 1.442695
        %v3198 = vpow.pop %v3197
        %v3199 = vmul.f32 %v3149, 1.442695
        %v3200 = vpow.pop %v3199
        %v3201 = vmul.f32 %v3150, 1.442695
        %v3202 = vpow.pop %v3201
        %v3203 = vmul.f32 %v3151, 1.442695
        %v3204 = vpow.pop %v3203
        %v3205 = vmul.f32 %v3152, 1.442695
        %v3206 = vpow.pop %v3205
        %v3207 = vmul.f32 %v3153, 1.442695
        %v3208 = vpow.pop %v3207
        %v3209 = vmul.f32 %v3154, 1.442695
        %v3210 = vpow.pop %v3209
        %v3211 = vmul.f32 %v3155, 1.442695
        %v3212 = vpow.pop %v3211
        %v3213 = vmul.f32 %v3156, 1.442695
        %v3214 = vpow.pop %v3213
        %v3215 = vmul.f32 %v3157, 1.442695
        %v3216 = vpow.pop %v3215
        %v3217 = vmul.f32 %v3158, 1.442695
        %v3218 = vpow.pop %v3217
        %v3219 = vmul.f32 %v3159, 1.442695
        %v3220 = vpow.pop %v3219
        %v3221 = vmul.f32 %v3160, 1.442695
        %v3222 = vpow.pop %v3221
        %v3223 = vmul.f32 %v3161, 1.442695
        %v3224 = vpow.pop %v3223
        %v3225 = vmul.f32 %v3162, 1.442695
        %v3226 = vpow.pop %v3225
        %v3227 = vadd.f32 %v3164, 1.0
        %v3228 = vadd.f32 %v3166, 1.0
        %v3229 = vadd.f32 %v3168, 1.0
        %v3230 = vadd.f32 %v3170, 1.0
        %v3231 = vadd.f32 %v3172, 1.0
        %v3232 = vadd.f32 %v3174, 1.0
        %v3233 = vadd.f32 %v3176, 1.0
        %v3234 = vadd.f32 %v3178, 1.0
        %v3235 = vadd.f32 %v3180, 1.0
        %v3236 = vadd.f32 %v3182, 1.0
        %v3237 = vadd.f32 %v3184, 1.0
        %v3238 = vadd.f32 %v3186, 1.0
        %v3239 = vadd.f32 %v3188, 1.0
        %v3240 = vadd.f32 %v3190, 1.0
        %v3241 = vadd.f32 %v3192, 1.0
        %v3242 = vadd.f32 %v3194, 1.0
        %v3243 = vadd.f32 %v3196, 1.0
        %v3244 = vadd.f32 %v3198, 1.0
        %v3245 = vadd.f32 %v3200, 1.0
        %v3246 = vadd.f32 %v3202, 1.0
        %v3247 = vadd.f32 %v3204, 1.0
        %v3248 = vadd.f32 %v3206, 1.0
        %v3249 = vadd.f32 %v3208, 1.0
        %v3250 = vadd.f32 %v3210, 1.0
        %v3251 = vadd.f32 %v3212, 1.0
        %v3252 = vadd.f32 %v3214, 1.0
        %v3253 = vadd.f32 %v3216, 1.0
        %v3254 = vadd.f32 %v3218, 1.0
        %v3255 = vadd.f32 %v3220, 1.0
        %v3256 = vadd.f32 %v3222, 1.0
        %v3257 = vadd.f32 %v3224, 1.0
        %v3258 = vadd.f32 %v3226, 1.0
        %v3259 = vrcp.pop %v3227
        %v3260 = vmul.f32 1.0, %v3259
        %v3261 = vrcp.pop %v3228
        %v3262 = vmul.f32 1.0, %v3261
        %v3263 = vrcp.pop %v3229
        %v3264 = vmul.f32 1.0, %v3263
        %v3265 = vrcp.pop %v3230
        %v3266 = vmul.f32 1.0, %v3265
        %v3267 = vrcp.pop %v3231
        %v3268 = vmul.f32 1.0, %v3267
        %v3269 = vrcp.pop %v3232
        %v3270 = vmul.f32 1.0, %v3269
        %v3271 = vrcp.pop %v3233
        %v3272 = vmul.f32 1.0, %v3271
        %v3273 = vrcp.pop %v3234
        %v3274 = vmul.f32 1.0, %v3273
        %v3275 = vrcp.pop %v3235
        %v3276 = vmul.f32 1.0, %v3275
        %v3277 = vrcp.pop %v3236
        %v3278 = vmul.f32 1.0, %v3277
        %v3279 = vrcp.pop %v3237
        %v3280 = vmul.f32 1.0, %v3279
        %v3281 = vrcp.pop %v3238
        %v3282 = vmul.f32 1.0, %v3281
        %v3283 = vrcp.pop %v3239
        %v3284 = vmul.f32 1.0, %v3283
        %v3285 = vrcp.pop %v3240
        %v3286 = vmul.f32 1.0, %v3285
        %v3287 = vrcp.pop %v3241
        %v3288 = vmul.f32 1.0, %v3287
        %v3289 = vrcp.pop %v3242
        %v3290 = vmul.f32 1.0, %v3289
        %v3291 = vrcp.pop %v3243
        %v3292 = vmul.f32 1.0, %v3291
        %v3293 = vrcp.pop %v3244
        %v3294 = vmul.f32 1.0, %v3293
        %v3295 = vrcp.pop %v3245
        %v3296 = vmul.f32 1.0, %v3295
        %v3297 = vrcp.pop %v3246
        %v3298 = vmul.f32 1.0, %v3297
        %v3299 = vrcp.pop %v3247
        %v3300 = vmul.f32 1.0, %v3299
        %v3301 = vrcp.pop %v3248
        %v3302 = vmul.f32 1.0, %v3301
        %v3303 = vrcp.pop %v3249
        %v3304 = vmul.f32 1.0, %v3303
        %v3305 = vrcp.pop %v3250
        %v3306 = vmul.f32 1.0, %v3305
        %v3307 = vrcp.pop %v3251
        %v3308 = vmul.f32 1.0, %v3307
        %v3309 = vrcp.pop %v3252
        %v3310 = vmul.f32 1.0, %v3309
        %v3311 = vrcp.pop %v3253
        %v3312 = vmul.f32 1.0, %v3311
        %v3313 = vrcp.pop %v3254
        %v3314 = vmul.f32 1.0, %v3313
        %v3315 = vrcp.pop %v3255
        %v3316 = vmul.f32 1.0, %v3315
        %v3317 = vrcp.pop %v3256
        %v3318 = vmul.f32 1.0, %v3317
        %v3319 = vrcp.pop %v3257
        %v3320 = vmul.f32 1.0, %v3319
        %v3321 = vrcp.pop %v3258
        %v3322 = vmul.f32 1.0, %v3321
        %v3323 = vadd.f32 %v2578, %v952
        %v3324 = vadd.f32 %v2580, %v952
        %v3325 = vadd.f32 %v2671, %v952
        %v3326 = vadd.f32 %v2673, %v952
        %v3327 = vadd.f32 %v2764, %v952
        %v3328 = vadd.f32 %v2766, %v952
        %v3329 = vadd.f32 %v2857, %v952
        %v3330 = vadd.f32 %v2859, %v952
        %v3331 = vadd.f32 %v2582, %v957
        %v3332 = vadd.f32 %v2584, %v957
        %v3333 = vadd.f32 %v2675, %v957
        %v3334 = vadd.f32 %v2677, %v957
        %v3335 = vadd.f32 %v2768, %v957
        %v3336 = vadd.f32 %v2770, %v957
        %v3337 = vadd.f32 %v2861, %v957
        %v3338 = vadd.f32 %v2863, %v957
        %v3339 = vadd.f32 %v2588, %v962
        %v3340 = vadd.f32 %v2590, %v962
        %v3341 = vadd.f32 %v2681, %v962
        %v3342 = vadd.f32 %v2683, %v962
        %v3343 = vadd.f32 %v2774, %v962
        %v3344 = vadd.f32 %v2776, %v962
        %v3345 = vadd.f32 %v2867, %v962
        %v3346 = vadd.f32 %v2869, %v962
        %v3347 = vadd.f32 %v2592, %v967
        %v3348 = vadd.f32 %v2594, %v967
        %v3349 = vadd.f32 %v2685, %v967
        %v3350 = vadd.f32 %v2687, %v967
        %v3351 = vadd.f32 %v2778, %v967
        %v3352 = vadd.f32 %v2780, %v967
        %v3353 = vadd.f32 %v2871, %v967
        %v3354 = vadd.f32 %v2873, %v967
        %v3355 = vmul.f32 %v3036, %v3323
        %v3356 = vmul.f32 %v3038, %v3324
        %v3357 = vmul.f32 %v3040, %v3325
        %v3358 = vmul.f32 %v3042, %v3326
        %v3359 = vmul.f32 %v3044, %v3327
        %v3360 = vmul.f32 %v3046, %v3328
        %v3361 = vmul.f32 %v3048, %v3329
        %v3362 = vmul.f32 %v3050, %v3330
        %v3363 = vmul.f32 %v3052, %v3331
        %v3364 = vmul.f32 %v3054, %v3332
        %v3365 = vmul.f32 %v3056, %v3333
        %v3366 = vmul.f32 %v3058, %v3334
        %v3367 = vmul.f32 %v3060, %v3335
        %v3368 = vmul.f32 %v3062, %v3336
        %v3369 = vmul.f32 %v3064, %v3337
        %v3370 = vmul.f32 %v3066, %v3338
        %v3371 = vmul.f32 %v3068, %v3339
        %v3372 = vmul.f32 %v3070, %v3340
        %v3373 = vmul.f32 %v3072, %v3341
        %v3374 = vmul.f32 %v3074, %v3342
        %v3375 = vmul.f32 %v3076, %v3343
        %v3376 = vmul.f32 %v3078, %v3344
        %v3377 = vmul.f32 %v3080, %v3345
        %v3378 = vmul.f32 %v3082, %v3346
        %v3379 = vmul.f32 %v3084, %v3347
        %v3380 = vmul.f32 %v3086, %v3348
        %v3381 = vmul.f32 %v3088, %v3349
        %v3382 = vmul.f32 %v3090, %v3350
        %v3383 = vmul.f32 %v3092, %v3351
        %v3384 = vmul.f32 %v3094, %v3352
        %v3385 = vmul.f32 %v3096, %v3353
        %v3386 = vmul.f32 %v3098, %v3354
        %v3387 = vadd.f32 %v2455, %v3355
        %v3388 = vadd.f32 %v2456, %v3356
        %v3389 = vadd.f32 %v2457, %v3357
        %v3390 = vadd.f32 %v2458, %v3358
        %v3391 = vadd.f32 %v2459, %v3359
        %v3392 = vadd.f32 %v2460, %v3360
        %v3393 = vadd.f32 %v2461, %v3361
        %v3394 = vadd.f32 %v2462, %v3362
        %v3395 = vadd.f32 %v2463, %v3363
        %v3396 = vadd.f32 %v2464, %v3364
        %v3397 = vadd.f32 %v2465, %v3365
        %v3398 = vadd.f32 %v2466, %v3366
        %v3399 = vadd.f32 %v2467, %v3367
        %v3400 = vadd.f32 %v2468, %v3368
        %v3401 = vadd.f32 %v2469, %v3369
        %v3402 = vadd.f32 %v2470, %v3370
        %v3403 = vadd.f32 %v2471, %v3371
        %v3404 = vadd.f32 %v2472, %v3372
        %v3405 = vadd.f32 %v2473, %v3373
        %v3406 = vadd.f32 %v2474, %v3374
        %v3407 = vadd.f32 %v2475, %v3375
        %v3408 = vadd.f32 %v2476, %v3376
        %v3409 = vadd.f32 %v2477, %v3377
        %v3410 = vadd.f32 %v2478, %v3378
        %v3411 = vadd.f32 %v2479, %v3379
        %v3412 = vadd.f32 %v2480, %v3380
        %v3413 = vadd.f32 %v2481, %v3381
        %v3414 = vadd.f32 %v2482, %v3382
        %v3415 = vadd.f32 %v2483, %v3383
        %v3416 = vadd.f32 %v2484, %v3384
        %v3417 = vadd.f32 %v2485, %v3385
        %v3418 = vadd.f32 %v2486, %v3386
        %v3419 = vtanh.pop %v3387
        %v3420 = vtanh.pop %v3388
        %v3421 = vtanh.pop %v3389
        %v3422 = vtanh.pop %v3390
        %v3423 = vtanh.pop %v3391
        %v3424 = vtanh.pop %v3392
        %v3425 = vtanh.pop %v3393
        %v3426 = vtanh.pop %v3394
        %v3427 = vtanh.pop %v3395
        %v3428 = vtanh.pop %v3396
        %v3429 = vtanh.pop %v3397
        %v3430 = vtanh.pop %v3398
        %v3431 = vtanh.pop %v3399
        %v3432 = vtanh.pop %v3400
        %v3433 = vtanh.pop %v3401
        %v3434 = vtanh.pop %v3402
        %v3435 = vtanh.pop %v3403
        %v3436 = vtanh.pop %v3404
        %v3437 = vtanh.pop %v3405
        %v3438 = vtanh.pop %v3406
        %v3439 = vtanh.pop %v3407
        %v3440 = vtanh.pop %v3408
        %v3441 = vtanh.pop %v3409
        %v3442 = vtanh.pop %v3410
        %v3443 = vtanh.pop %v3411
        %v3444 = vtanh.pop %v3412
        %v3445 = vtanh.pop %v3413
        %v3446 = vtanh.pop %v3414
        %v3447 = vtanh.pop %v3415
        %v3448 = vtanh.pop %v3416
        %v3449 = vtanh.pop %v3417
        %v3450 = vtanh.pop %v3418
        %v3451 = vsub.f32 1.0, %v3260
        %v3452 = vsub.f32 1.0, %v3262
        %v3453 = vsub.f32 1.0, %v3264
        %v3454 = vsub.f32 1.0, %v3266
        %v3455 = vsub.f32 1.0, %v3268
        %v3456 = vsub.f32 1.0, %v3270
        %v3457 = vsub.f32 1.0, %v3272
        %v3458 = vsub.f32 1.0, %v3274
        %v3459 = vsub.f32 1.0, %v3276
        %v3460 = vsub.f32 1.0, %v3278
        %v3461 = vsub.f32 1.0, %v3280
        %v3462 = vsub.f32 1.0, %v3282
        %v3463 = vsub.f32 1.0, %v3284
        %v3464 = vsub.f32 1.0, %v3286
        %v3465 = vsub.f32 1.0, %v3288
        %v3466 = vsub.f32 1.0, %v3290
        %v3467 = vsub.f32 1.0, %v3292
        %v3468 = vsub.f32 1.0, %v3294
        %v3469 = vsub.f32 1.0, %v3296
        %v3470 = vsub.f32 1.0, %v3298
        %v3471 = vsub.f32 1.0, %v3300
        %v3472 = vsub.f32 1.0, %v3302
        %v3473 = vsub.f32 1.0, %v3304
        %v3474 = vsub.f32 1.0, %v3306
        %v3475 = vsub.f32 1.0, %v3308
        %v3476 = vsub.f32 1.0, %v3310
        %v3477 = vsub.f32 1.0, %v3312
        %v3478 = vsub.f32 1.0, %v3314
        %v3479 = vsub.f32 1.0, %v3316
        %v3480 = vsub.f32 1.0, %v3318
        %v3481 = vsub.f32 1.0, %v3320
        %v3482 = vsub.f32 1.0, %v3322
        %v3483 = vmul.f32 %v3451, %v3419
        %v3484 = vmul.f32 %v3452, %v3420
        %v3485 = vmul.f32 %v3453, %v3421
        %v3486 = vmul.f32 %v3454, %v3422
        %v3487 = vmul.f32 %v3455, %v3423
        %v3488 = vmul.f32 %v3456, %v3424
        %v3489 = vmul.f32 %v3457, %v3425
        %v3490 = vmul.f32 %v3458, %v3426
        %v3491 = vmul.f32 %v3459, %v3427
        %v3492 = vmul.f32 %v3460, %v3428
        %v3493 = vmul.f32 %v3461, %v3429
        %v3494 = vmul.f32 %v3462, %v3430
        %v3495 = vmul.f32 %v3463, %v3431
        %v3496 = vmul.f32 %v3464, %v3432
        %v3497 = vmul.f32 %v3465, %v3433
        %v3498 = vmul.f32 %v3466, %v3434
        %v3499 = vmul.f32 %v3467, %v3435
        %v3500 = vmul.f32 %v3468, %v3436
        %v3501 = vmul.f32 %v3469, %v3437
        %v3502 = vmul.f32 %v3470, %v3438
        %v3503 = vmul.f32 %v3471, %v3439
        %v3504 = vmul.f32 %v3472, %v3440
        %v3505 = vmul.f32 %v3473, %v3441
        %v3506 = vmul.f32 %v3474, %v3442
        %v3507 = vmul.f32 %v3475, %v3443
        %v3508 = vmul.f32 %v3476, %v3444
        %v3509 = vmul.f32 %v3477, %v3445
        %v3510 = vmul.f32 %v3478, %v3446
        %v3511 = vmul.f32 %v3479, %v3447
        %v3512 = vmul.f32 %v3480, %v3448
        %v3513 = vmul.f32 %v3481, %v3449
        %v3514 = vmul.f32 %v3482, %v3450
        %v3515 = vmul.f32 %v3260, %v2358
        %v3516 = vmul.f32 %v3262, %v2359
        %v3517 = vmul.f32 %v3264, %v2360
        %v3518 = vmul.f32 %v3266, %v2361
        %v3519 = vmul.f32 %v3268, %v2362
        %v3520 = vmul.f32 %v3270, %v2363
        %v3521 = vmul.f32 %v3272, %v2364
        %v3522 = vmul.f32 %v3274, %v2365
        %v3523 = vmul.f32 %v3276, %v2366
        %v3524 = vmul.f32 %v3278, %v2367
        %v3525 = vmul.f32 %v3280, %v2368
        %v3526 = vmul.f32 %v3282, %v2369
        %v3527 = vmul.f32 %v3284, %v2370
        %v3528 = vmul.f32 %v3286, %v2371
        %v3529 = vmul.f32 %v3288, %v2372
        %v3530 = vmul.f32 %v3290, %v2373
        %v3531 = vmul.f32 %v3292, %v2374
        %v3532 = vmul.f32 %v3294, %v2375
        %v3533 = vmul.f32 %v3296, %v2376
        %v3534 = vmul.f32 %v3298, %v2377
        %v3535 = vmul.f32 %v3300, %v2378
        %v3536 = vmul.f32 %v3302, %v2379
        %v3537 = vmul.f32 %v3304, %v2380
        %v3538 = vmul.f32 %v3306, %v2381
        %v3539 = vmul.f32 %v3308, %v2382
        %v3540 = vmul.f32 %v3310, %v2383
        %v3541 = vmul.f32 %v3312, %v2384
        %v3542 = vmul.f32 %v3314, %v2385
        %v3543 = vmul.f32 %v3316, %v2386
        %v3544 = vmul.f32 %v3318, %v2387
        %v3545 = vmul.f32 %v3320, %v2388
        %v3546 = vmul.f32 %v3322, %v2389
        %v3547 = vadd.f32 %v3483, %v3515
        %v3548 = vadd.f32 %v3484, %v3516
        %v3549 = vadd.f32 %v3485, %v3517
        %v3550 = vadd.f32 %v3486, %v3518
        %v3551 = vadd.f32 %v3487, %v3519
        %v3552 = vadd.f32 %v3488, %v3520
        %v3553 = vadd.f32 %v3489, %v3521
        %v3554 = vadd.f32 %v3490, %v3522
        %v3555 = vadd.f32 %v3491, %v3523
        %v3556 = vadd.f32 %v3492, %v3524
        %v3557 = vadd.f32 %v3493, %v3525
        %v3558 = vadd.f32 %v3494, %v3526
        %v3559 = vadd.f32 %v3495, %v3527
        %v3560 = vadd.f32 %v3496, %v3528
        %v3561 = vadd.f32 %v3497, %v3529
        %v3562 = vadd.f32 %v3498, %v3530
        %v3563 = vadd.f32 %v3499, %v3531
        %v3564 = vadd.f32 %v3500, %v3532
        %v3565 = vadd.f32 %v3501, %v3533
        %v3566 = vadd.f32 %v3502, %v3534
        %v3567 = vadd.f32 %v3503, %v3535
        %v3568 = vadd.f32 %v3504, %v3536
        %v3569 = vadd.f32 %v3505, %v3537
        %v3570 = vadd.f32 %v3506, %v3538
        %v3571 = vadd.f32 %v3507, %v3539
        %v3572 = vadd.f32 %v3508, %v3540
        %v3573 = vadd.f32 %v3509, %v3541
        %v3574 = vadd.f32 %v3510, %v3542
        %v3575 = vadd.f32 %v3511, %v3543
        %v3576 = vadd.f32 %v3512, %v3544
        %v3577 = vadd.f32 %v3513, %v3545
        %v3578 = vadd.f32 %v3514, %v3546
        %v3579 = vpack.c.bf16 %v3555, %v3547
        %v3580 = vpack.c.bf16 %v3556, %v3548
        %v3581 = vpack.c.bf16 %v3557, %v3549
        %v3582 = vpack.c.bf16 %v3558, %v3550
        %v3583 = vpack.c.bf16 %v3559, %v3551
        %v3584 = vpack.c.bf16 %v3560, %v3552
        %v3585 = vpack.c.bf16 %v3561, %v3553
        %v3586 = vpack.c.bf16 %v3562, %v3554
        %v3587 = vpack.c.bf16 %v3571, %v3563
        %v3588 = vpack.c.bf16 %v3572, %v3564
        %v3589 = vpack.c.bf16 %v3573, %v3565
        %v3590 = vpack.c.bf16 %v3574, %v3566
        %v3591 = vpack.c.bf16 %v3575, %v3567
        %v3592 = vpack.c.bf16 %v3576, %v3568
        %v3593 = vpack.c.bf16 %v3577, %v3569
        %v3594 = vpack.c.bf16 %v3578, %v3570
        %3595 = vset.pattern.permute.xlu0 1
        %3596 = vperm.xlu0 %3595, %v252
        %v3597 = vpop.permute.xlu0 %3596
        %3599 = vset.pattern.permute.xlu0 1
        %3600 = vperm.xlu0 %3599, %v253
        %v3601 = vpop.permute.xlu0 %3600
        %3603 = vset.pattern.permute.xlu0 1
        %3604 = vperm.xlu0 %3603, %v254
        %v3605 = vpop.permute.xlu0 %3604
        %3607 = vset.pattern.permute.xlu0 1
        %3608 = vperm.xlu0 %3607, %v255
        %v3609 = vpop.permute.xlu0 %3608
        %v3615 = vunpack.c.l.b16 %v243
        %v3616 = vunpack.c.l.b16 %v244
        %v3617 = vunpack.c.l.b16 %v245
        %v3618 = vunpack.c.l.b16 %v246
        %v3619 = vpack.c.b16 %v3616, %v3615
        %v3620 = vpack.c.b16 %v3618, %v3617
        %v3622 = vsel %vm389, %v3619, 0
        %v3625 = vsel %vm389, %v3620, 0
        %3627 = vmatprep.subr.bf16.mxu0 %v3580
        %3628 = vmatpush1.bf16.msra.mxu0 %v3579
        %3629 = vmatprep.subr.bf16.mxu0 %v3588
        %3630 = vmatpush1.bf16.msra.mxu0 %v3587
        %3631 = vmatprep.subr.bf16.mxu0 0
        %3632 = vmatpush1.bf16.msra.mxu0 0
        %3633 = vmatprep.subr.bf16.mxu0 0
        %3634 = vmatpush1.bf16.msra.mxu0 0
        %3635 = vmatprep.subr.bf16.mxu0 0
        %3636 = vmatpush1.bf16.msra.mxu0 0
        %3637 = vmatprep.subr.bf16.mxu0 0
        %3638 = vmatpush1.bf16.msra.mxu0 0
        %3639 = vmatprep.subr.bf16.mxu0 0
        %3640 = vmatpush1.bf16.msra.mxu0 0
        %3641 = vmatprep.subr.bf16.mxu0 0
        %3642 = vmatpush1.bf16.msra.mxu0 0
        %3643 = vmatprep.subr.bf16.mxu0 0
        %3644 = vmatpush1.bf16.msra.mxu0 0
        %3645 = vmatprep.subr.bf16.mxu0 0
        %3646 = vmatpush1.bf16.msra.mxu0 0
        %3647 = vmatprep.subr.bf16.mxu0 0
        %3648 = vmatpush1.bf16.msra.mxu0 0
        %3649 = vmatprep.subr.bf16.mxu0 0
        %3650 = vmatpush1.bf16.msra.mxu0 0
        %3651 = vmatprep.subr.bf16.mxu0 0
        %3652 = vmatpush1.bf16.msra.mxu0 0
        %3653 = vmatprep.subr.bf16.mxu0 0
        %3654 = vmatpush1.bf16.msra.mxu0 0
        %3655 = vmatprep.subr.bf16.mxu0 0
        %3656 = vmatpush1.bf16.msra.mxu0 0
        %3657 = vmatprep.subr.bf16.mxu0 0
        %3658 = vmatpush1.bf16.msra.mxu0 0
        %3659 = vmatprep.mubr.bf16.mxu0 0
        %3660 = vmatmul.mubr.bf16.gmra.mrb[0].mxu0 %v3622
        %v3661 = vpop.f32.mrb[0].mxu0
        %v3662 = vadd.f32 %v3597, %v3661
        %v3663 = vpop.f32.mrb[0].mxu0
        %v3664 = vadd.f32 %v3597, %v3663
        %v3665 = vpop.f32.mrb[0].mxu0
        %v3666 = vadd.f32 %v3601, %v3665
        %v3667 = vpop.f32.mrb[0].mxu0
        %v3668 = vadd.f32 %v3601, %v3667
        %3669 = vmatprep.mubr.bf16.mxu0 0
        %3670 = vmatmul.mubr.bf16.gmra.mrb[0].mxu0 %v3625
        %v3671 = vpop.f32.mrb[0].mxu0
        %v3672 = vadd.f32 %v3605, %v3671
        %v3673 = vpop.f32.mrb[0].mxu0
        %v3674 = vadd.f32 %v3605, %v3673
        %v3675 = vpop.f32.mrb[0].mxu0
        %v3676 = vadd.f32 %v3609, %v3675
        %v3677 = vpop.f32.mrb[0].mxu0
        %v3678 = vadd.f32 %v3609, %v3677
        %3679 = vdwg.mxu0
        %3680 = vmatprep.subr.bf16.mxu0 %v3582
        %3681 = vmatpush1.bf16.msra.mxu0 %v3581
        %3682 = vmatprep.subr.bf16.mxu0 %v3590
        %3683 = vmatpush1.bf16.msra.mxu0 %v3589
        %3684 = vmatprep.subr.bf16.mxu0 0
        %3685 = vmatpush1.bf16.msra.mxu0 0
        %3686 = vmatprep.subr.bf16.mxu0 0
        %3687 = vmatpush1.bf16.msra.mxu0 0
        %3688 = vmatprep.subr.bf16.mxu0 0
        %3689 = vmatpush1.bf16.msra.mxu0 0
        %3690 = vmatprep.subr.bf16.mxu0 0
        %3691 = vmatpush1.bf16.msra.mxu0 0
        %3692 = vmatprep.subr.bf16.mxu0 0
        %3693 = vmatpush1.bf16.msra.mxu0 0
        %3694 = vmatprep.subr.bf16.mxu0 0
        %3695 = vmatpush1.bf16.msra.mxu0 0
        %3696 = vmatprep.subr.bf16.mxu0 0
        %3697 = vmatpush1.bf16.msra.mxu0 0
        %3698 = vmatprep.subr.bf16.mxu0 0
        %3699 = vmatpush1.bf16.msra.mxu0 0
        %3700 = vmatprep.subr.bf16.mxu0 0
        %3701 = vmatpush1.bf16.msra.mxu0 0
        %3702 = vmatprep.subr.bf16.mxu0 0
        %3703 = vmatpush1.bf16.msra.mxu0 0
        %3704 = vmatprep.subr.bf16.mxu0 0
        %3705 = vmatpush1.bf16.msra.mxu0 0
        %3706 = vmatprep.subr.bf16.mxu0 0
        %3707 = vmatpush1.bf16.msra.mxu0 0
        %3708 = vmatprep.subr.bf16.mxu0 0
        %3709 = vmatpush1.bf16.msra.mxu0 0
        %3710 = vmatprep.subr.bf16.mxu0 0
        %3711 = vmatpush1.bf16.msra.mxu0 0
        %3712 = vmatprep.mubr.bf16.mxu0 0
        %3713 = vmatmul.mubr.bf16.gmra.mrb[0].mxu0 %v3622
        %v3714 = vpop.f32.mrb[0].mxu0
        %v3715 = vadd.f32 %v3597, %v3714
        %v3716 = vpop.f32.mrb[0].mxu0
        %v3717 = vadd.f32 %v3597, %v3716
        %v3718 = vpop.f32.mrb[0].mxu0
        %v3719 = vadd.f32 %v3601, %v3718
        %v3720 = vpop.f32.mrb[0].mxu0
        %v3721 = vadd.f32 %v3601, %v3720
        %3722 = vmatprep.mubr.bf16.mxu0 0
        %3723 = vmatmul.mubr.bf16.gmra.mrb[0].mxu0 %v3625
        %v3724 = vpop.f32.mrb[0].mxu0
        %v3725 = vadd.f32 %v3605, %v3724
        %v3726 = vpop.f32.mrb[0].mxu0
        %v3727 = vadd.f32 %v3605, %v3726
        %v3728 = vpop.f32.mrb[0].mxu0
        %v3729 = vadd.f32 %v3609, %v3728
        %v3730 = vpop.f32.mrb[0].mxu0
        %v3731 = vadd.f32 %v3609, %v3730
        %3732 = vdwg.mxu0
        %3733 = vmatprep.subr.bf16.mxu0 %v3584
        %3734 = vmatpush1.bf16.msra.mxu0 %v3583
        %3735 = vmatprep.subr.bf16.mxu0 %v3592
        %3736 = vmatpush1.bf16.msra.mxu0 %v3591
        %3737 = vmatprep.subr.bf16.mxu0 0
        %3738 = vmatpush1.bf16.msra.mxu0 0
        %3739 = vmatprep.subr.bf16.mxu0 0
        %3740 = vmatpush1.bf16.msra.mxu0 0
        %3741 = vmatprep.subr.bf16.mxu0 0
        %3742 = vmatpush1.bf16.msra.mxu0 0
        %3743 = vmatprep.subr.bf16.mxu0 0
        %3744 = vmatpush1.bf16.msra.mxu0 0
        %3745 = vmatprep.subr.bf16.mxu0 0
        %3746 = vmatpush1.bf16.msra.mxu0 0
        %3747 = vmatprep.subr.bf16.mxu0 0
        %3748 = vmatpush1.bf16.msra.mxu0 0
        %3749 = vmatprep.subr.bf16.mxu0 0
        %3750 = vmatpush1.bf16.msra.mxu0 0
        %3751 = vmatprep.subr.bf16.mxu0 0
        %3752 = vmatpush1.bf16.msra.mxu0 0
        %3753 = vmatprep.subr.bf16.mxu0 0
        %3754 = vmatpush1.bf16.msra.mxu0 0
        %3755 = vmatprep.subr.bf16.mxu0 0
        %3756 = vmatpush1.bf16.msra.mxu0 0
        %3757 = vmatprep.subr.bf16.mxu0 0
        %3758 = vmatpush1.bf16.msra.mxu0 0
        %3759 = vmatprep.subr.bf16.mxu0 0
        %3760 = vmatpush1.bf16.msra.mxu0 0
        %3761 = vmatprep.subr.bf16.mxu0 0
        %3762 = vmatpush1.bf16.msra.mxu0 0
        %3763 = vmatprep.subr.bf16.mxu0 0
        %3764 = vmatpush1.bf16.msra.mxu0 0
        %3765 = vmatprep.mubr.bf16.mxu0 0
        %3766 = vmatmul.mubr.bf16.gmra.mrb[0].mxu0 %v3622
        %v3767 = vpop.f32.mrb[0].mxu0
        %v3768 = vadd.f32 %v3597, %v3767
        %v3769 = vpop.f32.mrb[0].mxu0
        %v3770 = vadd.f32 %v3597, %v3769
        %v3771 = vpop.f32.mrb[0].mxu0
        %v3772 = vadd.f32 %v3601, %v3771
        %v3773 = vpop.f32.mrb[0].mxu0
        %v3774 = vadd.f32 %v3601, %v3773
        %3775 = vmatprep.mubr.bf16.mxu0 0
        %3776 = vmatmul.mubr.bf16.gmra.mrb[0].mxu0 %v3625
        %v3777 = vpop.f32.mrb[0].mxu0
        %v3778 = vadd.f32 %v3605, %v3777
        %v3779 = vpop.f32.mrb[0].mxu0
        %v3780 = vadd.f32 %v3605, %v3779
        %v3781 = vpop.f32.mrb[0].mxu0
        %v3782 = vadd.f32 %v3609, %v3781
        %v3783 = vpop.f32.mrb[0].mxu0
        %v3784 = vadd.f32 %v3609, %v3783
        %3785 = vdwg.mxu0
        %3786 = vmatprep.subr.bf16.mxu0 %v3586
        %3787 = vmatpush1.bf16.msra.mxu0 %v3585
        %3788 = vmatprep.subr.bf16.mxu0 %v3594
        %3789 = vmatpush1.bf16.msra.mxu0 %v3593
        %3790 = vmatprep.subr.bf16.mxu0 0
        %3791 = vmatpush1.bf16.msra.mxu0 0
        %3792 = vmatprep.subr.bf16.mxu0 0
        %3793 = vmatpush1.bf16.msra.mxu0 0
        %3794 = vmatprep.subr.bf16.mxu0 0
        %3795 = vmatpush1.bf16.msra.mxu0 0
        %3796 = vmatprep.subr.bf16.mxu0 0
        %3797 = vmatpush1.bf16.msra.mxu0 0
        %3798 = vmatprep.subr.bf16.mxu0 0
        %3799 = vmatpush1.bf16.msra.mxu0 0
        %3800 = vmatprep.subr.bf16.mxu0 0
        %3801 = vmatpush1.bf16.msra.mxu0 0
        %3802 = vmatprep.subr.bf16.mxu0 0
        %3803 = vmatpush1.bf16.msra.mxu0 0
        %3804 = vmatprep.subr.bf16.mxu0 0
        %3805 = vmatpush1.bf16.msra.mxu0 0
        %3806 = vmatprep.subr.bf16.mxu0 0
        %3807 = vmatpush1.bf16.msra.mxu0 0
        %3808 = vmatprep.subr.bf16.mxu0 0
        %3809 = vmatpush1.bf16.msra.mxu0 0
        %3810 = vmatprep.subr.bf16.mxu0 0
        %3811 = vmatpush1.bf16.msra.mxu0 0
        %3812 = vmatprep.subr.bf16.mxu0 0
        %3813 = vmatpush1.bf16.msra.mxu0 0
        %3814 = vmatprep.subr.bf16.mxu0 0
        %3815 = vmatpush1.bf16.msra.mxu0 0
        %3816 = vmatprep.subr.bf16.mxu0 0
        %3817 = vmatpush1.bf16.msra.mxu0 0
        %3818 = vmatprep.mubr.bf16.mxu0 0
        %3819 = vmatmul.mubr.bf16.gmra.mrb[0].mxu0 %v3622
        %v3820 = vpop.f32.mrb[0].mxu0
        %v3821 = vadd.f32 %v3597, %v3820
        %v3822 = vpop.f32.mrb[0].mxu0
        %v3823 = vadd.f32 %v3597, %v3822
        %v3824 = vpop.f32.mrb[0].mxu0
        %v3825 = vadd.f32 %v3601, %v3824
        %v3826 = vpop.f32.mrb[0].mxu0
        %v3827 = vadd.f32 %v3601, %v3826
        %3828 = vmatprep.mubr.bf16.mxu0 0
        %3829 = vmatmul.mubr.bf16.gmra.mrb[0].mxu0 %v3625
        %v3830 = vpop.f32.mrb[0].mxu0
        %v3831 = vadd.f32 %v3605, %v3830
        %v3832 = vpop.f32.mrb[0].mxu0
        %v3833 = vadd.f32 %v3605, %v3832
        %v3834 = vpop.f32.mrb[0].mxu0
        %v3835 = vadd.f32 %v3609, %v3834
        %v3836 = vpop.f32.mrb[0].mxu0
        %v3837 = vadd.f32 %v3609, %v3836
        %3838 = vdwg.mxu0
        %v3839 = vmax.f32 %v3662, 0.0
        %v3840 = vmax.f32 %v3664, 0.0
        %v3841 = vmax.f32 %v3715, 0.0
        %v3842 = vmax.f32 %v3717, 0.0
        %v3843 = vmax.f32 %v3768, 0.0
        %v3844 = vmax.f32 %v3770, 0.0
        %v3845 = vmax.f32 %v3821, 0.0
        %v3846 = vmax.f32 %v3823, 0.0
        %v3847 = vmax.f32 %v3666, 0.0
        %v3848 = vmax.f32 %v3668, 0.0
        %v3849 = vmax.f32 %v3719, 0.0
        %v3850 = vmax.f32 %v3721, 0.0
        %v3851 = vmax.f32 %v3772, 0.0
        %v3852 = vmax.f32 %v3774, 0.0
        %v3853 = vmax.f32 %v3825, 0.0
        %v3854 = vmax.f32 %v3827, 0.0
        %v3855 = vmax.f32 %v3672, 0.0
        %v3856 = vmax.f32 %v3674, 0.0
        %v3857 = vmax.f32 %v3725, 0.0
        %v3858 = vmax.f32 %v3727, 0.0
        %v3859 = vmax.f32 %v3778, 0.0
        %v3860 = vmax.f32 %v3780, 0.0
        %v3861 = vmax.f32 %v3831, 0.0
        %v3862 = vmax.f32 %v3833, 0.0
        %v3863 = vmax.f32 %v3676, 0.0
        %v3864 = vmax.f32 %v3678, 0.0
        %v3865 = vmax.f32 %v3729, 0.0
        %v3866 = vmax.f32 %v3731, 0.0
        %v3867 = vmax.f32 %v3782, 0.0
        %v3868 = vmax.f32 %v3784, 0.0
        %v3869 = vmax.f32 %v3835, 0.0
        %v3870 = vmax.f32 %v3837, 0.0
        %v3871 = vpack.c.bf16 %v3847, %v3839
        %v3872 = vpack.c.bf16 %v3848, %v3840
        %v3873 = vpack.c.bf16 %v3849, %v3841
        %v3874 = vpack.c.bf16 %v3850, %v3842
        %v3875 = vpack.c.bf16 %v3851, %v3843
        %v3876 = vpack.c.bf16 %v3852, %v3844
        %v3877 = vpack.c.bf16 %v3853, %v3845
        %v3878 = vpack.c.bf16 %v3854, %v3846
        %v3879 = vpack.c.bf16 %v3863, %v3855
        %v3880 = vpack.c.bf16 %v3864, %v3856
        %v3881 = vpack.c.bf16 %v3865, %v3857
        %v3882 = vpack.c.bf16 %v3866, %v3858
        %v3883 = vpack.c.bf16 %v3867, %v3859
        %v3884 = vpack.c.bf16 %v3868, %v3860
        %v3885 = vpack.c.bf16 %v3869, %v3861
        %v3886 = vpack.c.bf16 %v3870, %v3862
        %3887 = vset.pattern.permute.xlu0 2
        %3888 = vperm.xlu0 %3887, %v252
        %v3889 = vpop.permute.xlu0 %3888
        %3891 = vset.pattern.permute.xlu0 2
        %3892 = vperm.xlu0 %3891, %v253
        %v3893 = vpop.permute.xlu0 %3892
        %3895 = vset.pattern.permute.xlu0 2
        %3896 = vperm.xlu0 %3895, %v254
        %v3897 = vpop.permute.xlu0 %3896
        %3899 = vset.pattern.permute.xlu0 2
        %3900 = vperm.xlu0 %3899, %v255
        %v3901 = vpop.permute.xlu0 %3900
        %v3907 = vunpack.c.l.b16 %v247
        %v3908 = vunpack.c.l.b16 %v248
        %v3909 = vunpack.c.l.b16 %v249
        %v3910 = vunpack.c.l.b16 %v250
        %v3911 = vpack.c.b16 %v3908, %v3907
        %v3912 = vpack.c.b16 %v3910, %v3909
        %v3914 = vsel %vm389, %v3911, 0
        %v3917 = vsel %vm389, %v3912, 0
        %3919 = vmatprep.subr.bf16.mxu0 %v3872
        %3920 = vmatpush1.bf16.msra.mxu0 %v3871
        %3921 = vmatprep.subr.bf16.mxu0 %v3880
        %3922 = vmatpush1.bf16.msra.mxu0 %v3879
        %3923 = vmatprep.subr.bf16.mxu0 0
        %3924 = vmatpush1.bf16.msra.mxu0 0
        %3925 = vmatprep.subr.bf16.mxu0 0
        %3926 = vmatpush1.bf16.msra.mxu0 0
        %3927 = vmatprep.subr.bf16.mxu0 0
        %3928 = vmatpush1.bf16.msra.mxu0 0
        %3929 = vmatprep.subr.bf16.mxu0 0
        %3930 = vmatpush1.bf16.msra.mxu0 0
        %3931 = vmatprep.subr.bf16.mxu0 0
        %3932 = vmatpush1.bf16.msra.mxu0 0
        %3933 = vmatprep.subr.bf16.mxu0 0
        %3934 = vmatpush1.bf16.msra.mxu0 0
        %3935 = vmatprep.subr.bf16.mxu0 0
        %3936 = vmatpush1.bf16.msra.mxu0 0
        %3937 = vmatprep.subr.bf16.mxu0 0
        %3938 = vmatpush1.bf16.msra.mxu0 0
        %3939 = vmatprep.subr.bf16.mxu0 0
        %3940 = vmatpush1.bf16.msra.mxu0 0
        %3941 = vmatprep.subr.bf16.mxu0 0
        %3942 = vmatpush1.bf16.msra.mxu0 0
        %3943 = vmatprep.subr.bf16.mxu0 0
        %3944 = vmatpush1.bf16.msra.mxu0 0
        %3945 = vmatprep.subr.bf16.mxu0 0
        %3946 = vmatpush1.bf16.msra.mxu0 0
        %3947 = vmatprep.subr.bf16.mxu0 0
        %3948 = vmatpush1.bf16.msra.mxu0 0
        %3949 = vmatprep.subr.bf16.mxu0 0
        %3950 = vmatpush1.bf16.msra.mxu0 0
        %3951 = vmatprep.mubr.bf16.mxu0 0
        %3952 = vmatmul.mubr.bf16.gmra.mrb[0].mxu0 %v3914
        %v3953 = vpop.f32.mrb[0].mxu0
        %v3954 = vadd.f32 %v3889, %v3953
        %v3955 = vpop.f32.mrb[0].mxu0
        %v3956 = vadd.f32 %v3889, %v3955
        %v3957 = vpop.f32.mrb[0].mxu0
        %v3958 = vadd.f32 %v3893, %v3957
        %v3959 = vpop.f32.mrb[0].mxu0
        %v3960 = vadd.f32 %v3893, %v3959
        %3961 = vmatprep.mubr.bf16.mxu0 0
        %3962 = vmatmul.mubr.bf16.gmra.mrb[0].mxu0 %v3917
        %v3963 = vpop.f32.mrb[0].mxu0
        %v3964 = vadd.f32 %v3897, %v3963
        %v3965 = vpop.f32.mrb[0].mxu0
        %v3966 = vadd.f32 %v3897, %v3965
        %v3967 = vpop.f32.mrb[0].mxu0
        %v3968 = vadd.f32 %v3901, %v3967
        %v3969 = vpop.f32.mrb[0].mxu0
        %v3970 = vadd.f32 %v3901, %v3969
        %3971 = vdwg.mxu0
        %3972 = vmatprep.subr.bf16.mxu0 %v3874
        %3973 = vmatpush1.bf16.msra.mxu0 %v3873
        %3974 = vmatprep.subr.bf16.mxu0 %v3882
        %3975 = vmatpush1.bf16.msra.mxu0 %v3881
        %3976 = vmatprep.subr.bf16.mxu0 0
        %3977 = vmatpush1.bf16.msra.mxu0 0
        %3978 = vmatprep.subr.bf16.mxu0 0
        %3979 = vmatpush1.bf16.msra.mxu0 0
        %3980 = vmatprep.subr.bf16.mxu0 0
        %3981 = vmatpush1.bf16.msra.mxu0 0
        %3982 = vmatprep.subr.bf16.mxu0 0
        %3983 = vmatpush1.bf16.msra.mxu0 0
        %3984 = vmatprep.subr.bf16.mxu0 0
        %3985 = vmatpush1.bf16.msra.mxu0 0
        %3986 = vmatprep.subr.bf16.mxu0 0
        %3987 = vmatpush1.bf16.msra.mxu0 0
        %3988 = vmatprep.subr.bf16.mxu0 0
        %3989 = vmatpush1.bf16.msra.mxu0 0
        %3990 = vmatprep.subr.bf16.mxu0 0
        %3991 = vmatpush1.bf16.msra.mxu0 0
        %3992 = vmatprep.subr.bf16.mxu0 0
        %3993 = vmatpush1.bf16.msra.mxu0 0
        %3994 = vmatprep.subr.bf16.mxu0 0
        %3995 = vmatpush1.bf16.msra.mxu0 0
        %3996 = vmatprep.subr.bf16.mxu0 0
        %3997 = vmatpush1.bf16.msra.mxu0 0
        %3998 = vmatprep.subr.bf16.mxu0 0
        %3999 = vmatpush1.bf16.msra.mxu0 0
        %4000 = vmatprep.subr.bf16.mxu0 0
        %4001 = vmatpush1.bf16.msra.mxu0 0
        %4002 = vmatprep.subr.bf16.mxu0 0
        %4003 = vmatpush1.bf16.msra.mxu0 0
        %4004 = vmatprep.mubr.bf16.mxu0 0
        %4005 = vmatmul.mubr.bf16.gmra.mrb[0].mxu0 %v3914
        %v4006 = vpop.f32.mrb[0].mxu0
        %v4007 = vadd.f32 %v3889, %v4006
        %v4008 = vpop.f32.mrb[0].mxu0
        %v4009 = vadd.f32 %v3889, %v4008
        %v4010 = vpop.f32.mrb[0].mxu0
        %v4011 = vadd.f32 %v3893, %v4010
        %v4012 = vpop.f32.mrb[0].mxu0
        %v4013 = vadd.f32 %v3893, %v4012
        %4014 = vmatprep.mubr.bf16.mxu0 0
        %4015 = vmatmul.mubr.bf16.gmra.mrb[0].mxu0 %v3917
        %v4016 = vpop.f32.mrb[0].mxu0
        %v4017 = vadd.f32 %v3897, %v4016
        %v4018 = vpop.f32.mrb[0].mxu0
        %v4019 = vadd.f32 %v3897, %v4018
        %v4020 = vpop.f32.mrb[0].mxu0
        %v4021 = vadd.f32 %v3901, %v4020
        %v4022 = vpop.f32.mrb[0].mxu0
        %v4023 = vadd.f32 %v3901, %v4022
        %4024 = vdwg.mxu0
        %4025 = vmatprep.subr.bf16.mxu0 %v3876
        %4026 = vmatpush1.bf16.msra.mxu0 %v3875
        %4027 = vmatprep.subr.bf16.mxu0 %v3884
        %4028 = vmatpush1.bf16.msra.mxu0 %v3883
        %4029 = vmatprep.subr.bf16.mxu0 0
        %4030 = vmatpush1.bf16.msra.mxu0 0
        %4031 = vmatprep.subr.bf16.mxu0 0
        %4032 = vmatpush1.bf16.msra.mxu0 0
        %4033 = vmatprep.subr.bf16.mxu0 0
        %4034 = vmatpush1.bf16.msra.mxu0 0
        %4035 = vmatprep.subr.bf16.mxu0 0
        %4036 = vmatpush1.bf16.msra.mxu0 0
        %4037 = vmatprep.subr.bf16.mxu0 0
        %4038 = vmatpush1.bf16.msra.mxu0 0
        %4039 = vmatprep.subr.bf16.mxu0 0
        %4040 = vmatpush1.bf16.msra.mxu0 0
        %4041 = vmatprep.subr.bf16.mxu0 0
        %4042 = vmatpush1.bf16.msra.mxu0 0
        %4043 = vmatprep.subr.bf16.mxu0 0
        %4044 = vmatpush1.bf16.msra.mxu0 0
        %4045 = vmatprep.subr.bf16.mxu0 0
        %4046 = vmatpush1.bf16.msra.mxu0 0
        %4047 = vmatprep.subr.bf16.mxu0 0
        %4048 = vmatpush1.bf16.msra.mxu0 0
        %4049 = vmatprep.subr.bf16.mxu0 0
        %4050 = vmatpush1.bf16.msra.mxu0 0
        %4051 = vmatprep.subr.bf16.mxu0 0
        %4052 = vmatpush1.bf16.msra.mxu0 0
        %4053 = vmatprep.subr.bf16.mxu0 0
        %4054 = vmatpush1.bf16.msra.mxu0 0
        %4055 = vmatprep.subr.bf16.mxu0 0
        %4056 = vmatpush1.bf16.msra.mxu0 0
        %4057 = vmatprep.mubr.bf16.mxu0 0
        %4058 = vmatmul.mubr.bf16.gmra.mrb[0].mxu0 %v3914
        %v4059 = vpop.f32.mrb[0].mxu0
        %v4060 = vadd.f32 %v3889, %v4059
        %v4061 = vpop.f32.mrb[0].mxu0
        %v4062 = vadd.f32 %v3889, %v4061
        %v4063 = vpop.f32.mrb[0].mxu0
        %v4064 = vadd.f32 %v3893, %v4063
        %v4065 = vpop.f32.mrb[0].mxu0
        %v4066 = vadd.f32 %v3893, %v4065
        %4067 = vmatprep.mubr.bf16.mxu0 0
        %4068 = vmatmul.mubr.bf16.gmra.mrb[0].mxu0 %v3917
        %v4069 = vpop.f32.mrb[0].mxu0
        %v4070 = vadd.f32 %v3897, %v4069
        %v4071 = vpop.f32.mrb[0].mxu0
        %v4072 = vadd.f32 %v3897, %v4071
        %v4073 = vpop.f32.mrb[0].mxu0
        %v4074 = vadd.f32 %v3901, %v4073
        %v4075 = vpop.f32.mrb[0].mxu0
        %v4076 = vadd.f32 %v3901, %v4075
        %4077 = vdwg.mxu0
        %4078 = vmatprep.subr.bf16.mxu0 %v3878
        %4079 = vmatpush1.bf16.msra.mxu0 %v3877
        %4080 = vmatprep.subr.bf16.mxu0 %v3886
        %4081 = vmatpush1.bf16.msra.mxu0 %v3885
        %4082 = vmatprep.subr.bf16.mxu0 0
        %4083 = vmatpush1.bf16.msra.mxu0 0
        %4084 = vmatprep.subr.bf16.mxu0 0
        %4085 = vmatpush1.bf16.msra.mxu0 0
        %4086 = vmatprep.subr.bf16.mxu0 0
        %4087 = vmatpush1.bf16.msra.mxu0 0
        %4088 = vmatprep.subr.bf16.mxu0 0
        %4089 = vmatpush1.bf16.msra.mxu0 0
        %4090 = vmatprep.subr.bf16.mxu0 0
        %4091 = vmatpush1.bf16.msra.mxu0 0
        %4092 = vmatprep.subr.bf16.mxu0 0
        %4093 = vmatpush1.bf16.msra.mxu0 0
        %4094 = vmatprep.subr.bf16.mxu0 0
        %4095 = vmatpush1.bf16.msra.mxu0 0
        %4096 = vmatprep.subr.bf16.mxu0 0
        %4097 = vmatpush1.bf16.msra.mxu0 0
        %4098 = vmatprep.subr.bf16.mxu0 0
        %4099 = vmatpush1.bf16.msra.mxu0 0
        %4100 = vmatprep.subr.bf16.mxu0 0
        %4101 = vmatpush1.bf16.msra.mxu0 0
        %4102 = vmatprep.subr.bf16.mxu0 0
        %4103 = vmatpush1.bf16.msra.mxu0 0
        %4104 = vmatprep.subr.bf16.mxu0 0
        %4105 = vmatpush1.bf16.msra.mxu0 0
        %4106 = vmatprep.subr.bf16.mxu0 0
        %4107 = vmatpush1.bf16.msra.mxu0 0
        %4108 = vmatprep.subr.bf16.mxu0 0
        %4109 = vmatpush1.bf16.msra.mxu0 0
        %4110 = vmatprep.mubr.bf16.mxu0 0
        %4111 = vmatmul.mubr.bf16.gmra.mrb[0].mxu0 %v3914
        %v4112 = vpop.f32.mrb[0].mxu0
        %v4113 = vadd.f32 %v3889, %v4112
        %v4114 = vpop.f32.mrb[0].mxu0
        %v4115 = vadd.f32 %v3889, %v4114
        %v4116 = vpop.f32.mrb[0].mxu0
        %v4117 = vadd.f32 %v3893, %v4116
        %v4118 = vpop.f32.mrb[0].mxu0
        %v4119 = vadd.f32 %v3893, %v4118
        %4120 = vmatprep.mubr.bf16.mxu0 0
        %4121 = vmatmul.mubr.bf16.gmra.mrb[0].mxu0 %v3917
        %v4122 = vpop.f32.mrb[0].mxu0
        %v4123 = vadd.f32 %v3897, %v4122
        %v4124 = vpop.f32.mrb[0].mxu0
        %v4125 = vadd.f32 %v3897, %v4124
        %v4126 = vpop.f32.mrb[0].mxu0
        %v4127 = vadd.f32 %v3901, %v4126
        %v4128 = vpop.f32.mrb[0].mxu0
        %v4129 = vadd.f32 %v3901, %v4128
        %4130 = vdwg.mxu0
        %v4131 = vmax.f32 %v3954, 0.0
        %v4132 = vmax.f32 %v3956, 0.0
        %v4133 = vmax.f32 %v4007, 0.0
        %v4134 = vmax.f32 %v4009, 0.0
        %v4135 = vmax.f32 %v4060, 0.0
        %v4136 = vmax.f32 %v4062, 0.0
        %v4137 = vmax.f32 %v4113, 0.0
        %v4138 = vmax.f32 %v4115, 0.0
        %v4139 = vmax.f32 %v3958, 0.0
        %v4140 = vmax.f32 %v3960, 0.0
        %v4141 = vmax.f32 %v4011, 0.0
        %v4142 = vmax.f32 %v4013, 0.0
        %v4143 = vmax.f32 %v4064, 0.0
        %v4144 = vmax.f32 %v4066, 0.0
        %v4145 = vmax.f32 %v4117, 0.0
        %v4146 = vmax.f32 %v4119, 0.0
        %v4147 = vmax.f32 %v3964, 0.0
        %v4148 = vmax.f32 %v3966, 0.0
        %v4149 = vmax.f32 %v4017, 0.0
        %v4150 = vmax.f32 %v4019, 0.0
        %v4151 = vmax.f32 %v4070, 0.0
        %v4152 = vmax.f32 %v4072, 0.0
        %v4153 = vmax.f32 %v4123, 0.0
        %v4154 = vmax.f32 %v4125, 0.0
        %v4155 = vmax.f32 %v3968, 0.0
        %v4156 = vmax.f32 %v3970, 0.0
        %v4157 = vmax.f32 %v4021, 0.0
        %v4158 = vmax.f32 %v4023, 0.0
        %v4159 = vmax.f32 %v4074, 0.0
        %v4160 = vmax.f32 %v4076, 0.0
        %v4161 = vmax.f32 %v4127, 0.0
        %v4162 = vmax.f32 %v4129, 0.0
        %v4163 = vpack.c.bf16 %v4139, %v4131
        %v4164 = vpack.c.bf16 %v4140, %v4132
        %v4165 = vpack.c.bf16 %v4141, %v4133
        %v4166 = vpack.c.bf16 %v4142, %v4134
        %v4167 = vpack.c.bf16 %v4143, %v4135
        %v4168 = vpack.c.bf16 %v4144, %v4136
        %v4169 = vpack.c.bf16 %v4145, %v4137
        %v4170 = vpack.c.bf16 %v4146, %v4138
        %v4171 = vpack.c.bf16 %v4155, %v4147
        %v4172 = vpack.c.bf16 %v4156, %v4148
        %v4173 = vpack.c.bf16 %v4157, %v4149
        %v4174 = vpack.c.bf16 %v4158, %v4150
        %v4175 = vpack.c.bf16 %v4159, %v4151
        %v4176 = vpack.c.bf16 %v4160, %v4152
        %v4177 = vpack.c.bf16 %v4161, %v4153
        %v4178 = vpack.c.bf16 %v4162, %v4154
        %v4180 = vsel %vm389, %v251, 0
        %4182 = vmatprep.subr.bf16.mxu0 %v4164
        %4183 = vmatpush1.bf16.msra.mxu0 %v4163
        %4184 = vmatprep.subr.bf16.mxu0 %v4172
        %4185 = vmatpush1.bf16.msra.mxu0 %v4171
        %4186 = vmatprep.subr.bf16.mxu0 0
        %4187 = vmatpush1.bf16.msra.mxu0 0
        %4188 = vmatprep.subr.bf16.mxu0 0
        %4189 = vmatpush1.bf16.msra.mxu0 0
        %4190 = vmatprep.subr.bf16.mxu0 0
        %4191 = vmatpush1.bf16.msra.mxu0 0
        %4192 = vmatprep.subr.bf16.mxu0 0
        %4193 = vmatpush1.bf16.msra.mxu0 0
        %4194 = vmatprep.subr.bf16.mxu0 0
        %4195 = vmatpush1.bf16.msra.mxu0 0
        %4196 = vmatprep.subr.bf16.mxu0 0
        %4197 = vmatpush1.bf16.msra.mxu0 0
        %4198 = vmatprep.subr.bf16.mxu0 0
        %4199 = vmatpush1.bf16.msra.mxu0 0
        %4200 = vmatprep.subr.bf16.mxu0 0
        %4201 = vmatpush1.bf16.msra.mxu0 0
        %4202 = vmatprep.subr.bf16.mxu0 0
        %4203 = vmatpush1.bf16.msra.mxu0 0
        %4204 = vmatprep.subr.bf16.mxu0 0
        %4205 = vmatpush1.bf16.msra.mxu0 0
        %4206 = vmatprep.subr.bf16.mxu0 0
        %4207 = vmatpush1.bf16.msra.mxu0 0
        %4208 = vmatprep.subr.bf16.mxu0 0
        %4209 = vmatpush1.bf16.msra.mxu0 0
        %4210 = vmatprep.subr.bf16.mxu0 0
        %4211 = vmatpush1.bf16.msra.mxu0 0
        %4212 = vmatprep.subr.bf16.mxu0 0
        %4213 = vmatpush1.bf16.msra.mxu0 0
        %4214 = vmatprep.mubr.bf16.mxu0 0
        %4215 = vmatmul.mubr.bf16.gmra.mrb[0].mxu0 %v4180
        %v4216 = vpop.f32.mrb[0].mxu0
        %v4217 = vadd.f32 0.0, %v4216
        %v4218 = vpop.f32.mrb[0].mxu0
        %v4219 = vadd.f32 0.0, %v4218
        %v4220 = vpop.f32.mrb[0].mxu0
        %v4221 = vpop.f32.mrb[0].mxu0
        %4222 = vdwg.mxu0
        %4223 = vmatprep.subr.bf16.mxu0 %v4166
        %4224 = vmatpush1.bf16.msra.mxu0 %v4165
        %4225 = vmatprep.subr.bf16.mxu0 %v4174
        %4226 = vmatpush1.bf16.msra.mxu0 %v4173
        %4227 = vmatprep.subr.bf16.mxu0 0
        %4228 = vmatpush1.bf16.msra.mxu0 0
        %4229 = vmatprep.subr.bf16.mxu0 0
        %4230 = vmatpush1.bf16.msra.mxu0 0
        %4231 = vmatprep.subr.bf16.mxu0 0
        %4232 = vmatpush1.bf16.msra.mxu0 0
        %4233 = vmatprep.subr.bf16.mxu0 0
        %4234 = vmatpush1.bf16.msra.mxu0 0
        %4235 = vmatprep.subr.bf16.mxu0 0
        %4236 = vmatpush1.bf16.msra.mxu0 0
        %4237 = vmatprep.subr.bf16.mxu0 0
        %4238 = vmatpush1.bf16.msra.mxu0 0
        %4239 = vmatprep.subr.bf16.mxu0 0
        %4240 = vmatpush1.bf16.msra.mxu0 0
        %4241 = vmatprep.subr.bf16.mxu0 0
        %4242 = vmatpush1.bf16.msra.mxu0 0
        %4243 = vmatprep.subr.bf16.mxu0 0
        %4244 = vmatpush1.bf16.msra.mxu0 0
        %4245 = vmatprep.subr.bf16.mxu0 0
        %4246 = vmatpush1.bf16.msra.mxu0 0
        %4247 = vmatprep.subr.bf16.mxu0 0
        %4248 = vmatpush1.bf16.msra.mxu0 0
        %4249 = vmatprep.subr.bf16.mxu0 0
        %4250 = vmatpush1.bf16.msra.mxu0 0
        %4251 = vmatprep.subr.bf16.mxu0 0
        %4252 = vmatpush1.bf16.msra.mxu0 0
        %4253 = vmatprep.subr.bf16.mxu0 0
        %4254 = vmatpush1.bf16.msra.mxu0 0
        %4255 = vmatprep.mubr.bf16.mxu0 0
        %4256 = vmatmul.mubr.bf16.gmra.mrb[0].mxu0 %v4180
        %v4257 = vpop.f32.mrb[0].mxu0
        %v4258 = vadd.f32 0.0, %v4257
        %v4259 = vpop.f32.mrb[0].mxu0
        %v4260 = vadd.f32 0.0, %v4259
        %v4261 = vpop.f32.mrb[0].mxu0
        %v4262 = vpop.f32.mrb[0].mxu0
        %4263 = vdwg.mxu0
        %4264 = vmatprep.subr.bf16.mxu0 %v4168
        %4265 = vmatpush1.bf16.msra.mxu0 %v4167
        %4266 = vmatprep.subr.bf16.mxu0 %v4176
        %4267 = vmatpush1.bf16.msra.mxu0 %v4175
        %4268 = vmatprep.subr.bf16.mxu0 0
        %4269 = vmatpush1.bf16.msra.mxu0 0
        %4270 = vmatprep.subr.bf16.mxu0 0
        %4271 = vmatpush1.bf16.msra.mxu0 0
        %4272 = vmatprep.subr.bf16.mxu0 0
        %4273 = vmatpush1.bf16.msra.mxu0 0
        %4274 = vmatprep.subr.bf16.mxu0 0
        %4275 = vmatpush1.bf16.msra.mxu0 0
        %4276 = vmatprep.subr.bf16.mxu0 0
        %4277 = vmatpush1.bf16.msra.mxu0 0
        %4278 = vmatprep.subr.bf16.mxu0 0
        %4279 = vmatpush1.bf16.msra.mxu0 0
        %4280 = vmatprep.subr.bf16.mxu0 0
        %4281 = vmatpush1.bf16.msra.mxu0 0
        %4282 = vmatprep.subr.bf16.mxu0 0
        %4283 = vmatpush1.bf16.msra.mxu0 0
        %4284 = vmatprep.subr.bf16.mxu0 0
        %4285 = vmatpush1.bf16.msra.mxu0 0
        %4286 = vmatprep.subr.bf16.mxu0 0
        %4287 = vmatpush1.bf16.msra.mxu0 0
        %4288 = vmatprep.subr.bf16.mxu0 0
        %4289 = vmatpush1.bf16.msra.mxu0 0
        %4290 = vmatprep.subr.bf16.mxu0 0
        %4291 = vmatpush1.bf16.msra.mxu0 0
        %4292 = vmatprep.subr.bf16.mxu0 0
        %4293 = vmatpush1.bf16.msra.mxu0 0
        %4294 = vmatprep.subr.bf16.mxu0 0
        %4295 = vmatpush1.bf16.msra.mxu0 0
        %4296 = vmatprep.mubr.bf16.mxu0 0
        %4297 = vmatmul.mubr.bf16.gmra.mrb[0].mxu0 %v4180
        %v4298 = vpop.f32.mrb[0].mxu0
        %v4299 = vadd.f32 0.0, %v4298
        %v4300 = vpop.f32.mrb[0].mxu0
        %v4301 = vadd.f32 0.0, %v4300
        %v4302 = vpop.f32.mrb[0].mxu0
        %v4303 = vpop.f32.mrb[0].mxu0
        %4304 = vdwg.mxu0
        %4305 = vmatprep.subr.bf16.mxu0 %v4170
        %4306 = vmatpush1.bf16.msra.mxu0 %v4169
        %4307 = vmatprep.subr.bf16.mxu0 %v4178
        %4308 = vmatpush1.bf16.msra.mxu0 %v4177
        %4309 = vmatprep.subr.bf16.mxu0 0
        %4310 = vmatpush1.bf16.msra.mxu0 0
        %4311 = vmatprep.subr.bf16.mxu0 0
        %4312 = vmatpush1.bf16.msra.mxu0 0
        %4313 = vmatprep.subr.bf16.mxu0 0
        %4314 = vmatpush1.bf16.msra.mxu0 0
        %4315 = vmatprep.subr.bf16.mxu0 0
        %4316 = vmatpush1.bf16.msra.mxu0 0
        %4317 = vmatprep.subr.bf16.mxu0 0
        %4318 = vmatpush1.bf16.msra.mxu0 0
        %4319 = vmatprep.subr.bf16.mxu0 0
        %4320 = vmatpush1.bf16.msra.mxu0 0
        %4321 = vmatprep.subr.bf16.mxu0 0
        %4322 = vmatpush1.bf16.msra.mxu0 0
        %4323 = vmatprep.subr.bf16.mxu0 0
        %4324 = vmatpush1.bf16.msra.mxu0 0
        %4325 = vmatprep.subr.bf16.mxu0 0
        %4326 = vmatpush1.bf16.msra.mxu0 0
        %4327 = vmatprep.subr.bf16.mxu0 0
        %4328 = vmatpush1.bf16.msra.mxu0 0
        %4329 = vmatprep.subr.bf16.mxu0 0
        %4330 = vmatpush1.bf16.msra.mxu0 0
        %4331 = vmatprep.subr.bf16.mxu0 0
        %4332 = vmatpush1.bf16.msra.mxu0 0
        %4333 = vmatprep.subr.bf16.mxu0 0
        %4334 = vmatpush1.bf16.msra.mxu0 0
        %4335 = vmatprep.subr.bf16.mxu0 0
        %4336 = vmatpush1.bf16.msra.mxu0 0
        %4337 = vmatprep.mubr.bf16.mxu0 0
        %4338 = vmatmul.mubr.bf16.gmra.mrb[0].mxu0 %v4180
        %v4339 = vpop.f32.mrb[0].mxu0
        %v4340 = vadd.f32 0.0, %v4339
        %v4341 = vpop.f32.mrb[0].mxu0
        %v4342 = vadd.f32 0.0, %v4341
        %v4343 = vpop.f32.mrb[0].mxu0
        %v4344 = vpop.f32.mrb[0].mxu0
        %4345 = vdwg.mxu0
        %4347 = vset.pattern.permute.xlu0 3
        %4348 = vperm.xlu0 %4347, %v256
        %v4349 = vpop.permute.xlu0 %4348
        %v4351 = vadd.f32 %v4217, %v4349
        %v4352 = vadd.f32 %v4219, %v4349
        %v4353 = vadd.f32 %v4258, %v4349
        %v4354 = vadd.f32 %v4260, %v4349
        %v4355 = vadd.f32 %v4299, %v4349
        %v4356 = vadd.f32 %v4301, %v4349
        %v4357 = vadd.f32 %v4340, %v4349
        %v4358 = vadd.f32 %v4342, %v4349
        %vm4359 = vcmp.gt.f32.partialorder %v4352, %v4351
        %v4360 = vsel %vm4359, 1.0, 0.0
        %v4361 = vsel %vm4359, %v4352, %v4351
        %vm4362 = vcmp.gt.f32.partialorder %v4353, %v4361
        %v4363 = vsel %vm4362, 2.0, %v4360
        %v4364 = vsel %vm4362, %v4353, %v4361
        %vm4365 = vcmp.gt.f32.partialorder %v4354, %v4364
        %v4366 = vsel %vm4365, 3.0, %v4363
        %v4367 = vsel %vm4365, %v4354, %v4364
        %vm4368 = vcmp.gt.f32.partialorder %v4355, %v4367
        %v4369 = vsel %vm4368, 4.0, %v4366
        %v4370 = vsel %vm4368, %v4355, %v4367
        %vm4371 = vcmp.gt.f32.partialorder %v4356, %v4370
        %v4372 = vsel %vm4371, 5.0, %v4369
        %v4373 = vsel %vm4371, %v4356, %v4370
        %vm4374 = vcmp.gt.f32.partialorder %v4357, %v4373
        %v4375 = vsel %vm4374, 6.0, %v4372
        %v4376 = vsel %vm4374, %v4357, %v4373
        %vm4377 = vcmp.gt.f32.partialorder %v4358, %v4376
        %v4378 = vsel %vm4377, 7.0, %v4375
        %v4379 = vsel %vm4377, %v4358, %v4376
        %v4380 = vsub.f32 %v4351, %v4379
        %v4381 = vmul.f32 %v4380, 1.442695
        %v4382 = vpow.pop %v4381
        %v4383 = vadd.f32 %v4382, 0.0
        %v4384 = vsub.f32 %v4352, %v4379
        %v4385 = vmul.f32 %v4384, 1.442695
        %v4386 = vpow.pop %v4385
        %v4387 = vadd.f32 %v4383, %v4386
        %v4388 = vsub.f32 %v4353, %v4379
        %v4389 = vmul.f32 %v4388, 1.442695
        %v4390 = vpow.pop %v4389
        %v4391 = vadd.f32 %v4387, %v4390
        %v4392 = vsub.f32 %v4354, %v4379
        %v4393 = vmul.f32 %v4392, 1.442695
        %v4394 = vpow.pop %v4393
        %v4395 = vadd.f32 %v4391, %v4394
        %v4396 = vsub.f32 %v4355, %v4379
        %v4397 = vmul.f32 %v4396, 1.442695
        %v4398 = vpow.pop %v4397
        %v4399 = vadd.f32 %v4395, %v4398
        %v4400 = vsub.f32 %v4356, %v4379
        %v4401 = vmul.f32 %v4400, 1.442695
        %v4402 = vpow.pop %v4401
        %v4403 = vadd.f32 %v4399, %v4402
        %v4404 = vsub.f32 %v4357, %v4379
        %v4405 = vmul.f32 %v4404, 1.442695
        %v4406 = vpow.pop %v4405
        %v4407 = vadd.f32 %v4403, %v4406
        %v4408 = vsub.f32 %v4358, %v4379
        %v4409 = vmul.f32 %v4408, 1.442695
        %v4410 = vpow.pop %v4409
        %v4411 = vadd.f32 %v4407, %v4410
        %v4412 = vrcp.pop %v4411
        %v4413 = vmul.f32 1.0, %v4412
        %v4414 = vsub.f32 1.0, %v256
        %4416 = vset.pattern.permute.xlu0 4
        %4417 = vperm.xlu0 %4416, %v4414
        %v4418 = vpop.permute.xlu0 %4417
        %v4420 = vmul.f32 %v4413, %v4418
        %v4421 = vmul.f32 %v256, 0.125
        %4423 = vset.pattern.permute.xlu0 4
        %4424 = vperm.xlu0 %4423, %v4421
        %v4425 = vpop.permute.xlu0 %4424
        %v4427 = vadd.f32 %v4420, %v4425
        %v4429 = vrot.slane %v4378, 7
        %vm4431 = vcmask 1040384
        %v4432 = vsel %vm4431, %v4427, %v4429
        %4433 = vst [vmem:[%s229] sm:$0x3] %v4432
        %s4434 = sand.u32 %s119, 1
        %s4435 = scalar_lea.sflag [#allocation4], %s4434
        %s4436 = sand.u32 %s119, 1
        %s4437 = smul.addr %s4436, 2
        %s4438 = scalar_lea.vmem [#allocation7], %s4437
        // Predicated region
        $region45: #{tpu_custom_call.1} parent=35 // pred_check
          %p4439 = pneg %p129
        $region46: #{tpu_custom_call.1} parent=35 // pred_check_branch
          %4441 = sbr.rel (%p4439) target = $region48
        $region47: #{tpu_custom_call.1} parent=35 // pred_region
          %s4443 = ssub.s32 32, 32
          %4444 = vsyncadd %s4435, %s4443
          %s4445 = smul.addr %s22, 32
          %s4446 = scalar_lea.hbm %s4, %s4445
          %s4448 = sshll.u32 %s4438, 4
          %s4449 = int_to_ptr.vmem [resolvable:$true] %s4448
          %4451 = dma.vmem_to_hbm [thread:$0]  %s4449, 32, %s4446, %s4435
        $region48: #{tpu_custom_call.1} parent=35 // pred_fallthru
          _
      $region36: #{tpu_custom_call.1} parent=5 // pred_fallthru
        _
      %p4452 = scmp.le.s32.totalorder 2, %s17
      // Predicated region
      $region49: #{tpu_custom_call.1} parent=5 // pred_check
        %p4453 = pneg %p4452
      $region50: #{tpu_custom_call.1} parent=5 // pred_check_branch
        %4455 = sbr.rel (%p4453) target = $region52
      $region51: #{tpu_custom_call.1} parent=5 // pred_region
        %s4456 = ssub.s32 %s17, 2
        // Predicated region
        $region53: #{tpu_custom_call.1} parent=51 // pred_check
          %p4457 = pneg %p135
        $region54: #{tpu_custom_call.1} parent=51 // pred_check_branch
          %4459 = sbr.rel (%p4457) target = $region56
        $region55: #{tpu_custom_call.1} parent=51 // pred_region
          %s4460 = sand.u32 %s120, 1
          %s4461 = scalar_lea.sflag [#allocation4], %s4460
          %s4462 = sand.u32 %s120, 1
          %s4463 = smul.addr %s4462, 2
          %s4464 = scalar_lea.vmem [#allocation7], %s4463
          %4465 = dma.done %s4461, 32
        $region56: #{tpu_custom_call.1} parent=51 // pred_fallthru
          _
      $region52: #{tpu_custom_call.1} parent=5 // pred_fallthru
        _
    $region6: #{tpu_custom_call.1} parent=1 // loop_footer
      %s21 = sadd.s32 1, %s17
    $region7: #{tpu_custom_call.1} parent=1 // loop_footer_branch
      %16 = sbr.rel target = $region3
    $region8: #{tpu_custom_call.1} parent=1 // loop_exit
      _
    %4466 = vsyncpa [#allocation3], 1
    %s4467 = scalar_lea.sflag [#allocation3], 1
    %4468 = vsyncpa %s4467, 1
    %4469 = vsyncpa [#allocation6], 1
    %s4470 = scalar_lea.sflag [#allocation6], 1
    %4471 = vsyncpa %s4470, 1
    %4472 = vsyncpa [#allocation4], 1
    %s4473 = scalar_lea.sflag [#allocation4], 1
    %4474 = vsyncpa %s4473, 1

</llo_original>
